<compile_context>
chip_gen: v7x
topology: tpu7x:2x2x1
jax: 0.10.0
libtpu: 0.0.40
codegen_flags: <defaults>
</compile_context>

<pallas_src>
import functools
import math

import jax
import jax.numpy as jnp
import numpy as np
from jax import lax
from jax.experimental import pallas as pl
from jax.experimental.pallas import tpu as pltpu


C1, C2, NZ_TOK, FEAT_SZ = 8, 16, 16, 8     # template feature 4x4 -> 16 tokens
N_SIGMOID = 3                              # head channels [ctr, size_w, size_h] get sigmoid


# ----------------------------------------------------------------------------
# Pallas kernels
# ----------------------------------------------------------------------------
def _matmul_bias_act_kernel(a_ref, b_ref, bias_ref, o_ref, *, act):
    """o = act(a @ b + bias).  a:(tm,K) bf16, b:(K,Np) bf16, bias:(1,Np) f32."""
    acc = jnp.dot(a_ref[...], b_ref[...], preferred_element_type=jnp.float32)
    acc = acc + bias_ref[...]
    if act == "relu":
        acc = jnp.maximum(acc, 0.0)
    elif act == "head":
        # first N_SIGMOID output channels: clamped sigmoid (score/size maps),
        # remaining channels: identity (offset map).
        col = lax.broadcasted_iota(jnp.int32, acc.shape, 1)
        sig = jnp.clip(jax.nn.sigmoid(acc), 1e-4, 1.0 - 1e-4)
        acc = jnp.where(col < N_SIGMOID, sig, acc)
    o_ref[...] = acc.astype(o_ref.dtype)


def pallas_matmul(a, b, bias, act=None):
    """act(a @ b + bias) with lane-dense (padded-to-128) output and M-tiled grid.

    a: (M, K) activations (rows = tokens), b: (K, N) weights, bias: (N,).
    Operands are fed to the MXU as bf16; accumulation and bias are f32.
    """
    M, K = a.shape
    K2, N = b.shape
    assert K == K2
    Np = ((N + 127) // 128) * 128          # lane-dense output stores
    if M <= 1024:
        Mp = ((M + 7) // 8) * 8
        tm = Mp
    else:
        tm = 512
        Mp = ((M + tm - 1) // tm) * tm

    a_p = a if Mp == M else jnp.pad(a, ((0, Mp - M), (0, 0)))
    b_p = b if Np == N else jnp.pad(b, ((0, 0), (0, Np - N)))
    bias_p = bias.reshape(1, N)
    if Np != N:
        bias_p = jnp.pad(bias_p, ((0, 0), (0, Np - N)))

    kern = functools.partial(_matmul_bias_act_kernel, act=act)
    out = pl.pallas_call(
        kern,
        out_shape=jax.ShapeDtypeStruct((Mp, Np), jnp.float32),
        grid=(Mp // tm,),
        in_specs=[
            pl.BlockSpec((tm, K), lambda i: (i, 0)),
            pl.BlockSpec((K, Np), lambda i: (0, 0)),
            pl.BlockSpec((1, Np), lambda i: (0, 0)),
        ],
        out_specs=pl.BlockSpec((tm, Np), lambda i: (i, 0)),
        compiler_params=pltpu.CompilerParams(dimension_semantics=("parallel",)),
    )(a_p.astype(jnp.bfloat16), b_p.astype(jnp.bfloat16), bias_p.astype(jnp.float32))
    return out[:M, :N]


def _attn_block_kernel(tok_ref, wqkv_ref, bqkv_ref, wo_ref, bo_ref, o_ref, *, scale):
    """Fused MobileViT attention block: out = tok + Wo @ softmax(qk^T)v.

    All intermediates (q/k/v, scores, probs, context) stay in VMEM.
    Batch is folded into the single block (B is tiny)."""
    B, N, C = tok_ref.shape
    tok = tok_ref[...]                                   # (B,N,C) f32 (residual path)
    t2 = tok.reshape(B * N, C).astype(jnp.bfloat16)

    def proj(idx):
        y = jnp.dot(t2, wqkv_ref[idx], preferred_element_type=jnp.float32)
        return (y + bqkv_ref[idx]).reshape(B, N, C)

    q, k, v = proj(0), proj(1), proj(2)
    s = jnp.einsum("bnd,bmd->bnm", q.astype(jnp.bfloat16), k.astype(jnp.bfloat16),
                   preferred_element_type=jnp.float32) * scale
    s = s - jnp.max(s, axis=-1, keepdims=True)
    p = jnp.exp(s)
    p = p * pl.reciprocal(jnp.sum(p, axis=-1, keepdims=True), approx=True)
    ctx = jnp.einsum("bnm,bmd->bnd", p.astype(jnp.bfloat16), v.astype(jnp.bfloat16),
                     preferred_element_type=jnp.float32)
    o = jnp.dot(ctx.reshape(B * N, C).astype(jnp.bfloat16), wo_ref[...],
                preferred_element_type=jnp.float32) + bo_ref[...]
    o_ref[...] = (tok + o.reshape(B, N, C)).astype(o_ref.dtype)


def pallas_attention_block(tok, wqkv, bqkv, wo, bo):
    B, N, C = tok.shape
    kern = functools.partial(_attn_block_kernel, scale=1.0 / math.sqrt(C))
    return pl.pallas_call(
        kern,
        out_shape=jax.ShapeDtypeStruct((B, N, C), jnp.float32),
        in_specs=[
            pl.BlockSpec((B, N, C), lambda: (0, 0, 0)),
            pl.BlockSpec((3, C, C), lambda: (0, 0, 0)),
            pl.BlockSpec((3, 1, C), lambda: (0, 0, 0)),
            pl.BlockSpec((C, C), lambda: (0, 0)),
            pl.BlockSpec((1, C), lambda: (0, 0)),
        ],
        out_specs=pl.BlockSpec((B, N, C), lambda: (0, 0, 0)),
    )(tok.astype(jnp.float32), wqkv.astype(jnp.bfloat16), bqkv.astype(jnp.float32),
      wo.astype(jnp.bfloat16), bo.astype(jnp.float32))


def _fusor_kernel(z_ref, x_ref, w_ref, b_ref, o_ref):
    """Fused feature fusor: pixel-wise xcorr + 1x1 conv + ReLU, batch folded."""
    z = z_ref[...]                                       # (B, Nz, C) bf16
    x = x_ref[...]                                       # (B, Nx, C) bf16
    corr = jnp.einsum("bxc,bzc->bxz", x, z, preferred_element_type=jnp.float32)
    B, Nx, Nz = corr.shape
    fused = jnp.dot(corr.reshape(B * Nx, Nz).astype(jnp.bfloat16), w_ref[...],
                    preferred_element_type=jnp.float32)
    fused = jnp.maximum(fused.reshape(B, Nx, -1) + b_ref[...], 0.0)
    o_ref[...] = fused.astype(o_ref.dtype)


def pallas_fusor(z_tok, x_tok, w_fuse, b_fuse):
    B, Nz, C = z_tok.shape
    _, Nx, _ = x_tok.shape
    Co = w_fuse.shape[1]
    return pl.pallas_call(
        _fusor_kernel,
        out_shape=jax.ShapeDtypeStruct((B, Nx, Co), jnp.float32),
        in_specs=[
            pl.BlockSpec((B, Nz, C), lambda: (0, 0, 0)),
            pl.BlockSpec((B, Nx, C), lambda: (0, 0, 0)),
            pl.BlockSpec((Nz, Co), lambda: (0, 0)),
            pl.BlockSpec((1, 1, Co), lambda: (0, 0, 0)),
        ],
        out_specs=pl.BlockSpec((B, Nx, Co), lambda: (0, 0, 0)),
    )(z_tok.astype(jnp.bfloat16), x_tok.astype(jnp.bfloat16),
      w_fuse.astype(jnp.bfloat16), b_fuse.reshape(1, 1, Co).astype(jnp.float32))


# ----------------------------------------------------------------------------
# Glue: NHWC patch extraction (transpose-free); all flops go through Pallas.
# ----------------------------------------------------------------------------
# TODO(synk): for real MobileViT-Track sizes, move the 3x3 conv fully into a
# Pallas kernel (K-loop grid axis with VMEM accumulator) instead of XLA patches.
def im2col_nhwc(x, kh, kw, stride, pad):
    B, H, W, C = x.shape
    xp = jnp.pad(x, ((0, 0), (pad, pad), (pad, pad), (0, 0)))
    OH = (H + 2 * pad - kh) // stride + 1
    OW = (W + 2 * pad - kw) // stride + 1
    cols = []
    for i in range(kh):
        for j in range(kw):
            cols.append(xp[:, i:i + OH * stride:stride, j:j + OW * stride:stride, :])
    patches = jnp.concatenate(cols, axis=-1)             # (B, OH, OW, kh*kw*C)
    return patches.reshape(B * OH * OW, kh * kw * C), OH, OW


# ----------------------------------------------------------------------------
# Parameters (deterministic synthetic init — no checkpoint loading)
# ----------------------------------------------------------------------------
def init_params(key):
    ks = iter(jax.random.split(key, 32))

    def w(shape):
        fan_in = int(np.prod(shape[:-1])) if len(shape) > 1 else shape[0]
        return (jax.random.normal(next(ks), shape, jnp.float32)
                / np.sqrt(fan_in)).astype(jnp.float32)

    def b(n):
        return jnp.zeros((n,), jnp.float32)

    p = {}
    # backbone convs (HWIO layout)
    p["conv1_w"], p["conv1_b"] = w((3, 3, 3, C1)), b(C1)
    p["conv2_w"], p["conv2_b"] = w((3, 3, C1, C2)), b(C2)
    # fused attention block weights
    p["wqkv"], p["bqkv"] = w((3, C2, C2)), jnp.zeros((3, 1, C2), jnp.float32)
    p["wo"], p["bo"] = w((C2, C2)), jnp.zeros((1, C2), jnp.float32)
    # neck (1x1 conv, BN folded to identity)
    p["neck_w"], p["neck_b"] = w((C2, C2)), b(C2)
    # feature fusor 1x1 conv over Nz correlation channels (stored transposed)
    p["fuse_w"], p["fuse_b"] = w((NZ_TOK, C2)), b(C2)
    # CENTER head: branches [ctr(1), size(2), off(2)] merged per conv level.
    c_mid1, c_mid2 = C2 // 2, C2 // 4                     # 8, 4 per branch
    branch_cout = (1, 2, 2)                               # ctr, size, off
    # level 1: concatenated out-channels (3 * 8 = 24)
    p["head_c1_w"] = jnp.concatenate([w((3, 3, C2, c_mid1)) for _ in range(3)], axis=-1)
    p["head_c1_b"] = b(3 * c_mid1)
    # level 2: block-diagonal (each branch only sees its own 8 channels)
    c2w = jnp.zeros((3, 3, 3 * c_mid1, 3 * c_mid2), jnp.float32)
    for bi in range(3):
        c2w = c2w.at[:, :, c_mid1 * bi:c_mid1 * (bi + 1),
                     c_mid2 * bi:c_mid2 * (bi + 1)].set(w((3, 3, c_mid1, c_mid2)))
    p["head_c2_w"], p["head_c2_b"] = c2w, b(3 * c_mid2)
    # level 3: block-diagonal 1x1 -> 5 channels [ctr, size_w, size_h, off_x, off_y]
    c3w = jnp.zeros((3 * c_mid2, sum(branch_cout)), jnp.float32)
    col = 0
    for bi, co in enumerate(branch_cout):
        c3w = c3w.at[c_mid2 * bi:c_mid2 * (bi + 1), col:col + co].set(w((c_mid2, co)))
        col += co
    p["head_c3_w"], p["head_c3_b"] = c3w, b(sum(branch_cout))
    return p


# ----------------------------------------------------------------------------
# Model forward (mirrors MobileViT_Track.forward + forward_head, CENTER head)
# ----------------------------------------------------------------------------
def cal_bbox(score_map, size_map, offset_map, feat_sz):
    # TODO(synk): argmax + gather bbox decode is tiny; kept in plain JAX glue.
    B = score_map.shape[0]
    idx = jnp.argmax(score_map.reshape(B, -1), axis=1)               # (B,)
    idx_y = (idx // feat_sz).astype(jnp.float32)
    idx_x = (idx % feat_sz).astype(jnp.float32)
    size = jnp.take_along_axis(size_map.reshape(B, 2, -1),
                               idx[:, None, None], axis=2)[..., 0]   # (B,2)
    off = jnp.take_along_axis(offset_map.reshape(B, 2, -1),
                              idx[:, None, None], axis=2)[..., 0]    # (B,2)
    return jnp.stack([(idx_x + off[:, 0]) / feat_sz,
                      (idx_y + off[:, 1]) / feat_sz,
                      size[:, 0], size[:, 1]], axis=1)               # (B,4)


def mobilevit_track_forward(params, template, search):
    # module boundary is NCHW (PyTorch convention); go NHWC once.
    s = jnp.transpose(search, (0, 2, 3, 1))
    t = jnp.transpose(template, (0, 2, 3, 1))
    B = s.shape[0]

    # ---- backbone conv stage 1 (shared weights: search+template in one matmul)
    ps, OHs, OWs = im2col_nhwc(s, 3, 3, 2, 1)
    pt, OHt, OWt = im2col_nhwc(t, 3, 3, 2, 1)
    y = pallas_matmul(jnp.concatenate([ps, pt], axis=0),
                      params["conv1_w"].reshape(-1, C1), params["conv1_b"], act="relu")
    Ms = B * OHs * OWs
    ys = y[:Ms].reshape(B, OHs, OWs, C1)
    yt = y[Ms:].reshape(B, OHt, OWt, C1)

    # ---- backbone conv stage 2
    ps, OHs, OWs = im2col_nhwc(ys, 3, 3, 2, 1)
    pt, OHt, OWt = im2col_nhwc(yt, 3, 3, 2, 1)
    y = pallas_matmul(jnp.concatenate([ps, pt], axis=0),
                      params["conv2_w"].reshape(-1, C2), params["conv2_b"], act="relu")
    Ms = B * OHs * OWs
    Ns, Nt = OHs * OWs, OHt * OWt
    x_tok = y[:Ms].reshape(B, Ns, C2)        # search tokens  (B, 64, C2)
    z_tok = y[Ms:].reshape(B, Nt, C2)        # template tokens (B, 16, C2)

    # ---- fused MobileViT attention block (shared weights, residual inside)
    x_tok = pallas_attention_block(x_tok, params["wqkv"], params["bqkv"],
                                   params["wo"], params["bo"])
    z_tok = pallas_attention_block(z_tok, params["wqkv"], params["bqkv"],
                                   params["wo"], params["bo"])

    # ---- neck: shared 1x1 conv over concatenated search+template tokens
    tok = jnp.concatenate([x_tok.reshape(B * Ns, C2), z_tok.reshape(B * Nt, C2)], axis=0)
    tok = pallas_matmul(tok, params["neck_w"], params["neck_b"])
    x_tok = tok[:B * Ns].reshape(B, Ns, C2)
    z_tok = tok[B * Ns:].reshape(B, Nt, C2)

    # ---- feature fusor: pixel-wise xcorr + 1x1 conv + ReLU (one fused kernel)
    fused = pallas_fusor(z_tok, x_tok, params["fuse_w"], params["fuse_b"])
    fused = fused.reshape(B, FEAT_SZ, FEAT_SZ, C2)

    # ---- CENTER box head: 3 branches merged per conv level (3 matmuls total)
    p1, _, _ = im2col_nhwc(fused, 3, 3, 1, 1)
    y1 = pallas_matmul(p1, params["head_c1_w"].reshape(-1, params["head_c1_w"].shape[-1]),
                       params["head_c1_b"], act="relu")
    y1 = y1.reshape(B, FEAT_SZ, FEAT_SZ, -1)
    p2, _, _ = im2col_nhwc(y1, 3, 3, 1, 1)
    y2 = pallas_matmul(p2, params["head_c2_w"].reshape(-1, params["head_c2_w"].shape[-1]),
                       params["head_c2_b"], act="relu")
    y3 = pallas_matmul(y2, params["head_c3_w"], params["head_c3_b"], act="head")
    maps = jnp.transpose(y3.reshape(B, FEAT_SZ, FEAT_SZ, 5), (0, 3, 1, 2))  # (B,5,8,8)
    score_map_ctr = maps[:, 0:1]             # sigmoid-clamped in kernel
    size_map = maps[:, 1:3]                  # sigmoid-clamped in kernel
    offset_map = maps[:, 3:5]                # raw

    bbox = cal_bbox(score_map_ctr, size_map, offset_map, FEAT_SZ)
    return {
        "pred_boxes": bbox.reshape(B, 1, 4),
        "score_map": score_map_ctr,
        "size_map": size_map,
        "offset_map": offset_map,
    }


# ----------------------------------------------------------------------------
if __name__ == "__main__":
    key = jax.random.PRNGKey(0)
    k_params, k_t, k_s = jax.random.split(key, 3)
    params = init_params(k_params)

    template = jax.random.normal(k_t, (2, 3, 16, 16), jnp.float32)
    search = jax.random.normal(k_s, (2, 3, 32, 32), jnp.float32)

    fwd = jax.jit(mobilevit_track_forward)
    out = fwd(params, template, search)
    out = jax.block_until_ready(out)

    assert out["pred_boxes"].shape == (2, 1, 4)
    assert out["score_map"].shape == (2, 1, 8, 8)
    assert out["size_map"].shape == (2, 2, 8, 8)
    assert out["offset_map"].shape == (2, 2, 8, 8)
    assert all(jnp.all(jnp.isfinite(v)) for v in out.values())
    print("KERNEL_OK")
</pallas_src>

<mosaic_0001>
module attributes {stable_mosaic.version = 11 : i64} {
  func.func @_matmul_bias_act_kernel(%arg0: i32, %arg1: memref<640x27xbf16, #tpu.memory_space<vmem>>, %arg2: memref<27x128xbf16, #tpu.memory_space<vmem>>, %arg3: memref<1x128xf32, #tpu.memory_space<vmem>>, %arg4: memref<640x128xf32, #tpu.memory_space<vmem>>) attributes {dimension_semantics = [#tpu.dimension_semantics<parallel>], iteration_bounds = array<i64: 1>, scalar_prefetch = 0 : i64, scratch_operands = 0 : i64, tpu.core_type = #tpu.core_type<tc>, window_params = [{transform_indices = @transform_0, window_bounds = array<i64: 640, 27>}, {pipeline_mode = #tpu.pipeline_mode<synchronous>, transform_indices = @transform_1, window_bounds = array<i64: 27, 128>}, {pipeline_mode = #tpu.pipeline_mode<synchronous>, transform_indices = @transform_2, window_bounds = array<i64: 1, 128>}, {transform_indices = @transform_3, window_bounds = array<i64: 640, 128>}]} {
    %c0 = arith.constant 0 : index
    %c0_0 = arith.constant 0 : index
    %0 = vector.load %arg1[%c0, %c0_0] : memref<640x27xbf16, #tpu.memory_space<vmem>>, vector<640x27xbf16>
    %c0_1 = arith.constant 0 : index
    %c0_2 = arith.constant 0 : index
    %1 = vector.load %arg2[%c0_1, %c0_2] : memref<27x128xbf16, #tpu.memory_space<vmem>>, vector<27x128xbf16>
    %cst = arith.constant dense<0.000000e+00> : vector<640x128xf32>
    %2 = tpu.matmul %0, %1, %cst {dimension_numbers = #tpu.dot_dimension_numbers<[1], [0], [0], [1], [0, 0, 1, 1], [], []>} : vector<640x27xbf16>, vector<27x128xbf16>, vector<640x128xf32> -> vector<640x128xf32>
    %c0_3 = arith.constant 0 : index
    %c0_4 = arith.constant 0 : index
    %3 = vector.load %arg3[%c0_3, %c0_4] : memref<1x128xf32, #tpu.memory_space<vmem>>, vector<1x128xf32>
    %4 = vector.broadcast %3 : vector<1x128xf32> to vector<640x128xf32>
    %5 = arith.addf %2, %4 : vector<640x128xf32>
    %cst_5 = arith.constant 0.000000e+00 : f32
    %6 = vector.broadcast %cst_5 : f32 to vector<640x128xf32>
    %7 = arith.maximumf %5, %6 : vector<640x128xf32>
    %c0_6 = arith.constant 0 : index
    %c0_7 = arith.constant 0 : index
    %8 = vector.load %arg4[%c0_6, %c0_7] : memref<640x128xf32, #tpu.memory_space<vmem>>, vector<640x128xf32>
    tpu.vector_store %arg4[%c0_6, %c0_7], %7 {strides = array<i32>} : memref<640x128xf32, #tpu.memory_space<vmem>>, vector<640x128xf32>,
    return
  }
  func.func @transform_0(%arg0: i32) -> (i32, i32) {
    %c0_i32 = arith.constant 0 : i32
    %c0_i32_0 = arith.constant 0 : i32
    return %arg0, %c0_i32 : i32, i32
  }
  func.func @transform_1(%arg0: i32) -> (i32, i32) {
    %c0_i32 = arith.constant 0 : i32
    %c0_i32_0 = arith.constant 0 : i32
    %c0_i32_1 = arith.constant 0 : i32
    return %c0_i32, %c0_i32_0 : i32, i32
  }
  func.func @transform_2(%arg0: i32) -> (i32, i32) {
    %c0_i32 = arith.constant 0 : i32
    %c0_i32_0 = arith.constant 0 : i32
    %c0_i32_1 = arith.constant 0 : i32
    return %c0_i32, %c0_i32_0 : i32, i32
  }
  func.func @transform_3(%arg0: i32) -> (i32, i32) {
    %c0_i32 = arith.constant 0 : i32
    %c0_i32_0 = arith.constant 0 : i32
    return %arg0, %c0_i32 : i32, i32
  }
}

module attributes {stable_mosaic.version = 11 : i64} {
  func.func @_matmul_bias_act_kernel(%arg0: i32, %arg1: memref<160x72xbf16, #tpu.memory_space<vmem>>, %arg2: memref<72x128xbf16, #tpu.memory_space<vmem>>, %arg3: memref<1x128xf32, #tpu.memory_space<vmem>>, %arg4: memref<160x128xf32, #tpu.memory_space<vmem>>) attributes {dimension_semantics = [#tpu.dimension_semantics<parallel>], iteration_bounds = array<i64: 1>, scalar_prefetch = 0 : i64, scratch_operands = 0 : i64, tpu.core_type = #tpu.core_type<tc>, window_params = [{transform_indices = @transform_0, window_bounds = array<i64: 160, 72>}, {pipeline_mode = #tpu.pipeline_mode<synchronous>, transform_indices = @transform_1, window_bounds = array<i64: 72, 128>}, {pipeline_mode = #tpu.pipeline_mode<synchronous>, transform_indices = @transform_2, window_bounds = array<i64: 1, 128>}, {transform_indices = @transform_3, window_bounds = array<i64: 160, 128>}]} {
    %c0 = arith.constant 0 : index
    %c0_0 = arith.constant 0 : index
    %0 = vector.load %arg1[%c0, %c0_0] : memref<160x72xbf16, #tpu.memory_space<vmem>>, vector<160x72xbf16>
    %c0_1 = arith.constant 0 : index
    %c0_2 = arith.constant 0 : index
    %1 = vector.load %arg2[%c0_1, %c0_2] : memref<72x128xbf16, #tpu.memory_space<vmem>>, vector<72x128xbf16>
    %cst = arith.constant dense<0.000000e+00> : vector<160x128xf32>
    %2 = tpu.matmul %0, %1, %cst {dimension_numbers = #tpu.dot_dimension_numbers<[1], [0], [0], [1], [0, 0, 1, 1], [], []>} : vector<160x72xbf16>, vector<72x128xbf16>, vector<160x128xf32> -> vector<160x128xf32>
    %c0_3 = arith.constant 0 : index
    %c0_4 = arith.constant 0 : index
    %3 = vector.load %arg3[%c0_3, %c0_4] : memref<1x128xf32, #tpu.memory_space<vmem>>, vector<1x128xf32>
    %4 = vector.broadcast %3 : vector<1x128xf32> to vector<160x128xf32>
    %5 = arith.addf %2, %4 : vector<160x128xf32>
    %cst_5 = arith.constant 0.000000e+00 : f32
    %6 = vector.broadcast %cst_5 : f32 to vector<160x128xf32>
    %7 = arith.maximumf %5, %6 : vector<160x128xf32>
    %c0_6 = arith.constant 0 : index
    %c0_7 = arith.constant 0 : index
    %8 = vector.load %arg4[%c0_6, %c0_7] : memref<160x128xf32, #tpu.memory_space<vmem>>, vector<160x128xf32>
    tpu.vector_store %arg4[%c0_6, %c0_7], %7 {strides = array<i32>} : memref<160x128xf32, #tpu.memory_space<vmem>>, vector<160x128xf32>,
    return
  }
  func.func @transform_0(%arg0: i32) -> (i32, i32) {
    %c0_i32 = arith.constant 0 : i32
    %c0_i32_0 = arith.constant 0 : i32
    return %arg0, %c0_i32 : i32, i32
  }
  func.func @transform_1(%arg0: i32) -> (i32, i32) {
    %c0_i32 = arith.constant 0 : i32
    %c0_i32_0 = arith.constant 0 : i32
    %c0_i32_1 = arith.constant 0 : i32
    return %c0_i32, %c0_i32_0 : i32, i32
  }
  func.func @transform_2(%arg0: i32) -> (i32, i32) {
    %c0_i32 = arith.constant 0 : i32
    %c0_i32_0 = arith.constant 0 : i32
    %c0_i32_1 = arith.constant 0 : i32
    return %c0_i32, %c0_i32_0 : i32, i32
  }
  func.func @transform_3(%arg0: i32) -> (i32, i32) {
    %c0_i32 = arith.constant 0 : i32
    %c0_i32_0 = arith.constant 0 : i32
    return %arg0, %c0_i32 : i32, i32
  }
}

module attributes {stable_mosaic.version = 11 : i64} {
  func.func @_attn_block_kernel(%arg0: memref<2x16x16xf32, #tpu.memory_space<vmem>>, %arg1: memref<3x16x16xbf16, #tpu.memory_space<vmem>>, %arg2: memref<3x1x16xf32, #tpu.memory_space<vmem>>, %arg3: memref<16x16xbf16, #tpu.memory_space<vmem>>, %arg4: memref<1x16xf32, #tpu.memory_space<vmem>>, %arg5: memref<2x16x16xf32, #tpu.memory_space<vmem>>) attributes {dimension_semantics = [], scalar_prefetch = 0 : i64, scratch_operands = 0 : i64, tpu.core_type = #tpu.core_type<tc>} {
    %c0 = arith.constant 0 : index
    %c0_0 = arith.constant 0 : index
    %c0_1 = arith.constant 0 : index
    %0 = vector.load %arg0[%c0, %c0_0, %c0_1] : memref<2x16x16xf32, #tpu.memory_space<vmem>>, vector<2x16x16xf32>
    %1 = vector.shape_cast %0 : vector<2x16x16xf32> to vector<32x16xf32>
    %2 = arith.truncf %1 : vector<32x16xf32> to vector<32x16xbf16>
    %c0_2 = arith.constant 0 : index
    %c0_3 = arith.constant 0 : index
    %c0_4 = arith.constant 0 : index
    %3 = vector.load %arg1[%c0_2, %c0_3, %c0_4] : memref<3x16x16xbf16, #tpu.memory_space<vmem>>, vector<1x16x16xbf16>
    %4 = vector.shape_cast %3 : vector<1x16x16xbf16> to vector<16x16xbf16>
    %cst = arith.constant dense<0.000000e+00> : vector<32x16xf32>
    %5 = tpu.matmul %2, %4, %cst {dimension_numbers = #tpu.dot_dimension_numbers<[1], [0], [0], [1], [0, 0, 1, 1], [], []>} : vector<32x16xbf16>, vector<16x16xbf16>, vector<32x16xf32> -> vector<32x16xf32>
    %c0_5 = arith.constant 0 : index
    %c0_6 = arith.constant 0 : index
    %c0_7 = arith.constant 0 : index
    %6 = vector.load %arg2[%c0_5, %c0_6, %c0_7] : memref<3x1x16xf32, #tpu.memory_space<vmem>>, vector<1x1x16xf32>
    %7 = vector.shape_cast %6 : vector<1x1x16xf32> to vector<1x16xf32>
    %8 = vector.broadcast %7 : vector<1x16xf32> to vector<32x16xf32>
    %9 = arith.addf %5, %8 : vector<32x16xf32>
    %10 = vector.shape_cast %9 : vector<32x16xf32> to vector<2x16x16xf32>
    %c1 = arith.constant 1 : index
    %c0_8 = arith.constant 0 : index
    %c0_9 = arith.constant 0 : index
    %11 = vector.load %arg1[%c1, %c0_8, %c0_9] : memref<3x16x16xbf16, #tpu.memory_space<vmem>>, vector<1x16x16xbf16>
    %12 = vector.shape_cast %11 : vector<1x16x16xbf16> to vector<16x16xbf16>
    %cst_10 = arith.constant dense<0.000000e+00> : vector<32x16xf32>
    %13 = tpu.matmul %2, %12, %cst_10 {dimension_numbers = #tpu.dot_dimension_numbers<[1], [0], [0], [1], [0, 0, 1, 1], [], []>} : vector<32x16xbf16>, vector<16x16xbf16>, vector<32x16xf32> -> vector<32x16xf32>
    %c1_11 = arith.constant 1 : index
    %c0_12 = arith.constant 0 : index
    %c0_13 = arith.constant 0 : index
    %14 = vector.load %arg2[%c1_11, %c0_12, %c0_13] : memref<3x1x16xf32, #tpu.memory_space<vmem>>, vector<1x1x16xf32>
    %15 = vector.shape_cast %14 : vector<1x1x16xf32> to vector<1x16xf32>
    %16 = vector.broadcast %15 : vector<1x16xf32> to vector<32x16xf32>
    %17 = arith.addf %13, %16 : vector<32x16xf32>
    %18 = vector.shape_cast %17 : vector<32x16xf32> to vector<2x16x16xf32>
    %c2 = arith.constant 2 : index
    %c0_14 = arith.constant 0 : index
    %c0_15 = arith.constant 0 : index
    %19 = vector.load %arg1[%c2, %c0_14, %c0_15] : memref<3x16x16xbf16, #tpu.memory_space<vmem>>, vector<1x16x16xbf16>
    %20 = vector.shape_cast %19 : vector<1x16x16xbf16> to vector<16x16xbf16>
    %cst_16 = arith.constant dense<0.000000e+00> : vector<32x16xf32>
    %21 = tpu.matmul %2, %20, %cst_16 {dimension_numbers = #tpu.dot_dimension_numbers<[1], [0], [0], [1], [0, 0, 1, 1], [], []>} : vector<32x16xbf16>, vector<16x16xbf16>, vector<32x16xf32> -> vector<32x16xf32>
    %c2_17 = arith.constant 2 : index
    %c0_18 = arith.constant 0 : index
    %c0_19 = arith.constant 0 : index
    %22 = vector.load %arg2[%c2_17, %c0_18, %c0_19] : memref<3x1x16xf32, #tpu.memory_space<vmem>>, vector<1x1x16xf32>
    %23 = vector.shape_cast %22 : vector<1x1x16xf32> to vector<1x16xf32>
    %24 = vector.broadcast %23 : vector<1x16xf32> to vector<32x16xf32>
    %25 = arith.addf %21, %24 : vector<32x16xf32>
    %26 = vector.shape_cast %25 : vector<32x16xf32> to vector<2x16x16xf32>
    %27 = arith.truncf %10 : vector<2x16x16xf32> to vector<2x16x16xbf16>
    %28 = arith.truncf %18 : vector<2x16x16xf32> to vector<2x16x16xbf16>
    "tpu.trace_start"() <{level = 10 : i32, message = "bnd,bmd->bnm"}> : () -> ()
    %cst_20 = arith.constant dense<0.000000e+00> : vector<2x16x16xf32>
    %29 = tpu.matmul %27, %28, %cst_20 {dimension_numbers = #tpu.dot_dimension_numbers<[2], [2], [1], [1], [0, 0, 0, 1, 1, 1], [0], [0]>} : vector<2x16x16xbf16>, vector<2x16x16xbf16>, vector<2x16x16xf32> -> vector<2x16x16xf32>
    "tpu.trace_stop"() : () -> ()
    %cst_21 = arith.constant 2.500000e-01 : f32
    %30 = vector.broadcast %cst_21 : f32 to vector<2x16x16xf32>
    %31 = arith.mulf %29, %30 : vector<2x16x16xf32>
    %cst_22 = arith.constant dense<0xFF800000> : vector<2x16xf32>
    %32 = vector.multi_reduction <maximumf>, %31, %cst_22 [2] : vector<2x16x16xf32> to vector<2x16xf32>
    %33 = vector.shape_cast %32 : vector<2x16xf32> to vector<2x16x1xf32>
    %34 = vector.broadcast %33 : vector<2x16x1xf32> to vector<2x16x16xf32>
    %35 = arith.subf %31, %34 : vector<2x16x16xf32>
    %36 = math.exp %35 : vector<2x16x16xf32>
    %cst_23 = arith.constant dense<0.000000e+00> : vector<2x16xf32>
    %37 = vector.multi_reduction <add>, %36, %cst_23 [2] : vector<2x16x16xf32> to vector<2x16xf32>
    %38 = vector.shape_cast %37 : vector<2x16xf32> to vector<2x16x1xf32>
    %39 = tpu.reciprocal %38 {approx = true} : vector<2x16x1xf32> -> vector<2x16x1xf32>
    %40 = vector.broadcast %39 : vector<2x16x1xf32> to vector<2x16x16xf32>
    %41 = arith.mulf %36, %40 : vector<2x16x16xf32>
    %42 = arith.truncf %41 : vector<2x16x16xf32> to vector<2x16x16xbf16>
    %43 = arith.truncf %26 : vector<2x16x16xf32> to vector<2x16x16xbf16>
    "tpu.trace_start"() <{level = 10 : i32, message = "bnm,bmd->bnd"}> : () -> ()
    %cst_24 = arith.constant dense<0.000000e+00> : vector<2x16x16xf32>
    %44 = tpu.matmul %42, %43, %cst_24 {dimension_numbers = #tpu.dot_dimension_numbers<[2], [1], [1], [2], [0, 0, 0, 1, 1, 2], [0], [0]>} : vector<2x16x16xbf16>, vector<2x16x16xbf16>, vector<2x16x16xf32> -> vector<2x16x16xf32>
    "tpu.trace_stop"() : () -> ()
    %45 = vector.shape_cast %44 : vector<2x16x16xf32> to vector<32x16xf32>
    %46 = arith.truncf %45 : vector<32x16xf32> to vector<32x16xbf16>
    %c0_25 = arith.constant 0 : index
    %c0_26 = arith.constant 0 : index
    %47 = vector.load %arg3[%c0_25, %c0_26] : memref<16x16xbf16, #tpu.memory_space<vmem>>, vector<16x16xbf16>
    %cst_27 = arith.constant dense<0.000000e+00> : vector<32x16xf32>
    %48 = tpu.matmul %46, %47, %cst_27 {dimension_numbers = #tpu.dot_dimension_numbers<[1], [0], [0], [1], [0, 0, 1, 1], [], []>} : vector<32x16xbf16>, vector<16x16xbf16>, vector<32x16xf32> -> vector<32x16xf32>
    %c0_28 = arith.constant 0 : index
    %c0_29 = arith.constant 0 : index
    %49 = vector.load %arg4[%c0_28, %c0_29] : memref<1x16xf32, #tpu.memory_space<vmem>>, vector<1x16xf32>
    %50 = vector.broadcast %49 : vector<1x16xf32> to vector<32x16xf32>
    %51 = arith.addf %48, %50 : vector<32x16xf32>
    %52 = vector.shape_cast %51 : vector<32x16xf32> to vector<2x16x16xf32>
    %53 = arith.addf %0, %52 : vector<2x16x16xf32>
    %c0_30 = arith.constant 0 : index
    %c0_31 = arith.constant 0 : index
    %c0_32 = arith.constant 0 : index
    %54 = vector.load %arg5[%c0_30, %c0_31, %c0_32] : memref<2x16x16xf32, #tpu.memory_space<vmem>>, vector<2x16x16xf32>
    tpu.vector_store %arg5[%c0_30, %c0_31, %c0_32], %53 {strides = array<i32>} : memref<2x16x16xf32, #tpu.memory_space<vmem>>, vector<2x16x16xf32>,
    return
  }
}

module attributes {stable_mosaic.version = 11 : i64} {
  func.func @_attn_block_kernel(%arg0: memref<2x64x16xf32, #tpu.memory_space<vmem>>, %arg1: memref<3x16x16xbf16, #tpu.memory_space<vmem>>, %arg2: memref<3x1x16xf32, #tpu.memory_space<vmem>>, %arg3: memref<16x16xbf16, #tpu.memory_space<vmem>>, %arg4: memref<1x16xf32, #tpu.memory_space<vmem>>, %arg5: memref<2x64x16xf32, #tpu.memory_space<vmem>>) attributes {dimension_semantics = [], scalar_prefetch = 0 : i64, scratch_operands = 0 : i64, tpu.core_type = #tpu.core_type<tc>} {
    %c0 = arith.constant 0 : index
    %c0_0 = arith.constant 0 : index
    %c0_1 = arith.constant 0 : index
    %0 = vector.load %arg0[%c0, %c0_0, %c0_1] : memref<2x64x16xf32, #tpu.memory_space<vmem>>, vector<2x64x16xf32>
    %1 = vector.shape_cast %0 : vector<2x64x16xf32> to vector<128x16xf32>
    %2 = arith.truncf %1 : vector<128x16xf32> to vector<128x16xbf16>
    %c0_2 = arith.constant 0 : index
    %c0_3 = arith.constant 0 : index
    %c0_4 = arith.constant 0 : index
    %3 = vector.load %arg1[%c0_2, %c0_3, %c0_4] : memref<3x16x16xbf16, #tpu.memory_space<vmem>>, vector<1x16x16xbf16>
    %4 = vector.shape_cast %3 : vector<1x16x16xbf16> to vector<16x16xbf16>
    %cst = arith.constant dense<0.000000e+00> : vector<128x16xf32>
    %5 = tpu.matmul %2, %4, %cst {dimension_numbers = #tpu.dot_dimension_numbers<[1], [0], [0], [1], [0, 0, 1, 1], [], []>} : vector<128x16xbf16>, vector<16x16xbf16>, vector<128x16xf32> -> vector<128x16xf32>
    %c0_5 = arith.constant 0 : index
    %c0_6 = arith.constant 0 : index
    %c0_7 = arith.constant 0 : index
    %6 = vector.load %arg2[%c0_5, %c0_6, %c0_7] : memref<3x1x16xf32, #tpu.memory_space<vmem>>, vector<1x1x16xf32>
    %7 = vector.shape_cast %6 : vector<1x1x16xf32> to vector<1x16xf32>
    %8 = vector.broadcast %7 : vector<1x16xf32> to vector<128x16xf32>
    %9 = arith.addf %5, %8 : vector<128x16xf32>
    %10 = vector.shape_cast %9 : vector<128x16xf32> to vector<2x64x16xf32>
    %c1 = arith.constant 1 : index
    %c0_8 = arith.constant 0 : index
    %c0_9 = arith.constant 0 : index
    %11 = vector.load %arg1[%c1, %c0_8, %c0_9] : memref<3x16x16xbf16, #tpu.memory_space<vmem>>, vector<1x16x16xbf16>
    %12 = vector.shape_cast %11 : vector<1x16x16xbf16> to vector<16x16xbf16>
    %cst_10 = arith.constant dense<0.000000e+00> : vector<128x16xf32>
    %13 = tpu.matmul %2, %12, %cst_10 {dimension_numbers = #tpu.dot_dimension_numbers<[1], [0], [0], [1], [0, 0, 1, 1], [], []>} : vector<128x16xbf16>, vector<16x16xbf16>, vector<128x16xf32> -> vector<128x16xf32>
    %c1_11 = arith.constant 1 : index
    %c0_12 = arith.constant 0 : index
    %c0_13 = arith.constant 0 : index
    %14 = vector.load %arg2[%c1_11, %c0_12, %c0_13] : memref<3x1x16xf32, #tpu.memory_space<vmem>>, vector<1x1x16xf32>
    %15 = vector.shape_cast %14 : vector<1x1x16xf32> to vector<1x16xf32>
    %16 = vector.broadcast %15 : vector<1x16xf32> to vector<128x16xf32>
    %17 = arith.addf %13, %16 : vector<128x16xf32>
    %18 = vector.shape_cast %17 : vector<128x16xf32> to vector<2x64x16xf32>
    %c2 = arith.constant 2 : index
    %c0_14 = arith.constant 0 : index
    %c0_15 = arith.constant 0 : index
    %19 = vector.load %arg1[%c2, %c0_14, %c0_15] : memref<3x16x16xbf16, #tpu.memory_space<vmem>>, vector<1x16x16xbf16>
    %20 = vector.shape_cast %19 : vector<1x16x16xbf16> to vector<16x16xbf16>
    %cst_16 = arith.constant dense<0.000000e+00> : vector<128x16xf32>
    %21 = tpu.matmul %2, %20, %cst_16 {dimension_numbers = #tpu.dot_dimension_numbers<[1], [0], [0], [1], [0, 0, 1, 1], [], []>} : vector<128x16xbf16>, vector<16x16xbf16>, vector<128x16xf32> -> vector<128x16xf32>
    %c2_17 = arith.constant 2 : index
    %c0_18 = arith.constant 0 : index
    %c0_19 = arith.constant 0 : index
    %22 = vector.load %arg2[%c2_17, %c0_18, %c0_19] : memref<3x1x16xf32, #tpu.memory_space<vmem>>, vector<1x1x16xf32>
    %23 = vector.shape_cast %22 : vector<1x1x16xf32> to vector<1x16xf32>
    %24 = vector.broadcast %23 : vector<1x16xf32> to vector<128x16xf32>
    %25 = arith.addf %21, %24 : vector<128x16xf32>
    %26 = vector.shape_cast %25 : vector<128x16xf32> to vector<2x64x16xf32>
    %27 = arith.truncf %10 : vector<2x64x16xf32> to vector<2x64x16xbf16>
    %28 = arith.truncf %18 : vector<2x64x16xf32> to vector<2x64x16xbf16>
    "tpu.trace_start"() <{level = 10 : i32, message = "bnd,bmd->bnm"}> : () -> ()
    %cst_20 = arith.constant dense<0.000000e+00> : vector<2x64x64xf32>
    %29 = tpu.matmul %27, %28, %cst_20 {dimension_numbers = #tpu.dot_dimension_numbers<[2], [2], [1], [1], [0, 0, 0, 1, 1, 1], [0], [0]>} : vector<2x64x16xbf16>, vector<2x64x16xbf16>, vector<2x64x64xf32> -> vector<2x64x64xf32>
    "tpu.trace_stop"() : () -> ()
    %cst_21 = arith.constant 2.500000e-01 : f32
    %30 = vector.broadcast %cst_21 : f32 to vector<2x64x64xf32>
    %31 = arith.mulf %29, %30 : vector<2x64x64xf32>
    %cst_22 = arith.constant dense<0xFF800000> : vector<2x64xf32>
    %32 = vector.multi_reduction <maximumf>, %31, %cst_22 [2] : vector<2x64x64xf32> to vector<2x64xf32>
    %33 = vector.shape_cast %32 : vector<2x64xf32> to vector<2x64x1xf32>
    %34 = vector.broadcast %33 : vector<2x64x1xf32> to vector<2x64x64xf32>
    %35 = arith.subf %31, %34 : vector<2x64x64xf32>
    %36 = math.exp %35 : vector<2x64x64xf32>
    %cst_23 = arith.constant dense<0.000000e+00> : vector<2x64xf32>
    %37 = vector.multi_reduction <add>, %36, %cst_23 [2] : vector<2x64x64xf32> to vector<2x64xf32>
    %38 = vector.shape_cast %37 : vector<2x64xf32> to vector<2x64x1xf32>
    %39 = tpu.reciprocal %38 {approx = true} : vector<2x64x1xf32> -> vector<2x64x1xf32>
    %40 = vector.broadcast %39 : vector<2x64x1xf32> to vector<2x64x64xf32>
    %41 = arith.mulf %36, %40 : vector<2x64x64xf32>
    %42 = arith.truncf %41 : vector<2x64x64xf32> to vector<2x64x64xbf16>
    %43 = arith.truncf %26 : vector<2x64x16xf32> to vector<2x64x16xbf16>
    "tpu.trace_start"() <{level = 10 : i32, message = "bnm,bmd->bnd"}> : () -> ()
    %cst_24 = arith.constant dense<0.000000e+00> : vector<2x64x16xf32>
    %44 = tpu.matmul %42, %43, %cst_24 {dimension_numbers = #tpu.dot_dimension_numbers<[2], [1], [1], [2], [0, 0, 0, 1, 1, 2], [0], [0]>} : vector<2x64x64xbf16>, vector<2x64x16xbf16>, vector<2x64x16xf32> -> vector<2x64x16xf32>
    "tpu.trace_stop"() : () -> ()
    %45 = vector.shape_cast %44 : vector<2x64x16xf32> to vector<128x16xf32>
    %46 = arith.truncf %45 : vector<128x16xf32> to vector<128x16xbf16>
    %c0_25 = arith.constant 0 : index
    %c0_26 = arith.constant 0 : index
    %47 = vector.load %arg3[%c0_25, %c0_26] : memref<16x16xbf16, #tpu.memory_space<vmem>>, vector<16x16xbf16>
    %cst_27 = arith.constant dense<0.000000e+00> : vector<128x16xf32>
    %48 = tpu.matmul %46, %47, %cst_27 {dimension_numbers = #tpu.dot_dimension_numbers<[1], [0], [0], [1], [0, 0, 1, 1], [], []>} : vector<128x16xbf16>, vector<16x16xbf16>, vector<128x16xf32> -> vector<128x16xf32>
    %c0_28 = arith.constant 0 : index
    %c0_29 = arith.constant 0 : index
    %49 = vector.load %arg4[%c0_28, %c0_29] : memref<1x16xf32, #tpu.memory_space<vmem>>, vector<1x16xf32>
    %50 = vector.broadcast %49 : vector<1x16xf32> to vector<128x16xf32>
    %51 = arith.addf %48, %50 : vector<128x16xf32>
    %52 = vector.shape_cast %51 : vector<128x16xf32> to vector<2x64x16xf32>
    %53 = arith.addf %0, %52 : vector<2x64x16xf32>
    %c0_30 = arith.constant 0 : index
    %c0_31 = arith.constant 0 : index
    %c0_32 = arith.constant 0 : index
    %54 = vector.load %arg5[%c0_30, %c0_31, %c0_32] : memref<2x64x16xf32, #tpu.memory_space<vmem>>, vector<2x64x16xf32>
    tpu.vector_store %arg5[%c0_30, %c0_31, %c0_32], %53 {strides = array<i32>} : memref<2x64x16xf32, #tpu.memory_space<vmem>>, vector<2x64x16xf32>,
    return
  }
}

module attributes {stable_mosaic.version = 11 : i64} {
  func.func @_matmul_bias_act_kernel(%arg0: i32, %arg1: memref<160x16xbf16, #tpu.memory_space<vmem>>, %arg2: memref<16x128xbf16, #tpu.memory_space<vmem>>, %arg3: memref<1x128xf32, #tpu.memory_space<vmem>>, %arg4: memref<160x128xf32, #tpu.memory_space<vmem>>) attributes {dimension_semantics = [#tpu.dimension_semantics<parallel>], iteration_bounds = array<i64: 1>, scalar_prefetch = 0 : i64, scratch_operands = 0 : i64, tpu.core_type = #tpu.core_type<tc>, window_params = [{transform_indices = @transform_0, window_bounds = array<i64: 160, 16>}, {pipeline_mode = #tpu.pipeline_mode<synchronous>, transform_indices = @transform_1, window_bounds = array<i64: 16, 128>}, {pipeline_mode = #tpu.pipeline_mode<synchronous>, transform_indices = @transform_2, window_bounds = array<i64: 1, 128>}, {transform_indices = @transform_3, window_bounds = array<i64: 160, 128>}]} {
    %c0 = arith.constant 0 : index
    %c0_0 = arith.constant 0 : index
    %0 = vector.load %arg1[%c0, %c0_0] : memref<160x16xbf16, #tpu.memory_space<vmem>>, vector<160x16xbf16>
    %c0_1 = arith.constant 0 : index
    %c0_2 = arith.constant 0 : index
    %1 = vector.load %arg2[%c0_1, %c0_2] : memref<16x128xbf16, #tpu.memory_space<vmem>>, vector<16x128xbf16>
    %cst = arith.constant dense<0.000000e+00> : vector<160x128xf32>
    %2 = tpu.matmul %0, %1, %cst {dimension_numbers = #tpu.dot_dimension_numbers<[1], [0], [0], [1], [0, 0, 1, 1], [], []>} : vector<160x16xbf16>, vector<16x128xbf16>, vector<160x128xf32> -> vector<160x128xf32>
    %c0_3 = arith.constant 0 : index
    %c0_4 = arith.constant 0 : index
    %3 = vector.load %arg3[%c0_3, %c0_4] : memref<1x128xf32, #tpu.memory_space<vmem>>, vector<1x128xf32>
    %4 = vector.broadcast %3 : vector<1x128xf32> to vector<160x128xf32>
    %5 = arith.addf %2, %4 : vector<160x128xf32>
    %c0_5 = arith.constant 0 : index
    %c0_6 = arith.constant 0 : index
    %6 = vector.load %arg4[%c0_5, %c0_6] : memref<160x128xf32, #tpu.memory_space<vmem>>, vector<160x128xf32>
    tpu.vector_store %arg4[%c0_5, %c0_6], %5 {strides = array<i32>} : memref<160x128xf32, #tpu.memory_space<vmem>>, vector<160x128xf32>,
    return
  }
  func.func @transform_0(%arg0: i32) -> (i32, i32) {
    %c0_i32 = arith.constant 0 : i32
    %c0_i32_0 = arith.constant 0 : i32
    return %arg0, %c0_i32 : i32, i32
  }
  func.func @transform_1(%arg0: i32) -> (i32, i32) {
    %c0_i32 = arith.constant 0 : i32
    %c0_i32_0 = arith.constant 0 : i32
    %c0_i32_1 = arith.constant 0 : i32
    return %c0_i32, %c0_i32_0 : i32, i32
  }
  func.func @transform_2(%arg0: i32) -> (i32, i32) {
    %c0_i32 = arith.constant 0 : i32
    %c0_i32_0 = arith.constant 0 : i32
    %c0_i32_1 = arith.constant 0 : i32
    return %c0_i32, %c0_i32_0 : i32, i32
  }
  func.func @transform_3(%arg0: i32) -> (i32, i32) {
    %c0_i32 = arith.constant 0 : i32
    %c0_i32_0 = arith.constant 0 : i32
    return %arg0, %c0_i32 : i32, i32
  }
}

module attributes {stable_mosaic.version = 11 : i64} {
  func.func @_fusor_kernel(%arg0: memref<2x16x16xbf16, #tpu.memory_space<vmem>>, %arg1: memref<2x64x16xbf16, #tpu.memory_space<vmem>>, %arg2: memref<16x16xbf16, #tpu.memory_space<vmem>>, %arg3: memref<1x1x16xf32, #tpu.memory_space<vmem>>, %arg4: memref<2x64x16xf32, #tpu.memory_space<vmem>>) attributes {dimension_semantics = [], scalar_prefetch = 0 : i64, scratch_operands = 0 : i64, tpu.core_type = #tpu.core_type<tc>} {
    %c0 = arith.constant 0 : index
    %c0_0 = arith.constant 0 : index
    %c0_1 = arith.constant 0 : index
    %0 = vector.load %arg0[%c0, %c0_0, %c0_1] : memref<2x16x16xbf16, #tpu.memory_space<vmem>>, vector<2x16x16xbf16>
    %c0_2 = arith.constant 0 : index
    %c0_3 = arith.constant 0 : index
    %c0_4 = arith.constant 0 : index
    %1 = vector.load %arg1[%c0_2, %c0_3, %c0_4] : memref<2x64x16xbf16, #tpu.memory_space<vmem>>, vector<2x64x16xbf16>
    "tpu.trace_start"() <{level = 10 : i32, message = "bxc,bzc->bxz"}> : () -> ()
    %cst = arith.constant dense<0.000000e+00> : vector<2x64x16xf32>
    %2 = tpu.matmul %1, %0, %cst {dimension_numbers = #tpu.dot_dimension_numbers<[2], [2], [1], [1], [0, 0, 0, 1, 1, 1], [0], [0]>} : vector<2x64x16xbf16>, vector<2x16x16xbf16>, vector<2x64x16xf32> -> vector<2x64x16xf32>
    "tpu.trace_stop"() : () -> ()
    %3 = vector.shape_cast %2 : vector<2x64x16xf32> to vector<128x16xf32>
    %4 = arith.truncf %3 : vector<128x16xf32> to vector<128x16xbf16>
    %c0_5 = arith.constant 0 : index
    %c0_6 = arith.constant 0 : index
    %5 = vector.load %arg2[%c0_5, %c0_6] : memref<16x16xbf16, #tpu.memory_space<vmem>>, vector<16x16xbf16>
    %cst_7 = arith.constant dense<0.000000e+00> : vector<128x16xf32>
    %6 = tpu.matmul %4, %5, %cst_7 {dimension_numbers = #tpu.dot_dimension_numbers<[1], [0], [0], [1], [0, 0, 1, 1], [], []>} : vector<128x16xbf16>, vector<16x16xbf16>, vector<128x16xf32> -> vector<128x16xf32>
    %7 = vector.shape_cast %6 : vector<128x16xf32> to vector<2x64x16xf32>
    %c0_8 = arith.constant 0 : index
    %c0_9 = arith.constant 0 : index
    %c0_10 = arith.constant 0 : index
    %8 = vector.load %arg3[%c0_8, %c0_9, %c0_10] : memref<1x1x16xf32, #tpu.memory_space<vmem>>, vector<1x1x16xf32>
    %9 = vector.broadcast %8 : vector<1x1x16xf32> to vector<2x64x16xf32>
    %10 = arith.addf %7, %9 : vector<2x64x16xf32>
    %cst_11 = arith.constant 0.000000e+00 : f32
    %11 = vector.broadcast %cst_11 : f32 to vector<2x64x16xf32>
    %12 = arith.maximumf %10, %11 : vector<2x64x16xf32>
    %c0_12 = arith.constant 0 : index
    %c0_13 = arith.constant 0 : index
    %c0_14 = arith.constant 0 : index
    %13 = vector.load %arg4[%c0_12, %c0_13, %c0_14] : memref<2x64x16xf32, #tpu.memory_space<vmem>>, vector<2x64x16xf32>
    tpu.vector_store %arg4[%c0_12, %c0_13, %c0_14], %12 {strides = array<i32>} : memref<2x64x16xf32, #tpu.memory_space<vmem>>, vector<2x64x16xf32>,
    return
  }
}

module attributes {stable_mosaic.version = 11 : i64} {
  func.func @_matmul_bias_act_kernel(%arg0: i32, %arg1: memref<128x144xbf16, #tpu.memory_space<vmem>>, %arg2: memref<144x128xbf16, #tpu.memory_space<vmem>>, %arg3: memref<1x128xf32, #tpu.memory_space<vmem>>, %arg4: memref<128x128xf32, #tpu.memory_space<vmem>>) attributes {dimension_semantics = [#tpu.dimension_semantics<parallel>], iteration_bounds = array<i64: 1>, scalar_prefetch = 0 : i64, scratch_operands = 0 : i64, tpu.core_type = #tpu.core_type<tc>, window_params = [{transform_indices = @transform_0, window_bounds = array<i64: 128, 144>}, {pipeline_mode = #tpu.pipeline_mode<synchronous>, transform_indices = @transform_1, window_bounds = array<i64: 144, 128>}, {pipeline_mode = #tpu.pipeline_mode<synchronous>, transform_indices = @transform_2, window_bounds = array<i64: 1, 128>}, {transform_indices = @transform_3, window_bounds = array<i64: 128, 128>}]} {
    %c0 = arith.constant 0 : index
    %c0_0 = arith.constant 0 : index
    %0 = vector.load %arg1[%c0, %c0_0] : memref<128x144xbf16, #tpu.memory_space<vmem>>, vector<128x144xbf16>
    %c0_1 = arith.constant 0 : index
    %c0_2 = arith.constant 0 : index
    %1 = vector.load %arg2[%c0_1, %c0_2] : memref<144x128xbf16, #tpu.memory_space<vmem>>, vector<144x128xbf16>
    %cst = arith.constant dense<0.000000e+00> : vector<128x128xf32>
    %2 = tpu.matmul %0, %1, %cst {dimension_numbers = #tpu.dot_dimension_numbers<[1], [0], [0], [1], [0, 0, 1, 1], [], []>} : vector<128x144xbf16>, vector<144x128xbf16>, vector<128x128xf32> -> vector<128x128xf32>
    %c0_3 = arith.constant 0 : index
    %c0_4 = arith.constant 0 : index
    %3 = vector.load %arg3[%c0_3, %c0_4] : memref<1x128xf32, #tpu.memory_space<vmem>>, vector<1x128xf32>
    %4 = vector.broadcast %3 : vector<1x128xf32> to vector<128x128xf32>
    %5 = arith.addf %2, %4 : vector<128x128xf32>
    %cst_5 = arith.constant 0.000000e+00 : f32
    %6 = vector.broadcast %cst_5 : f32 to vector<128x128xf32>
    %7 = arith.maximumf %5, %6 : vector<128x128xf32>
    %c0_6 = arith.constant 0 : index
    %c0_7 = arith.constant 0 : index
    %8 = vector.load %arg4[%c0_6, %c0_7] : memref<128x128xf32, #tpu.memory_space<vmem>>, vector<128x128xf32>
    tpu.vector_store %arg4[%c0_6, %c0_7], %7 {strides = array<i32>} : memref<128x128xf32, #tpu.memory_space<vmem>>, vector<128x128xf32>,
    return
  }
  func.func @transform_0(%arg0: i32) -> (i32, i32) {
    %c0_i32 = arith.constant 0 : i32
    %c0_i32_0 = arith.constant 0 : i32
    return %arg0, %c0_i32 : i32, i32
  }
  func.func @transform_1(%arg0: i32) -> (i32, i32) {
    %c0_i32 = arith.constant 0 : i32
    %c0_i32_0 = arith.constant 0 : i32
    %c0_i32_1 = arith.constant 0 : i32
    return %c0_i32, %c0_i32_0 : i32, i32
  }
  func.func @transform_2(%arg0: i32) -> (i32, i32) {
    %c0_i32 = arith.constant 0 : i32
    %c0_i32_0 = arith.constant 0 : i32
    %c0_i32_1 = arith.constant 0 : i32
    return %c0_i32, %c0_i32_0 : i32, i32
  }
  func.func @transform_3(%arg0: i32) -> (i32, i32) {
    %c0_i32 = arith.constant 0 : i32
    %c0_i32_0 = arith.constant 0 : i32
    return %arg0, %c0_i32 : i32, i32
  }
}

module attributes {stable_mosaic.version = 11 : i64} {
  func.func @_matmul_bias_act_kernel(%arg0: i32, %arg1: memref<128x216xbf16, #tpu.memory_space<vmem>>, %arg2: memref<216x128xbf16, #tpu.memory_space<vmem>>, %arg3: memref<1x128xf32, #tpu.memory_space<vmem>>, %arg4: memref<128x128xf32, #tpu.memory_space<vmem>>) attributes {dimension_semantics = [#tpu.dimension_semantics<parallel>], iteration_bounds = array<i64: 1>, scalar_prefetch = 0 : i64, scratch_operands = 0 : i64, tpu.core_type = #tpu.core_type<tc>, window_params = [{transform_indices = @transform_0, window_bounds = array<i64: 128, 216>}, {pipeline_mode = #tpu.pipeline_mode<synchronous>, transform_indices = @transform_1, window_bounds = array<i64: 216, 128>}, {pipeline_mode = #tpu.pipeline_mode<synchronous>, transform_indices = @transform_2, window_bounds = array<i64: 1, 128>}, {transform_indices = @transform_3, window_bounds = array<i64: 128, 128>}]} {
    %c0 = arith.constant 0 : index
    %c0_0 = arith.constant 0 : index
    %0 = vector.load %arg1[%c0, %c0_0] : memref<128x216xbf16, #tpu.memory_space<vmem>>, vector<128x216xbf16>
    %c0_1 = arith.constant 0 : index
    %c0_2 = arith.constant 0 : index
    %1 = vector.load %arg2[%c0_1, %c0_2] : memref<216x128xbf16, #tpu.memory_space<vmem>>, vector<216x128xbf16>
    %cst = arith.constant dense<0.000000e+00> : vector<128x128xf32>
    %2 = tpu.matmul %0, %1, %cst {dimension_numbers = #tpu.dot_dimension_numbers<[1], [0], [0], [1], [0, 0, 1, 1], [], []>} : vector<128x216xbf16>, vector<216x128xbf16>, vector<128x128xf32> -> vector<128x128xf32>
    %c0_3 = arith.constant 0 : index
    %c0_4 = arith.constant 0 : index
    %3 = vector.load %arg3[%c0_3, %c0_4] : memref<1x128xf32, #tpu.memory_space<vmem>>, vector<1x128xf32>
    %4 = vector.broadcast %3 : vector<1x128xf32> to vector<128x128xf32>
    %5 = arith.addf %2, %4 : vector<128x128xf32>
    %cst_5 = arith.constant 0.000000e+00 : f32
    %6 = vector.broadcast %cst_5 : f32 to vector<128x128xf32>
    %7 = arith.maximumf %5, %6 : vector<128x128xf32>
    %c0_6 = arith.constant 0 : index
    %c0_7 = arith.constant 0 : index
    %8 = vector.load %arg4[%c0_6, %c0_7] : memref<128x128xf32, #tpu.memory_space<vmem>>, vector<128x128xf32>
    tpu.vector_store %arg4[%c0_6, %c0_7], %7 {strides = array<i32>} : memref<128x128xf32, #tpu.memory_space<vmem>>, vector<128x128xf32>,
    return
  }
  func.func @transform_0(%arg0: i32) -> (i32, i32) {
    %c0_i32 = arith.constant 0 : i32
    %c0_i32_0 = arith.constant 0 : i32
    return %arg0, %c0_i32 : i32, i32
  }
  func.func @transform_1(%arg0: i32) -> (i32, i32) {
    %c0_i32 = arith.constant 0 : i32
    %c0_i32_0 = arith.constant 0 : i32
    %c0_i32_1 = arith.constant 0 : i32
    return %c0_i32, %c0_i32_0 : i32, i32
  }
  func.func @transform_2(%arg0: i32) -> (i32, i32) {
    %c0_i32 = arith.constant 0 : i32
    %c0_i32_0 = arith.constant 0 : i32
    %c0_i32_1 = arith.constant 0 : i32
    return %c0_i32, %c0_i32_0 : i32, i32
  }
  func.func @transform_3(%arg0: i32) -> (i32, i32) {
    %c0_i32 = arith.constant 0 : i32
    %c0_i32_0 = arith.constant 0 : i32
    return %arg0, %c0_i32 : i32, i32
  }
}

module attributes {stable_mosaic.version = 11 : i64} {
  func.func @_matmul_bias_act_kernel(%arg0: i32, %arg1: memref<128x12xbf16, #tpu.memory_space<vmem>>, %arg2: memref<12x128xbf16, #tpu.memory_space<vmem>>, %arg3: memref<1x128xf32, #tpu.memory_space<vmem>>, %arg4: memref<128x128xf32, #tpu.memory_space<vmem>>) attributes {dimension_semantics = [#tpu.dimension_semantics<parallel>], iteration_bounds = array<i64: 1>, scalar_prefetch = 0 : i64, scratch_operands = 0 : i64, tpu.core_type = #tpu.core_type<tc>, window_params = [{transform_indices = @transform_0, window_bounds = array<i64: 128, 12>}, {pipeline_mode = #tpu.pipeline_mode<synchronous>, transform_indices = @transform_1, window_bounds = array<i64: 12, 128>}, {pipeline_mode = #tpu.pipeline_mode<synchronous>, transform_indices = @transform_2, window_bounds = array<i64: 1, 128>}, {transform_indices = @transform_3, window_bounds = array<i64: 128, 128>}]} {
    %c0 = arith.constant 0 : index
    %c0_0 = arith.constant 0 : index
    %0 = vector.load %arg1[%c0, %c0_0] : memref<128x12xbf16, #tpu.memory_space<vmem>>, vector<128x12xbf16>
    %c0_1 = arith.constant 0 : index
    %c0_2 = arith.constant 0 : index
    %1 = vector.load %arg2[%c0_1, %c0_2] : memref<12x128xbf16, #tpu.memory_space<vmem>>, vector<12x128xbf16>
    %cst = arith.constant dense<0.000000e+00> : vector<128x128xf32>
    %2 = tpu.matmul %0, %1, %cst {dimension_numbers = #tpu.dot_dimension_numbers<[1], [0], [0], [1], [0, 0, 1, 1], [], []>} : vector<128x12xbf16>, vector<12x128xbf16>, vector<128x128xf32> -> vector<128x128xf32>
    %c0_3 = arith.constant 0 : index
    %c0_4 = arith.constant 0 : index
    %3 = vector.load %arg3[%c0_3, %c0_4] : memref<1x128xf32, #tpu.memory_space<vmem>>, vector<1x128xf32>
    %4 = vector.broadcast %3 : vector<1x128xf32> to vector<128x128xf32>
    %5 = arith.addf %2, %4 : vector<128x128xf32>
    %6 = tpu.iota {dimensions = array<i32: 1>} : vector<128x128xi32>
    %7 = arith.negf %5 : vector<128x128xf32>
    %8 = math.exp %7 : vector<128x128xf32>
    %cst_5 = arith.constant 1.000000e+00 : f32
    %9 = vector.broadcast %cst_5 : f32 to vector<128x128xf32>
    %10 = arith.addf %9, %8 : vector<128x128xf32>
    %11 = arith.divf %9, %10 : vector<128x128xf32>
    %cst_6 = arith.constant 9.99999974E-5 : f32
    %cst_7 = arith.constant 0.999899983 : f32
    %12 = vector.broadcast %cst_6 : f32 to vector<128x128xf32>
    %13 = arith.maximumf %12, %11 : vector<128x128xf32>
    %14 = vector.broadcast %cst_7 : f32 to vector<128x128xf32>
    %15 = arith.minimumf %14, %13 : vector<128x128xf32>
    %c3_i32 = arith.constant 3 : i32
    %16 = vector.broadcast %c3_i32 : i32 to vector<128x128xi32>
    %17 = arith.cmpi slt, %6, %16 : vector<128x128xi32>
    %18 = arith.select %17, %15, %5 : vector<128x128xi1>, vector<128x128xf32>
    %c0_8 = arith.constant 0 : index
    %c0_9 = arith.constant 0 : index
    %19 = vector.load %arg4[%c0_8, %c0_9] : memref<128x128xf32, #tpu.memory_space<vmem>>, vector<128x128xf32>
    tpu.vector_store %arg4[%c0_8, %c0_9], %18 {strides = array<i32>} : memref<128x128xf32, #tpu.memory_space<vmem>>, vector<128x128xf32>,
    return
  }
  func.func @transform_0(%arg0: i32) -> (i32, i32) {
    %c0_i32 = arith.constant 0 : i32
    %c0_i32_0 = arith.constant 0 : i32
    return %arg0, %c0_i32 : i32, i32
  }
  func.func @transform_1(%arg0: i32) -> (i32, i32) {
    %c0_i32 = arith.constant 0 : i32
    %c0_i32_0 = arith.constant 0 : i32
    %c0_i32_1 = arith.constant 0 : i32
    return %c0_i32, %c0_i32_0 : i32, i32
  }
  func.func @transform_2(%arg0: i32) -> (i32, i32) {
    %c0_i32 = arith.constant 0 : i32
    %c0_i32_0 = arith.constant 0 : i32
    %c0_i32_1 = arith.constant 0 : i32
    return %c0_i32, %c0_i32_0 : i32, i32
  }
  func.func @transform_3(%arg0: i32) -> (i32, i32) {
    %c0_i32 = arith.constant 0 : i32
    %c0_i32_0 = arith.constant 0 : i32
    return %arg0, %c0_i32 : i32, i32
  }
}

</mosaic_0001>

<llo_original>
// kernel: mobilevit_track_forward.9
$region0: #{mobilevit_track_forward.9}
  #allocation0 [shape = 'u32[]', space=smem, size = 0x4, offset = 0x4, fixed_abs, tag = 'smem constant byte address 0x4 - core index']
  #allocation1 [shape = 'u32[144,128]{1,0:T(1,128)}', space=vmem, size = 0x12000, scoped, tag = 'internal scratch']
  %s0 = inlined_call_operand.vmem [shape: bf16[640,27], index: 0, kind: input, shape index: {}]
  %s1 = inlined_call_operand.vmem [shape: bf16[27,128], index: 1, kind: input, shape index: {}]
  %s2 = inlined_call_operand.vmem [shape: f32[1,128], index: 2, kind: input, shape index: {}]
  %s3 = inlined_call_operand.vmem [shape: f32[640,128], index: 3, kind: output, shape index: {}]
  %s4 = sld [smem:[#allocation0]]
  $region22: #{mobilevit_track_forward.9} parent=0
    _
  %s6 = ssub.s32 1, %s4
  %s7 = scalar_select 0, %s6, %s4
  // Predicated region
  $region2: #{mobilevit_track_forward.9} parent=0 // pred_check
    _
  $region3: #{mobilevit_track_forward.9} parent=0 // pred_check_branch
    %9 = sbr.rel (0) target = $region5
  $region4: #{mobilevit_track_forward.9} parent=0 // pred_region
    _
  $region5: #{mobilevit_track_forward.9} parent=0 // pred_fallthru
    _
  // Predicated region
  $region6: #{mobilevit_track_forward.9} parent=0 // pred_check
    _
  $region7: #{mobilevit_track_forward.9} parent=0 // pred_check_branch
    %11 = sbr.rel (0) target = $region9
  $region8: #{mobilevit_track_forward.9} parent=0 // pred_region
    _
  $region9: #{mobilevit_track_forward.9} parent=0 // pred_fallthru
    _
  // Predicated region
  $region10: #{mobilevit_track_forward.9} parent=0 // pred_check
    _
  $region11: #{mobilevit_track_forward.9} parent=0 // pred_check_branch
    %13 = sbr.rel (0) target = $region13
  $region12: #{mobilevit_track_forward.9} parent=0 // pred_region
    _
  $region13: #{mobilevit_track_forward.9} parent=0 // pred_fallthru
    _
  %v15 = vld [vmem:[%s0] sm:$0xf]
  %v16 = vld [vmem:[%s0 + $0x4] sm:$0xf]
  %v17 = vld [vmem:[%s0 + $0x8] sm:$0xf]
  %v18 = vld [vmem:[%s0 + $0xc] sm:$0xf]
  %v19 = vld [vmem:[%s0 + $0x10] sm:$0xf]
  %v20 = vld [vmem:[%s0 + $0x14] sm:$0xf]
  %v21 = vld [vmem:[%s0 + $0x18] sm:$0xf]
  %v22 = vld [vmem:[%s0 + $0x1c] sm:$0xf]
  %v23 = vld [vmem:[%s0 + $0x20] sm:$0xf]
  %v24 = vld [vmem:[%s0 + $0x24] sm:$0xf]
  %v25 = vld [vmem:[%s0 + $0x28] sm:$0xf]
  %v26 = vld [vmem:[%s0 + $0x2c] sm:$0xf]
  %v27 = vld [vmem:[%s0 + $0x30] sm:$0xf]
  %v28 = vld [vmem:[%s0 + $0x34] sm:$0xf]
  %v29 = vld [vmem:[%s0 + $0x38] sm:$0xf]
  %v30 = vld [vmem:[%s0 + $0x3c] sm:$0xf]
  %v31 = vld [vmem:[%s0 + $0x40] sm:$0xf]
  %v32 = vld [vmem:[%s0 + $0x44] sm:$0xf]
  %v33 = vld [vmem:[%s0 + $0x48] sm:$0xf]
  %v34 = vld [vmem:[%s0 + $0x4c] sm:$0xf]
  %v35 = vld [vmem:[%s0 + $0x50] sm:$0xf]
  %v36 = vld [vmem:[%s0 + $0x54] sm:$0xf]
  %v37 = vld [vmem:[%s0 + $0x58] sm:$0xf]
  %v38 = vld [vmem:[%s0 + $0x5c] sm:$0xf]
  %v39 = vld [vmem:[%s0 + $0x60] sm:$0xf]
  %v40 = vld [vmem:[%s0 + $0x64] sm:$0xf]
  %v41 = vld [vmem:[%s0 + $0x68] sm:$0xf]
  %v42 = vld [vmem:[%s0 + $0x6c] sm:$0xf]
  %v43 = vld [vmem:[%s0 + $0x70] sm:$0xf]
  %v44 = vld [vmem:[%s0 + $0x74] sm:$0xf]
  %v45 = vld [vmem:[%s0 + $0x78] sm:$0xf]
  %v46 = vld [vmem:[%s0 + $0x7c] sm:$0xf]
  %v47 = vld [vmem:[%s0 + $0x80] sm:$0xf]
  %v48 = vld [vmem:[%s0 + $0x84] sm:$0xf]
  %v49 = vld [vmem:[%s0 + $0x88] sm:$0xf]
  %v50 = vld [vmem:[%s0 + $0x8c] sm:$0xf]
  %v51 = vld [vmem:[%s0 + $0x90] sm:$0xf]
  %v52 = vld [vmem:[%s0 + $0x94] sm:$0xf]
  %v53 = vld [vmem:[%s0 + $0x98] sm:$0xf]
  %v54 = vld [vmem:[%s0 + $0x9c] sm:$0xf]
  %v55 = vld [vmem:[%s0 + $0xa0] sm:$0xf]
  %v56 = vld [vmem:[%s0 + $0xa4] sm:$0xf]
  %v57 = vld [vmem:[%s0 + $0xa8] sm:$0xf]
  %v58 = vld [vmem:[%s0 + $0xac] sm:$0xf]
  %v59 = vld [vmem:[%s0 + $0xb0] sm:$0xf]
  %v60 = vld [vmem:[%s0 + $0xb4] sm:$0xf]
  %v61 = vld [vmem:[%s0 + $0xb8] sm:$0xf]
  %v62 = vld [vmem:[%s0 + $0xbc] sm:$0xf]
  %v63 = vld [vmem:[%s0 + $0xc0] sm:$0xf]
  %v64 = vld [vmem:[%s0 + $0xc4] sm:$0xf]
  %v65 = vld [vmem:[%s0 + $0xc8] sm:$0xf]
  %v66 = vld [vmem:[%s0 + $0xcc] sm:$0xf]
  %v67 = vld [vmem:[%s0 + $0xd0] sm:$0xf]
  %v68 = vld [vmem:[%s0 + $0xd4] sm:$0xf]
  %v69 = vld [vmem:[%s0 + $0xd8] sm:$0xf]
  %v70 = vld [vmem:[%s0 + $0xdc] sm:$0xf]
  %v71 = vld [vmem:[%s0 + $0xe0] sm:$0xf]
  %v72 = vld [vmem:[%s0 + $0xe4] sm:$0xf]
  %v73 = vld [vmem:[%s0 + $0xe8] sm:$0xf]
  %v74 = vld [vmem:[%s0 + $0xec] sm:$0xf]
  %v75 = vld [vmem:[%s0 + $0xf0] sm:$0xf]
  %v76 = vld [vmem:[%s0 + $0xf4] sm:$0xf]
  %v77 = vld [vmem:[%s0 + $0xf8] sm:$0xf]
  %v78 = vld [vmem:[%s0 + $0xfc] sm:$0xf]
  %v79 = vld [vmem:[%s0 + $0x100] sm:$0xf]
  %v80 = vld [vmem:[%s0 + $0x104] sm:$0xf]
  %v81 = vld [vmem:[%s0 + $0x108] sm:$0xf]
  %v82 = vld [vmem:[%s0 + $0x10c] sm:$0xf]
  %v83 = vld [vmem:[%s0 + $0x110] sm:$0xf]
  %v84 = vld [vmem:[%s0 + $0x114] sm:$0xf]
  %v85 = vld [vmem:[%s0 + $0x118] sm:$0xf]
  %v86 = vld [vmem:[%s0 + $0x11c] sm:$0xf]
  %v87 = vld [vmem:[%s0 + $0x120] sm:$0xf]
  %v88 = vld [vmem:[%s0 + $0x124] sm:$0xf]
  %v89 = vld [vmem:[%s0 + $0x128] sm:$0xf]
  %v90 = vld [vmem:[%s0 + $0x12c] sm:$0xf]
  %v91 = vld [vmem:[%s0 + $0x130] sm:$0xf]
  %v92 = vld [vmem:[%s0 + $0x134] sm:$0xf]
  %v93 = vld [vmem:[%s0 + $0x138] sm:$0xf]
  %v94 = vld [vmem:[%s0 + $0x13c] sm:$0xf]
  %v95 = vld [vmem:[%s1] sm:$0xf]
  %v96 = vld [vmem:[%s1 + $0x4] sm:$0xf]
  %v97 = vld [vmem:[%s1 + $0x8] sm:$0xf]
  %v98 = vld [vmem:[%s1 + $0xc] sm:$0x3]
  %v99 = vld [vmem:[%s2] sm:$0x1]
  %v101 = vlaneseq
  %v102 = vshrl.u32 %v101, 7
  %v103 = vsub.s32 0, %v102
  %v104 = vrot.slane %v99, %v103
  %v186 = vunpack.c.l.b16 %v15
  %v187 = vunpack.c.l.b16 %v16
  %v188 = vunpack.c.l.b16 %v17
  %v189 = vunpack.c.l.b16 %v18
  %v190 = vunpack.c.l.b16 %v19
  %v191 = vunpack.c.l.b16 %v20
  %v192 = vunpack.c.l.b16 %v21
  %v193 = vunpack.c.l.b16 %v22
  %v194 = vunpack.c.l.b16 %v23
  %v195 = vunpack.c.l.b16 %v24
  %v196 = vunpack.c.l.b16 %v25
  %v197 = vunpack.c.l.b16 %v26
  %v198 = vunpack.c.l.b16 %v27
  %v199 = vunpack.c.l.b16 %v28
  %v200 = vunpack.c.l.b16 %v29
  %v201 = vunpack.c.l.b16 %v30
  %v202 = vunpack.c.l.b16 %v31
  %v203 = vunpack.c.l.b16 %v32
  %v204 = vunpack.c.l.b16 %v33
  %v205 = vunpack.c.l.b16 %v34
  %v206 = vunpack.c.l.b16 %v35
  %v207 = vunpack.c.l.b16 %v36
  %v208 = vunpack.c.l.b16 %v37
  %v209 = vunpack.c.l.b16 %v38
  %v210 = vunpack.c.l.b16 %v39
  %v211 = vunpack.c.l.b16 %v40
  %v212 = vunpack.c.l.b16 %v41
  %v213 = vunpack.c.l.b16 %v42
  %v214 = vunpack.c.l.b16 %v43
  %v215 = vunpack.c.l.b16 %v44
  %v216 = vunpack.c.l.b16 %v45
  %v217 = vunpack.c.l.b16 %v46
  %v218 = vunpack.c.l.b16 %v47
  %v219 = vunpack.c.l.b16 %v48
  %v220 = vunpack.c.l.b16 %v49
  %v221 = vunpack.c.l.b16 %v50
  %v222 = vunpack.c.l.b16 %v51
  %v223 = vunpack.c.l.b16 %v52
  %v224 = vunpack.c.l.b16 %v53
  %v225 = vunpack.c.l.b16 %v54
  %v226 = vunpack.c.l.b16 %v55
  %v227 = vunpack.c.l.b16 %v56
  %v228 = vunpack.c.l.b16 %v57
  %v229 = vunpack.c.l.b16 %v58
  %v230 = vunpack.c.l.b16 %v59
  %v231 = vunpack.c.l.b16 %v60
  %v232 = vunpack.c.l.b16 %v61
  %v233 = vunpack.c.l.b16 %v62
  %v234 = vunpack.c.l.b16 %v63
  %v235 = vunpack.c.l.b16 %v64
  %v236 = vunpack.c.l.b16 %v65
  %v237 = vunpack.c.l.b16 %v66
  %v238 = vunpack.c.l.b16 %v67
  %v239 = vunpack.c.l.b16 %v68
  %v240 = vunpack.c.l.b16 %v69
  %v241 = vunpack.c.l.b16 %v70
  %v242 = vunpack.c.l.b16 %v71
  %v243 = vunpack.c.l.b16 %v72
  %v244 = vunpack.c.l.b16 %v73
  %v245 = vunpack.c.l.b16 %v74
  %v246 = vunpack.c.l.b16 %v75
  %v247 = vunpack.c.l.b16 %v76
  %v248 = vunpack.c.l.b16 %v77
  %v249 = vunpack.c.l.b16 %v78
  %v250 = vunpack.c.l.b16 %v79
  %v251 = vunpack.c.l.b16 %v80
  %v252 = vunpack.c.l.b16 %v81
  %v253 = vunpack.c.l.b16 %v82
  %v254 = vunpack.c.l.b16 %v83
  %v255 = vunpack.c.l.b16 %v84
  %v256 = vunpack.c.l.b16 %v85
  %v257 = vunpack.c.l.b16 %v86
  %v258 = vunpack.c.l.b16 %v87
  %v259 = vunpack.c.l.b16 %v88
  %v260 = vunpack.c.l.b16 %v89
  %v261 = vunpack.c.l.b16 %v90
  %v262 = vunpack.c.l.b16 %v91
  %v263 = vunpack.c.l.b16 %v92
  %v264 = vunpack.c.l.b16 %v93
  %v265 = vunpack.c.l.b16 %v94
  %v266 = vpack.c.b16 %v187, %v186
  %v267 = vpack.c.b16 %v189, %v188
  %v268 = vpack.c.b16 %v191, %v190
  %v269 = vpack.c.b16 %v193, %v192
  %v270 = vpack.c.b16 %v195, %v194
  %v271 = vpack.c.b16 %v197, %v196
  %v272 = vpack.c.b16 %v199, %v198
  %v273 = vpack.c.b16 %v201, %v200
  %v274 = vpack.c.b16 %v203, %v202
  %v275 = vpack.c.b16 %v205, %v204
  %v276 = vpack.c.b16 %v207, %v206
  %v277 = vpack.c.b16 %v209, %v208
  %v278 = vpack.c.b16 %v211, %v210
  %v279 = vpack.c.b16 %v213, %v212
  %v280 = vpack.c.b16 %v215, %v214
  %v281 = vpack.c.b16 %v217, %v216
  %v282 = vpack.c.b16 %v219, %v218
  %v283 = vpack.c.b16 %v221, %v220
  %v284 = vpack.c.b16 %v223, %v222
  %v285 = vpack.c.b16 %v225, %v224
  %v286 = vpack.c.b16 %v227, %v226
  %v287 = vpack.c.b16 %v229, %v228
  %v288 = vpack.c.b16 %v231, %v230
  %v289 = vpack.c.b16 %v233, %v232
  %v290 = vpack.c.b16 %v235, %v234
  %v291 = vpack.c.b16 %v237, %v236
  %v292 = vpack.c.b16 %v239, %v238
  %v293 = vpack.c.b16 %v241, %v240
  %v294 = vpack.c.b16 %v243, %v242
  %v295 = vpack.c.b16 %v245, %v244
  %v296 = vpack.c.b16 %v247, %v246
  %v297 = vpack.c.b16 %v249, %v248
  %v298 = vpack.c.b16 %v251, %v250
  %v299 = vpack.c.b16 %v253, %v252
  %v300 = vpack.c.b16 %v255, %v254
  %v301 = vpack.c.b16 %v257, %v256
  %v302 = vpack.c.b16 %v259, %v258
  %v303 = vpack.c.b16 %v261, %v260
  %v304 = vpack.c.b16 %v263, %v262
  %v305 = vpack.c.b16 %v265, %v264
  %v310 = vunpack.c.l.b16 %v95
  %v311 = vunpack.c.l.b16 %v96
  %v312 = vunpack.c.l.b16 %v97
  %v313 = vunpack.c.l.b16 %v98
  %v314 = vpack.c.b16 %v311, %v310
  %v315 = vpack.c.b16 %v313, %v312
  %vm317 = vcmask 220160
  %v319 = vsel %vm317, %v266, 0
  %v322 = vsel %vm317, %v267, 0
  %v325 = vsel %vm317, %v268, 0
  %v328 = vsel %vm317, %v269, 0
  %v331 = vsel %vm317, %v270, 0
  %v334 = vsel %vm317, %v271, 0
  %v337 = vsel %vm317, %v272, 0
  %v340 = vsel %vm317, %v273, 0
  %v343 = vsel %vm317, %v274, 0
  %v346 = vsel %vm317, %v275, 0
  %v349 = vsel %vm317, %v276, 0
  %v352 = vsel %vm317, %v277, 0
  %v355 = vsel %vm317, %v278, 0
  %v358 = vsel %vm317, %v279, 0
  %v361 = vsel %vm317, %v280, 0
  %v364 = vsel %vm317, %v281, 0
  %v367 = vsel %vm317, %v282, 0
  %v370 = vsel %vm317, %v283, 0
  %v373 = vsel %vm317, %v284, 0
  %v376 = vsel %vm317, %v285, 0
  %v379 = vsel %vm317, %v286, 0
  %v382 = vsel %vm317, %v287, 0
  %v385 = vsel %vm317, %v288, 0
  %v388 = vsel %vm317, %v289, 0
  %v391 = vsel %vm317, %v290, 0
  %v394 = vsel %vm317, %v291, 0
  %v397 = vsel %vm317, %v292, 0
  %v400 = vsel %vm317, %v293, 0
  %v403 = vsel %vm317, %v294, 0
  %v406 = vsel %vm317, %v295, 0
  %v409 = vsel %vm317, %v296, 0
  %v412 = vsel %vm317, %v297, 0
  %v415 = vsel %vm317, %v298, 0
  %v418 = vsel %vm317, %v299, 0
  %v421 = vsel %vm317, %v300, 0
  %v424 = vsel %vm317, %v301, 0
  %v427 = vsel %vm317, %v302, 0
  %v430 = vsel %vm317, %v303, 0
  %v433 = vsel %vm317, %v304, 0
  %v436 = vsel %vm317, %v305, 0
  %vm438 = vcmask 1044480
  %vm439 = vcmask 1045504
  %v440 = vsel %vm438, 4294967295, 65535
  %v441 = vsel %vm439, %v440, 0
  %v443 = vand.u32 %v315, %v441
  %445 = vmatprep.subr.bf16.mxu0 0
  %446 = vmatpush1.bf16.msra.mxu0 %v314
  %447 = vmatprep.subr.bf16.mxu0 0
  %448 = vmatpush1.bf16.msra.mxu0 %v443
  %449 = vmatprep.subr.bf16.mxu0 0
  %450 = vmatpush1.bf16.msra.mxu0 0
  %451 = vmatprep.subr.bf16.mxu0 0
  %452 = vmatpush1.bf16.msra.mxu0 0
  %453 = vmatprep.subr.bf16.mxu0 0
  %454 = vmatpush1.bf16.msra.mxu0 0
  %455 = vmatprep.subr.bf16.mxu0 0
  %456 = vmatpush1.bf16.msra.mxu0 0
  %457 = vmatprep.subr.bf16.mxu0 0
  %458 = vmatpush1.bf16.msra.mxu0 0
  %459 = vmatprep.subr.bf16.mxu0 0
  %460 = vmatpush1.bf16.msra.mxu0 0
  %461 = vmatprep.subr.bf16.mxu0 0
  %462 = vmatpush1.bf16.msra.mxu0 0
  %463 = vmatprep.subr.bf16.mxu0 0
  %464 = vmatpush1.bf16.msra.mxu0 0
  %465 = vmatprep.subr.bf16.mxu0 0
  %466 = vmatpush1.bf16.msra.mxu0 0
  %467 = vmatprep.subr.bf16.mxu0 0
  %468 = vmatpush1.bf16.msra.mxu0 0
  %469 = vmatprep.subr.bf16.mxu0 0
  %470 = vmatpush1.bf16.msra.mxu0 0
  %471 = vmatprep.subr.bf16.mxu0 0
  %472 = vmatpush1.bf16.msra.mxu0 0
  %473 = vmatprep.subr.bf16.mxu0 0
  %474 = vmatpush1.bf16.msra.mxu0 0
  %475 = vmatprep.subr.bf16.mxu0 0
  %476 = vmatpush1.bf16.msra.mxu0 0
  %477 = vmatprep.mubr.bf16.mxu0 0
  %478 = vmatmul.mubr.bf16.gmra.mrb[0].mxu0 %v319
  %v479 = vpop.f32.mrb[0].mxu0
  %v480 = vadd.f32 %v104, %v479
  %v481 = vpop.f32.mrb[0].mxu0
  %v482 = vpop.f32.mrb[0].mxu0
  %v483 = vadd.f32 %v104, %v482
  %v484 = vpop.f32.mrb[0].mxu0
  %485 = vmatprep.mubr.bf16.mxu0 0
  %486 = vmatmul.mubr.bf16.gmra.mrb[0].mxu0 %v322
  %v487 = vpop.f32.mrb[0].mxu0
  %v488 = vadd.f32 %v104, %v487
  %v489 = vpop.f32.mrb[0].mxu0
  %v490 = vpop.f32.mrb[0].mxu0
  %v491 = vadd.f32 %v104, %v490
  %v492 = vpop.f32.mrb[0].mxu0
  %493 = vmatprep.mubr.bf16.mxu0 0
  %494 = vmatmul.mubr.bf16.gmra.mrb[0].mxu0 %v325
  %v495 = vpop.f32.mrb[0].mxu0
  %v496 = vadd.f32 %v104, %v495
  %v497 = vpop.f32.mrb[0].mxu0
  %v498 = vpop.f32.mrb[0].mxu0
  %v499 = vadd.f32 %v104, %v498
  %v500 = vpop.f32.mrb[0].mxu0
  %501 = vmatprep.mubr.bf16.mxu0 0
  %502 = vmatmul.mubr.bf16.gmra.mrb[0].mxu0 %v328
  %v503 = vpop.f32.mrb[0].mxu0
  %v504 = vadd.f32 %v104, %v503
  %v505 = vpop.f32.mrb[0].mxu0
  %v506 = vpop.f32.mrb[0].mxu0
  %v507 = vadd.f32 %v104, %v506
  %v508 = vpop.f32.mrb[0].mxu0
  %509 = vmatprep.mubr.bf16.mxu0 0
  %510 = vmatmul.mubr.bf16.gmra.mrb[0].mxu0 %v331
  %v511 = vpop.f32.mrb[0].mxu0
  %v512 = vadd.f32 %v104, %v511
  %v513 = vpop.f32.mrb[0].mxu0
  %v514 = vpop.f32.mrb[0].mxu0
  %v515 = vadd.f32 %v104, %v514
  %v516 = vpop.f32.mrb[0].mxu0
  %517 = vmatprep.mubr.bf16.mxu0 0
  %518 = vmatmul.mubr.bf16.gmra.mrb[0].mxu0 %v334
  %v519 = vpop.f32.mrb[0].mxu0
  %v520 = vadd.f32 %v104, %v519
  %v521 = vpop.f32.mrb[0].mxu0
  %v522 = vpop.f32.mrb[0].mxu0
  %v523 = vadd.f32 %v104, %v522
  %v524 = vpop.f32.mrb[0].mxu0
  %525 = vmatprep.mubr.bf16.mxu0 0
  %526 = vmatmul.mubr.bf16.gmra.mrb[0].mxu0 %v337
  %v527 = vpop.f32.mrb[0].mxu0
  %v528 = vadd.f32 %v104, %v527
  %v529 = vpop.f32.mrb[0].mxu0
  %v530 = vpop.f32.mrb[0].mxu0
  %v531 = vadd.f32 %v104, %v530
  %v532 = vpop.f32.mrb[0].mxu0
  %533 = vmatprep.mubr.bf16.mxu0 0
  %534 = vmatmul.mubr.bf16.gmra.mrb[0].mxu0 %v340
  %v535 = vpop.f32.mrb[0].mxu0
  %v536 = vadd.f32 %v104, %v535
  %v537 = vpop.f32.mrb[0].mxu0
  %v538 = vpop.f32.mrb[0].mxu0
  %v539 = vadd.f32 %v104, %v538
  %v540 = vpop.f32.mrb[0].mxu0
  %541 = vmatprep.mubr.bf16.mxu0 0
  %542 = vmatmul.mubr.bf16.gmra.mrb[0].mxu0 %v343
  %v543 = vpop.f32.mrb[0].mxu0
  %v544 = vadd.f32 %v104, %v543
  %v545 = vpop.f32.mrb[0].mxu0
  %v546 = vpop.f32.mrb[0].mxu0
  %v547 = vadd.f32 %v104, %v546
  %v548 = vpop.f32.mrb[0].mxu0
  %549 = vmatprep.mubr.bf16.mxu0 0
  %550 = vmatmul.mubr.bf16.gmra.mrb[0].mxu0 %v346
  %v551 = vpop.f32.mrb[0].mxu0
  %v552 = vadd.f32 %v104, %v551
  %v553 = vpop.f32.mrb[0].mxu0
  %v554 = vpop.f32.mrb[0].mxu0
  %v555 = vadd.f32 %v104, %v554
  %v556 = vpop.f32.mrb[0].mxu0
  %557 = vmatprep.mubr.bf16.mxu0 0
  %558 = vmatmul.mubr.bf16.gmra.mrb[0].mxu0 %v349
  %v559 = vpop.f32.mrb[0].mxu0
  %v560 = vadd.f32 %v104, %v559
  %v561 = vpop.f32.mrb[0].mxu0
  %v562 = vpop.f32.mrb[0].mxu0
  %v563 = vadd.f32 %v104, %v562
  %v564 = vpop.f32.mrb[0].mxu0
  %565 = vmatprep.mubr.bf16.mxu0 0
  %566 = vmatmul.mubr.bf16.gmra.mrb[0].mxu0 %v352
  %v567 = vpop.f32.mrb[0].mxu0
  %v568 = vadd.f32 %v104, %v567
  %v569 = vpop.f32.mrb[0].mxu0
  %v570 = vpop.f32.mrb[0].mxu0
  %v571 = vadd.f32 %v104, %v570
  %v572 = vpop.f32.mrb[0].mxu0
  %573 = vmatprep.mubr.bf16.mxu0 0
  %574 = vmatmul.mubr.bf16.gmra.mrb[0].mxu0 %v355
  %v575 = vpop.f32.mrb[0].mxu0
  %v576 = vadd.f32 %v104, %v575
  %v577 = vpop.f32.mrb[0].mxu0
  %v578 = vpop.f32.mrb[0].mxu0
  %v579 = vadd.f32 %v104, %v578
  %v580 = vpop.f32.mrb[0].mxu0
  %581 = vmatprep.mubr.bf16.mxu0 0
  %582 = vmatmul.mubr.bf16.gmra.mrb[0].mxu0 %v358
  %v583 = vpop.f32.mrb[0].mxu0
  %v584 = vadd.f32 %v104, %v583
  %v585 = vpop.f32.mrb[0].mxu0
  %v586 = vpop.f32.mrb[0].mxu0
  %v587 = vadd.f32 %v104, %v586
  %v588 = vpop.f32.mrb[0].mxu0
  %589 = vmatprep.mubr.bf16.mxu0 0
  %590 = vmatmul.mubr.bf16.gmra.mrb[0].mxu0 %v361
  %v591 = vpop.f32.mrb[0].mxu0
  %v592 = vadd.f32 %v104, %v591
  %v593 = vpop.f32.mrb[0].mxu0
  %v594 = vpop.f32.mrb[0].mxu0
  %v595 = vadd.f32 %v104, %v594
  %v596 = vpop.f32.mrb[0].mxu0
  %597 = vmatprep.mubr.bf16.mxu0 0
  %598 = vmatmul.mubr.bf16.gmra.mrb[0].mxu0 %v364
  %v599 = vpop.f32.mrb[0].mxu0
  %v600 = vadd.f32 %v104, %v599
  %v601 = vpop.f32.mrb[0].mxu0
  %v602 = vpop.f32.mrb[0].mxu0
  %v603 = vadd.f32 %v104, %v602
  %v604 = vpop.f32.mrb[0].mxu0
  %605 = vmatprep.mubr.bf16.mxu0 0
  %606 = vmatmul.mubr.bf16.gmra.mrb[0].mxu0 %v367
  %v607 = vpop.f32.mrb[0].mxu0
  %v608 = vadd.f32 %v104, %v607
  %v609 = vpop.f32.mrb[0].mxu0
  %v610 = vpop.f32.mrb[0].mxu0
  %v611 = vadd.f32 %v104, %v610
  %v612 = vpop.f32.mrb[0].mxu0
  %613 = vmatprep.mubr.bf16.mxu0 0
  %614 = vmatmul.mubr.bf16.gmra.mrb[0].mxu0 %v370
  %v615 = vpop.f32.mrb[0].mxu0
  %v616 = vadd.f32 %v104, %v615
  %v617 = vpop.f32.mrb[0].mxu0
  %v618 = vpop.f32.mrb[0].mxu0
  %v619 = vadd.f32 %v104, %v618
  %v620 = vpop.f32.mrb[0].mxu0
  %621 = vmatprep.mubr.bf16.mxu0 0
  %622 = vmatmul.mubr.bf16.gmra.mrb[0].mxu0 %v373
  %v623 = vpop.f32.mrb[0].mxu0
  %v624 = vadd.f32 %v104, %v623
  %v625 = vpop.f32.mrb[0].mxu0
  %v626 = vpop.f32.mrb[0].mxu0
  %v627 = vadd.f32 %v104, %v626
  %v628 = vpop.f32.mrb[0].mxu0
  %629 = vmatprep.mubr.bf16.mxu0 0
  %630 = vmatmul.mubr.bf16.gmra.mrb[0].mxu0 %v376
  %v631 = vpop.f32.mrb[0].mxu0
  %v632 = vadd.f32 %v104, %v631
  %v633 = vpop.f32.mrb[0].mxu0
  %v634 = vpop.f32.mrb[0].mxu0
  %v635 = vadd.f32 %v104, %v634
  %v636 = vpop.f32.mrb[0].mxu0
  %637 = vmatprep.mubr.bf16.mxu0 0
  %638 = vmatmul.mubr.bf16.gmra.mrb[0].mxu0 %v379
  %v639 = vpop.f32.mrb[0].mxu0
  %v640 = vadd.f32 %v104, %v639
  %v641 = vpop.f32.mrb[0].mxu0
  %v642 = vpop.f32.mrb[0].mxu0
  %v643 = vadd.f32 %v104, %v642
  %v644 = vpop.f32.mrb[0].mxu0
  %645 = vmatprep.mubr.bf16.mxu0 0
  %646 = vmatmul.mubr.bf16.gmra.mrb[0].mxu0 %v382
  %v647 = vpop.f32.mrb[0].mxu0
  %v648 = vadd.f32 %v104, %v647
  %v649 = vpop.f32.mrb[0].mxu0
  %v650 = vpop.f32.mrb[0].mxu0
  %v651 = vadd.f32 %v104, %v650
  %v652 = vpop.f32.mrb[0].mxu0
  %653 = vmatprep.mubr.bf16.mxu0 0
  %654 = vmatmul.mubr.bf16.gmra.mrb[0].mxu0 %v385
  %v655 = vpop.f32.mrb[0].mxu0
  %v656 = vadd.f32 %v104, %v655
  %v657 = vpop.f32.mrb[0].mxu0
  %v658 = vpop.f32.mrb[0].mxu0
  %v659 = vadd.f32 %v104, %v658
  %v660 = vpop.f32.mrb[0].mxu0
  %661 = vmatprep.mubr.bf16.mxu0 0
  %662 = vmatmul.mubr.bf16.gmra.mrb[0].mxu0 %v388
  %v663 = vpop.f32.mrb[0].mxu0
  %v664 = vadd.f32 %v104, %v663
  %v665 = vpop.f32.mrb[0].mxu0
  %v666 = vpop.f32.mrb[0].mxu0
  %v667 = vadd.f32 %v104, %v666
  %v668 = vpop.f32.mrb[0].mxu0
  %669 = vmatprep.mubr.bf16.mxu0 0
  %670 = vmatmul.mubr.bf16.gmra.mrb[0].mxu0 %v391
  %v671 = vpop.f32.mrb[0].mxu0
  %v672 = vadd.f32 %v104, %v671
  %v673 = vpop.f32.mrb[0].mxu0
  %v674 = vpop.f32.mrb[0].mxu0
  %v675 = vadd.f32 %v104, %v674
  %v676 = vpop.f32.mrb[0].mxu0
  %677 = vmatprep.mubr.bf16.mxu0 0
  %678 = vmatmul.mubr.bf16.gmra.mrb[0].mxu0 %v394
  %v679 = vpop.f32.mrb[0].mxu0
  %v680 = vadd.f32 %v104, %v679
  %v681 = vpop.f32.mrb[0].mxu0
  %v682 = vpop.f32.mrb[0].mxu0
  %v683 = vadd.f32 %v104, %v682
  %v684 = vpop.f32.mrb[0].mxu0
  %685 = vmatprep.mubr.bf16.mxu0 0
  %686 = vmatmul.mubr.bf16.gmra.mrb[0].mxu0 %v397
  %v687 = vpop.f32.mrb[0].mxu0
  %v688 = vadd.f32 %v104, %v687
  %v689 = vpop.f32.mrb[0].mxu0
  %v690 = vpop.f32.mrb[0].mxu0
  %v691 = vadd.f32 %v104, %v690
  %v692 = vpop.f32.mrb[0].mxu0
  %693 = vmatprep.mubr.bf16.mxu0 0
  %694 = vmatmul.mubr.bf16.gmra.mrb[0].mxu0 %v400
  %v695 = vpop.f32.mrb[0].mxu0
  %v696 = vadd.f32 %v104, %v695
  %v697 = vpop.f32.mrb[0].mxu0
  %v698 = vpop.f32.mrb[0].mxu0
  %v699 = vadd.f32 %v104, %v698
  %v700 = vpop.f32.mrb[0].mxu0
  %701 = vmatprep.mubr.bf16.mxu0 0
  %702 = vmatmul.mubr.bf16.gmra.mrb[0].mxu0 %v403
  %v703 = vpop.f32.mrb[0].mxu0
  %v704 = vadd.f32 %v104, %v703
  %v705 = vpop.f32.mrb[0].mxu0
  %v706 = vpop.f32.mrb[0].mxu0
  %v707 = vadd.f32 %v104, %v706
  %v708 = vpop.f32.mrb[0].mxu0
  %709 = vmatprep.mubr.bf16.mxu0 0
  %710 = vmatmul.mubr.bf16.gmra.mrb[0].mxu0 %v406
  %v711 = vpop.f32.mrb[0].mxu0
  %v712 = vadd.f32 %v104, %v711
  %v713 = vpop.f32.mrb[0].mxu0
  %v714 = vpop.f32.mrb[0].mxu0
  %v715 = vadd.f32 %v104, %v714
  %v716 = vpop.f32.mrb[0].mxu0
  %717 = vmatprep.mubr.bf16.mxu0 0
  %718 = vmatmul.mubr.bf16.gmra.mrb[0].mxu0 %v409
  %v719 = vpop.f32.mrb[0].mxu0
  %v720 = vadd.f32 %v104, %v719
  %v721 = vpop.f32.mrb[0].mxu0
  %v722 = vpop.f32.mrb[0].mxu0
  %v723 = vadd.f32 %v104, %v722
  %v724 = vpop.f32.mrb[0].mxu0
  %725 = vmatprep.mubr.bf16.mxu0 0
  %726 = vmatmul.mubr.bf16.gmra.mrb[0].mxu0 %v412
  %v727 = vpop.f32.mrb[0].mxu0
  %v728 = vadd.f32 %v104, %v727
  %v729 = vpop.f32.mrb[0].mxu0
  %v730 = vpop.f32.mrb[0].mxu0
  %v731 = vadd.f32 %v104, %v730
  %v732 = vpop.f32.mrb[0].mxu0
  %733 = vmatprep.mubr.bf16.mxu0 0
  %734 = vmatmul.mubr.bf16.gmra.mrb[0].mxu0 %v415
  %v735 = vpop.f32.mrb[0].mxu0
  %v736 = vadd.f32 %v104, %v735
  %v737 = vpop.f32.mrb[0].mxu0
  %v738 = vpop.f32.mrb[0].mxu0
  %v739 = vadd.f32 %v104, %v738
  %v740 = vpop.f32.mrb[0].mxu0
  %741 = vmatprep.mubr.bf16.mxu0 0
  %742 = vmatmul.mubr.bf16.gmra.mrb[0].mxu0 %v418
  %v743 = vpop.f32.mrb[0].mxu0
  %v744 = vadd.f32 %v104, %v743
  %v745 = vpop.f32.mrb[0].mxu0
  %v746 = vpop.f32.mrb[0].mxu0
  %v747 = vadd.f32 %v104, %v746
  %v748 = vpop.f32.mrb[0].mxu0
  %749 = vmatprep.mubr.bf16.mxu0 0
  %750 = vmatmul.mubr.bf16.gmra.mrb[0].mxu0 %v421
  %v751 = vpop.f32.mrb[0].mxu0
  %v752 = vadd.f32 %v104, %v751
  %v753 = vpop.f32.mrb[0].mxu0
  %v754 = vpop.f32.mrb[0].mxu0
  %v755 = vadd.f32 %v104, %v754
  %v756 = vpop.f32.mrb[0].mxu0
  %757 = vmatprep.mubr.bf16.mxu0 0
  %758 = vmatmul.mubr.bf16.gmra.mrb[0].mxu0 %v424
  %v759 = vpop.f32.mrb[0].mxu0
  %v760 = vadd.f32 %v104, %v759
  %v761 = vpop.f32.mrb[0].mxu0
  %v762 = vpop.f32.mrb[0].mxu0
  %v763 = vadd.f32 %v104, %v762
  %v764 = vpop.f32.mrb[0].mxu0
  %765 = vmatprep.mubr.bf16.mxu0 0
  %766 = vmatmul.mubr.bf16.gmra.mrb[0].mxu0 %v427
  %v767 = vpop.f32.mrb[0].mxu0
  %v768 = vadd.f32 %v104, %v767
  %v769 = vpop.f32.mrb[0].mxu0
  %v770 = vpop.f32.mrb[0].mxu0
  %v771 = vadd.f32 %v104, %v770
  %v772 = vpop.f32.mrb[0].mxu0
  %773 = vmatprep.mubr.bf16.mxu0 0
  %774 = vmatmul.mubr.bf16.gmra.mrb[0].mxu0 %v430
  %v775 = vpop.f32.mrb[0].mxu0
  %v776 = vadd.f32 %v104, %v775
  %v777 = vpop.f32.mrb[0].mxu0
  %v778 = vpop.f32.mrb[0].mxu0
  %v779 = vadd.f32 %v104, %v778
  %v780 = vpop.f32.mrb[0].mxu0
  %781 = vmatprep.mubr.bf16.mxu0 0
  %782 = vmatmul.mubr.bf16.gmra.mrb[0].mxu0 %v433
  %v783 = vpop.f32.mrb[0].mxu0
  %v784 = vadd.f32 %v104, %v783
  %v785 = vpop.f32.mrb[0].mxu0
  %v786 = vpop.f32.mrb[0].mxu0
  %v787 = vadd.f32 %v104, %v786
  %v788 = vpop.f32.mrb[0].mxu0
  %789 = vmatprep.mubr.bf16.mxu0 0
  %790 = vmatmul.mubr.bf16.gmra.mrb[0].mxu0 %v436
  %v791 = vpop.f32.mrb[0].mxu0
  %v792 = vadd.f32 %v104, %v791
  %v793 = vpop.f32.mrb[0].mxu0
  %v794 = vpop.f32.mrb[0].mxu0
  %v795 = vadd.f32 %v104, %v794
  %v796 = vpop.f32.mrb[0].mxu0
  %797 = vdwg.mxu0
  %v798 = vmax.f32 %v480, 0.0
  %v799 = vmax.f32 %v483, 0.0
  %v800 = vmax.f32 %v488, 0.0
  %v801 = vmax.f32 %v491, 0.0
  %v802 = vmax.f32 %v496, 0.0
  %v803 = vmax.f32 %v499, 0.0
  %v804 = vmax.f32 %v504, 0.0
  %v805 = vmax.f32 %v507, 0.0
  %v806 = vmax.f32 %v512, 0.0
  %v807 = vmax.f32 %v515, 0.0
  %v808 = vmax.f32 %v520, 0.0
  %v809 = vmax.f32 %v523, 0.0
  %v810 = vmax.f32 %v528, 0.0
  %v811 = vmax.f32 %v531, 0.0
  %v812 = vmax.f32 %v536, 0.0
  %v813 = vmax.f32 %v539, 0.0
  %v814 = vmax.f32 %v544, 0.0
  %v815 = vmax.f32 %v547, 0.0
  %v816 = vmax.f32 %v552, 0.0
  %v817 = vmax.f32 %v555, 0.0
  %v818 = vmax.f32 %v560, 0.0
  %v819 = vmax.f32 %v563, 0.0
  %v820 = vmax.f32 %v568, 0.0
  %v821 = vmax.f32 %v571, 0.0
  %v822 = vmax.f32 %v576, 0.0
  %v823 = vmax.f32 %v579, 0.0
  %v824 = vmax.f32 %v584, 0.0
  %v825 = vmax.f32 %v587, 0.0
  %v826 = vmax.f32 %v592, 0.0
  %v827 = vmax.f32 %v595, 0.0
  %v828 = vmax.f32 %v600, 0.0
  %v829 = vmax.f32 %v603, 0.0
  %v830 = vmax.f32 %v608, 0.0
  %v831 = vmax.f32 %v611, 0.0
  %v832 = vmax.f32 %v616, 0.0
  %v833 = vmax.f32 %v619, 0.0
  %v834 = vmax.f32 %v624, 0.0
  %v835 = vmax.f32 %v627, 0.0
  %v836 = vmax.f32 %v632, 0.0
  %v837 = vmax.f32 %v635, 0.0
  %v838 = vmax.f32 %v640, 0.0
  %v839 = vmax.f32 %v643, 0.0
  %v840 = vmax.f32 %v648, 0.0
  %v841 = vmax.f32 %v651, 0.0
  %v842 = vmax.f32 %v656, 0.0
  %v843 = vmax.f32 %v659, 0.0
  %v844 = vmax.f32 %v664, 0.0
  %v845 = vmax.f32 %v667, 0.0
  %v846 = vmax.f32 %v672, 0.0
  %v847 = vmax.f32 %v675, 0.0
  %v848 = vmax.f32 %v680, 0.0
  %v849 = vmax.f32 %v683, 0.0
  %v850 = vmax.f32 %v688, 0.0
  %v851 = vmax.f32 %v691, 0.0
  %v852 = vmax.f32 %v696, 0.0
  %v853 = vmax.f32 %v699, 0.0
  %v854 = vmax.f32 %v704, 0.0
  %v855 = vmax.f32 %v707, 0.0
  %v856 = vmax.f32 %v712, 0.0
  %v857 = vmax.f32 %v715, 0.0
  %v858 = vmax.f32 %v720, 0.0
  %v859 = vmax.f32 %v723, 0.0
  %v860 = vmax.f32 %v728, 0.0
  %v861 = vmax.f32 %v731, 0.0
  %v862 = vmax.f32 %v736, 0.0
  %v863 = vmax.f32 %v739, 0.0
  %v864 = vmax.f32 %v744, 0.0
  %v865 = vmax.f32 %v747, 0.0
  %v866 = vmax.f32 %v752, 0.0
  %v867 = vmax.f32 %v755, 0.0
  %v868 = vmax.f32 %v760, 0.0
  %v869 = vmax.f32 %v763, 0.0
  %v870 = vmax.f32 %v768, 0.0
  %v871 = vmax.f32 %v771, 0.0
  %v872 = vmax.f32 %v776, 0.0
  %v873 = vmax.f32 %v779, 0.0
  %v874 = vmax.f32 %v784, 0.0
  %v875 = vmax.f32 %v787, 0.0
  %v876 = vmax.f32 %v792, 0.0
  %v877 = vmax.f32 %v795, 0.0
  %878 = vst [vmem:[%s3] sm:$0xff] %v798
  %879 = vst [vmem:[%s3 + $0x8] sm:$0xff] %v799
  %880 = vst [vmem:[%s3 + $0x10] sm:$0xff] %v800
  %881 = vst [vmem:[%s3 + $0x18] sm:$0xff] %v801
  %882 = vst [vmem:[%s3 + $0x20] sm:$0xff] %v802
  %883 = vst [vmem:[%s3 + $0x28] sm:$0xff] %v803
  %884 = vst [vmem:[%s3 + $0x30] sm:$0xff] %v804
  %885 = vst [vmem:[%s3 + $0x38] sm:$0xff] %v805
  %886 = vst [vmem:[%s3 + $0x40] sm:$0xff] %v806
  %887 = vst [vmem:[%s3 + $0x48] sm:$0xff] %v807
  %888 = vst [vmem:[%s3 + $0x50] sm:$0xff] %v808
  %889 = vst [vmem:[%s3 + $0x58] sm:$0xff] %v809
  %890 = vst [vmem:[%s3 + $0x60] sm:$0xff] %v810
  %891 = vst [vmem:[%s3 + $0x68] sm:$0xff] %v811
  %892 = vst [vmem:[%s3 + $0x70] sm:$0xff] %v812
  %893 = vst [vmem:[%s3 + $0x78] sm:$0xff] %v813
  %894 = vst [vmem:[%s3 + $0x80] sm:$0xff] %v814
  %895 = vst [vmem:[%s3 + $0x88] sm:$0xff] %v815
  %896 = vst [vmem:[%s3 + $0x90] sm:$0xff] %v816
  %897 = vst [vmem:[%s3 + $0x98] sm:$0xff] %v817
  %898 = vst [vmem:[%s3 + $0xa0] sm:$0xff] %v818
  %899 = vst [vmem:[%s3 + $0xa8] sm:$0xff] %v819
  %900 = vst [vmem:[%s3 + $0xb0] sm:$0xff] %v820
  %901 = vst [vmem:[%s3 + $0xb8] sm:$0xff] %v821
  %902 = vst [vmem:[%s3 + $0xc0] sm:$0xff] %v822
  %903 = vst [vmem:[%s3 + $0xc8] sm:$0xff] %v823
  %904 = vst [vmem:[%s3 + $0xd0] sm:$0xff] %v824
  %905 = vst [vmem:[%s3 + $0xd8] sm:$0xff] %v825
  %906 = vst [vmem:[%s3 + $0xe0] sm:$0xff] %v826
  %907 = vst [vmem:[%s3 + $0xe8] sm:$0xff] %v827
  %908 = vst [vmem:[%s3 + $0xf0] sm:$0xff] %v828
  %909 = vst [vmem:[%s3 + $0xf8] sm:$0xff] %v829
  %910 = vst [vmem:[%s3 + $0x100] sm:$0xff] %v830
  %911 = vst [vmem:[%s3 + $0x108] sm:$0xff] %v831
  %912 = vst [vmem:[%s3 + $0x110] sm:$0xff] %v832
  %913 = vst [vmem:[%s3 + $0x118] sm:$0xff] %v833
  %914 = vst [vmem:[%s3 + $0x120] sm:$0xff] %v834
  %915 = vst [vmem:[%s3 + $0x128] sm:$0xff] %v835
  %916 = vst [vmem:[%s3 + $0x130] sm:$0xff] %v836
  %917 = vst [vmem:[%s3 + $0x138] sm:$0xff] %v837
  %918 = vst [vmem:[%s3 + $0x140] sm:$0xff] %v838
  %919 = vst [vmem:[%s3 + $0x148] sm:$0xff] %v839
  %920 = vst [vmem:[%s3 + $0x150] sm:$0xff] %v840
  %921 = vst [vmem:[%s3 + $0x158] sm:$0xff] %v841
  %922 = vst [vmem:[%s3 + $0x160] sm:$0xff] %v842
  %923 = vst [vmem:[%s3 + $0x168] sm:$0xff] %v843
  %924 = vst [vmem:[%s3 + $0x170] sm:$0xff] %v844
  %925 = vst [vmem:[%s3 + $0x178] sm:$0xff] %v845
  %926 = vst [vmem:[%s3 + $0x180] sm:$0xff] %v846
  %927 = vst [vmem:[%s3 + $0x188] sm:$0xff] %v847
  %928 = vst [vmem:[%s3 + $0x190] sm:$0xff] %v848
  %929 = vst [vmem:[%s3 + $0x198] sm:$0xff] %v849
  %930 = vst [vmem:[%s3 + $0x1a0] sm:$0xff] %v850
  %931 = vst [vmem:[%s3 + $0x1a8] sm:$0xff] %v851
  %932 = vst [vmem:[%s3 + $0x1b0] sm:$0xff] %v852
  %933 = vst [vmem:[%s3 + $0x1b8] sm:$0xff] %v853
  %934 = vst [vmem:[%s3 + $0x1c0] sm:$0xff] %v854
  %935 = vst [vmem:[%s3 + $0x1c8] sm:$0xff] %v855
  %936 = vst [vmem:[%s3 + $0x1d0] sm:$0xff] %v856
  %937 = vst [vmem:[%s3 + $0x1d8] sm:$0xff] %v857
  %938 = vst [vmem:[%s3 + $0x1e0] sm:$0xff] %v858
  %939 = vst [vmem:[%s3 + $0x1e8] sm:$0xff] %v859
  %940 = vst [vmem:[%s3 + $0x1f0] sm:$0xff] %v860
  %941 = vst [vmem:[%s3 + $0x1f8] sm:$0xff] %v861
  %942 = vst [vmem:[%s3 + $0x200] sm:$0xff] %v862
  %943 = vst [vmem:[%s3 + $0x208] sm:$0xff] %v863
  %944 = vst [vmem:[%s3 + $0x210] sm:$0xff] %v864
  %945 = vst [vmem:[%s3 + $0x218] sm:$0xff] %v865
  %946 = vst [vmem:[%s3 + $0x220] sm:$0xff] %v866
  %947 = vst [vmem:[%s3 + $0x228] sm:$0xff] %v867
  %948 = vst [vmem:[%s3 + $0x230] sm:$0xff] %v868
  %949 = vst [vmem:[%s3 + $0x238] sm:$0xff] %v869
  %950 = vst [vmem:[%s3 + $0x240] sm:$0xff] %v870
  %951 = vst [vmem:[%s3 + $0x248] sm:$0xff] %v871
  %952 = vst [vmem:[%s3 + $0x250] sm:$0xff] %v872
  %953 = vst [vmem:[%s3 + $0x258] sm:$0xff] %v873
  %954 = vst [vmem:[%s3 + $0x260] sm:$0xff] %v874
  %955 = vst [vmem:[%s3 + $0x268] sm:$0xff] %v875
  %956 = vst [vmem:[%s3 + $0x270] sm:$0xff] %v876
  %957 = vst [vmem:[%s3 + $0x278] sm:$0xff] %v877
  // Predicated region
  $region14: #{mobilevit_track_forward.9} parent=0 // pred_check
    _
  $region15: #{mobilevit_track_forward.9} parent=0 // pred_check_branch
    %959 = sbr.rel (0) target = $region17
  $region16: #{mobilevit_track_forward.9} parent=0 // pred_region
    _
  $region17: #{mobilevit_track_forward.9} parent=0 // pred_fallthru
    _
  // Predicated region
  $region18: #{mobilevit_track_forward.9} parent=0 // pred_check
    _
  $region19: #{mobilevit_track_forward.9} parent=0 // pred_check_branch
    %961 = sbr.rel (0) target = $region21
  $region20: #{mobilevit_track_forward.9} parent=0 // pred_region
    _
  $region21: #{mobilevit_track_forward.9} parent=0 // pred_fallthru
    _

// kernel: mobilevit_track_forward.10
$region0: #{mobilevit_track_forward.10}
  #allocation0 [shape = 'u32[]', space=smem, size = 0x4, offset = 0x4, fixed_abs, tag = 'smem constant byte address 0x4 - core index']
  #allocation1 [shape = 'u32[144,128]{1,0:T(1,128)}', space=vmem, size = 0x12000, scoped, tag = 'internal scratch']
  %s0 = inlined_call_operand.vmem [shape: bf16[160,72], index: 0, kind: input, shape index: {}]
  %s1 = inlined_call_operand.vmem [shape: bf16[72,128], index: 1, kind: input, shape index: {}]
  %s2 = inlined_call_operand.vmem [shape: f32[1,128], index: 2, kind: input, shape index: {}]
  %s3 = inlined_call_operand.vmem [shape: f32[160,128], index: 3, kind: output, shape index: {}]
  %s4 = sld [smem:[#allocation0]]
  $region22: #{mobilevit_track_forward.10} parent=0
    _
  %s6 = ssub.s32 1, %s4
  %s7 = scalar_select 0, %s6, %s4
  // Predicated region
  $region2: #{mobilevit_track_forward.10} parent=0 // pred_check
    _
  $region3: #{mobilevit_track_forward.10} parent=0 // pred_check_branch
    %9 = sbr.rel (0) target = $region5
  $region4: #{mobilevit_track_forward.10} parent=0 // pred_region
    _
  $region5: #{mobilevit_track_forward.10} parent=0 // pred_fallthru
    _
  // Predicated region
  $region6: #{mobilevit_track_forward.10} parent=0 // pred_check
    _
  $region7: #{mobilevit_track_forward.10} parent=0 // pred_check_branch
    %11 = sbr.rel (0) target = $region9
  $region8: #{mobilevit_track_forward.10} parent=0 // pred_region
    _
  $region9: #{mobilevit_track_forward.10} parent=0 // pred_fallthru
    _
  // Predicated region
  $region10: #{mobilevit_track_forward.10} parent=0 // pred_check
    _
  $region11: #{mobilevit_track_forward.10} parent=0 // pred_check_branch
    %13 = sbr.rel (0) target = $region13
  $region12: #{mobilevit_track_forward.10} parent=0 // pred_region
    _
  $region13: #{mobilevit_track_forward.10} parent=0 // pred_fallthru
    _
  %v15 = vld [vmem:[%s0] sm:$0xf]
  %v16 = vld [vmem:[%s0 + $0x4] sm:$0xf]
  %v17 = vld [vmem:[%s0 + $0x8] sm:$0xf]
  %v18 = vld [vmem:[%s0 + $0xc] sm:$0xf]
  %v19 = vld [vmem:[%s0 + $0x10] sm:$0xf]
  %v20 = vld [vmem:[%s0 + $0x14] sm:$0xf]
  %v21 = vld [vmem:[%s0 + $0x18] sm:$0xf]
  %v22 = vld [vmem:[%s0 + $0x1c] sm:$0xf]
  %v23 = vld [vmem:[%s0 + $0x20] sm:$0xf]
  %v24 = vld [vmem:[%s0 + $0x24] sm:$0xf]
  %v25 = vld [vmem:[%s0 + $0x28] sm:$0xf]
  %v26 = vld [vmem:[%s0 + $0x2c] sm:$0xf]
  %v27 = vld [vmem:[%s0 + $0x30] sm:$0xf]
  %v28 = vld [vmem:[%s0 + $0x34] sm:$0xf]
  %v29 = vld [vmem:[%s0 + $0x38] sm:$0xf]
  %v30 = vld [vmem:[%s0 + $0x3c] sm:$0xf]
  %v31 = vld [vmem:[%s0 + $0x40] sm:$0xf]
  %v32 = vld [vmem:[%s0 + $0x44] sm:$0xf]
  %v33 = vld [vmem:[%s0 + $0x48] sm:$0xf]
  %v34 = vld [vmem:[%s0 + $0x4c] sm:$0xf]
  %v35 = vld [vmem:[%s1] sm:$0xf]
  %v36 = vld [vmem:[%s1 + $0x4] sm:$0xf]
  %v37 = vld [vmem:[%s1 + $0x8] sm:$0xf]
  %v38 = vld [vmem:[%s1 + $0xc] sm:$0xf]
  %v39 = vld [vmem:[%s1 + $0x10] sm:$0xf]
  %v40 = vld [vmem:[%s1 + $0x14] sm:$0xf]
  %v41 = vld [vmem:[%s1 + $0x18] sm:$0xf]
  %v42 = vld [vmem:[%s1 + $0x1c] sm:$0xf]
  %v43 = vld [vmem:[%s1 + $0x20] sm:$0xf]
  %v44 = vld [vmem:[%s2] sm:$0x1]
  %v46 = vlaneseq
  %v47 = vshrl.u32 %v46, 7
  %v48 = vsub.s32 0, %v47
  %v49 = vrot.slane %v44, %v48
  %v71 = vunpack.c.l.b16 %v15
  %v72 = vunpack.c.l.b16 %v16
  %v73 = vunpack.c.l.b16 %v17
  %v74 = vunpack.c.l.b16 %v18
  %v75 = vunpack.c.l.b16 %v19
  %v76 = vunpack.c.l.b16 %v20
  %v77 = vunpack.c.l.b16 %v21
  %v78 = vunpack.c.l.b16 %v22
  %v79 = vunpack.c.l.b16 %v23
  %v80 = vunpack.c.l.b16 %v24
  %v81 = vunpack.c.l.b16 %v25
  %v82 = vunpack.c.l.b16 %v26
  %v83 = vunpack.c.l.b16 %v27
  %v84 = vunpack.c.l.b16 %v28
  %v85 = vunpack.c.l.b16 %v29
  %v86 = vunpack.c.l.b16 %v30
  %v87 = vunpack.c.l.b16 %v31
  %v88 = vunpack.c.l.b16 %v32
  %v89 = vunpack.c.l.b16 %v33
  %v90 = vunpack.c.l.b16 %v34
  %v91 = vpack.c.b16 %v72, %v71
  %v92 = vpack.c.b16 %v74, %v73
  %v93 = vpack.c.b16 %v76, %v75
  %v94 = vpack.c.b16 %v78, %v77
  %v95 = vpack.c.b16 %v80, %v79
  %v96 = vpack.c.b16 %v82, %v81
  %v97 = vpack.c.b16 %v84, %v83
  %v98 = vpack.c.b16 %v86, %v85
  %v99 = vpack.c.b16 %v88, %v87
  %v100 = vpack.c.b16 %v90, %v89
  %v110 = vunpack.c.l.b16 %v35
  %v111 = vunpack.c.l.b16 %v36
  %v112 = vunpack.c.l.b16 %v37
  %v113 = vunpack.c.l.b16 %v38
  %v114 = vunpack.c.l.b16 %v39
  %v115 = vunpack.c.l.b16 %v40
  %v116 = vunpack.c.l.b16 %v41
  %v117 = vunpack.c.l.b16 %v42
  %v118 = vunpack.c.l.b16 %v43
  %v119 = vpack.c.b16 %v111, %v110
  %v120 = vpack.c.b16 %v113, %v112
  %v121 = vpack.c.b16 %v115, %v114
  %v122 = vpack.c.b16 %v117, %v116
  %v123 = vpack.c.b16 %v118, %v118
  %vm128 = vcmask 588800
  %v130 = vsel %vm128, %v91, 0
  %v133 = vsel %vm128, %v92, 0
  %v136 = vsel %vm128, %v93, 0
  %v139 = vsel %vm128, %v94, 0
  %v142 = vsel %vm128, %v95, 0
  %v145 = vsel %vm128, %v96, 0
  %v148 = vsel %vm128, %v97, 0
  %v151 = vsel %vm128, %v98, 0
  %v154 = vsel %vm128, %v99, 0
  %v157 = vsel %vm128, %v100, 0
  %vm159 = vcmask 1043456
  %v161 = vsel %vm159, %v123, 0
  %163 = vmatprep.subr.bf16.mxu0 0
  %164 = vmatpush1.bf16.msra.mxu0 %v119
  %165 = vmatprep.subr.bf16.mxu0 0
  %166 = vmatpush1.bf16.msra.mxu0 %v120
  %167 = vmatprep.subr.bf16.mxu0 0
  %168 = vmatpush1.bf16.msra.mxu0 %v121
  %169 = vmatprep.subr.bf16.mxu0 0
  %170 = vmatpush1.bf16.msra.mxu0 %v122
  %171 = vmatprep.subr.bf16.mxu0 0
  %172 = vmatpush1.bf16.msra.mxu0 %v161
  %173 = vmatprep.subr.bf16.mxu0 0
  %174 = vmatpush1.bf16.msra.mxu0 0
  %175 = vmatprep.subr.bf16.mxu0 0
  %176 = vmatpush1.bf16.msra.mxu0 0
  %177 = vmatprep.subr.bf16.mxu0 0
  %178 = vmatpush1.bf16.msra.mxu0 0
  %179 = vmatprep.subr.bf16.mxu0 0
  %180 = vmatpush1.bf16.msra.mxu0 0
  %181 = vmatprep.subr.bf16.mxu0 0
  %182 = vmatpush1.bf16.msra.mxu0 0
  %183 = vmatprep.subr.bf16.mxu0 0
  %184 = vmatpush1.bf16.msra.mxu0 0
  %185 = vmatprep.subr.bf16.mxu0 0
  %186 = vmatpush1.bf16.msra.mxu0 0
  %187 = vmatprep.subr.bf16.mxu0 0
  %188 = vmatpush1.bf16.msra.mxu0 0
  %189 = vmatprep.subr.bf16.mxu0 0
  %190 = vmatpush1.bf16.msra.mxu0 0
  %191 = vmatprep.subr.bf16.mxu0 0
  %192 = vmatpush1.bf16.msra.mxu0 0
  %193 = vmatprep.subr.bf16.mxu0 0
  %194 = vmatpush1.bf16.msra.mxu0 0
  %195 = vmatprep.mubr.bf16.mxu0 0
  %196 = vmatmul.mubr.bf16.gmra.mrb[0].mxu0 %v130
  %v197 = vpop.f32.mrb[0].mxu0
  %v198 = vadd.f32 %v49, %v197
  %v199 = vpop.f32.mrb[0].mxu0
  %v200 = vpop.f32.mrb[0].mxu0
  %v201 = vadd.f32 %v49, %v200
  %v202 = vpop.f32.mrb[0].mxu0
  %203 = vmatprep.mubr.bf16.mxu0 0
  %204 = vmatmul.mubr.bf16.gmra.mrb[0].mxu0 %v133
  %v205 = vpop.f32.mrb[0].mxu0
  %v206 = vadd.f32 %v49, %v205
  %v207 = vpop.f32.mrb[0].mxu0
  %v208 = vpop.f32.mrb[0].mxu0
  %v209 = vadd.f32 %v49, %v208
  %v210 = vpop.f32.mrb[0].mxu0
  %211 = vmatprep.mubr.bf16.mxu0 0
  %212 = vmatmul.mubr.bf16.gmra.mrb[0].mxu0 %v136
  %v213 = vpop.f32.mrb[0].mxu0
  %v214 = vadd.f32 %v49, %v213
  %v215 = vpop.f32.mrb[0].mxu0
  %v216 = vpop.f32.mrb[0].mxu0
  %v217 = vadd.f32 %v49, %v216
  %v218 = vpop.f32.mrb[0].mxu0
  %219 = vmatprep.mubr.bf16.mxu0 0
  %220 = vmatmul.mubr.bf16.gmra.mrb[0].mxu0 %v139
  %v221 = vpop.f32.mrb[0].mxu0
  %v222 = vadd.f32 %v49, %v221
  %v223 = vpop.f32.mrb[0].mxu0
  %v224 = vpop.f32.mrb[0].mxu0
  %v225 = vadd.f32 %v49, %v224
  %v226 = vpop.f32.mrb[0].mxu0
  %227 = vmatprep.mubr.bf16.mxu0 0
  %228 = vmatmul.mubr.bf16.gmra.mrb[0].mxu0 %v142
  %v229 = vpop.f32.mrb[0].mxu0
  %v230 = vadd.f32 %v49, %v229
  %v231 = vpop.f32.mrb[0].mxu0
  %v232 = vpop.f32.mrb[0].mxu0
  %v233 = vadd.f32 %v49, %v232
  %v234 = vpop.f32.mrb[0].mxu0
  %235 = vmatprep.mubr.bf16.mxu0 0
  %236 = vmatmul.mubr.bf16.gmra.mrb[0].mxu0 %v145
  %v237 = vpop.f32.mrb[0].mxu0
  %v238 = vadd.f32 %v49, %v237
  %v239 = vpop.f32.mrb[0].mxu0
  %v240 = vpop.f32.mrb[0].mxu0
  %v241 = vadd.f32 %v49, %v240
  %v242 = vpop.f32.mrb[0].mxu0
  %243 = vmatprep.mubr.bf16.mxu0 0
  %244 = vmatmul.mubr.bf16.gmra.mrb[0].mxu0 %v148
  %v245 = vpop.f32.mrb[0].mxu0
  %v246 = vadd.f32 %v49, %v245
  %v247 = vpop.f32.mrb[0].mxu0
  %v248 = vpop.f32.mrb[0].mxu0
  %v249 = vadd.f32 %v49, %v248
  %v250 = vpop.f32.mrb[0].mxu0
  %251 = vmatprep.mubr.bf16.mxu0 0
  %252 = vmatmul.mubr.bf16.gmra.mrb[0].mxu0 %v151
  %v253 = vpop.f32.mrb[0].mxu0
  %v254 = vadd.f32 %v49, %v253
  %v255 = vpop.f32.mrb[0].mxu0
  %v256 = vpop.f32.mrb[0].mxu0
  %v257 = vadd.f32 %v49, %v256
  %v258 = vpop.f32.mrb[0].mxu0
  %259 = vmatprep.mubr.bf16.mxu0 0
  %260 = vmatmul.mubr.bf16.gmra.mrb[0].mxu0 %v154
  %v261 = vpop.f32.mrb[0].mxu0
  %v262 = vadd.f32 %v49, %v261
  %v263 = vpop.f32.mrb[0].mxu0
  %v264 = vpop.f32.mrb[0].mxu0
  %v265 = vadd.f32 %v49, %v264
  %v266 = vpop.f32.mrb[0].mxu0
  %267 = vmatprep.mubr.bf16.mxu0 0
  %268 = vmatmul.mubr.bf16.gmra.mrb[0].mxu0 %v157
  %v269 = vpop.f32.mrb[0].mxu0
  %v270 = vadd.f32 %v49, %v269
  %v271 = vpop.f32.mrb[0].mxu0
  %v272 = vpop.f32.mrb[0].mxu0
  %v273 = vadd.f32 %v49, %v272
  %v274 = vpop.f32.mrb[0].mxu0
  %275 = vdwg.mxu0
  %v276 = vmax.f32 %v198, 0.0
  %v277 = vmax.f32 %v201, 0.0
  %v278 = vmax.f32 %v206, 0.0
  %v279 = vmax.f32 %v209, 0.0
  %v280 = vmax.f32 %v214, 0.0
  %v281 = vmax.f32 %v217, 0.0
  %v282 = vmax.f32 %v222, 0.0
  %v283 = vmax.f32 %v225, 0.0
  %v284 = vmax.f32 %v230, 0.0
  %v285 = vmax.f32 %v233, 0.0
  %v286 = vmax.f32 %v238, 0.0
  %v287 = vmax.f32 %v241, 0.0
  %v288 = vmax.f32 %v246, 0.0
  %v289 = vmax.f32 %v249, 0.0
  %v290 = vmax.f32 %v254, 0.0
  %v291 = vmax.f32 %v257, 0.0
  %v292 = vmax.f32 %v262, 0.0
  %v293 = vmax.f32 %v265, 0.0
  %v294 = vmax.f32 %v270, 0.0
  %v295 = vmax.f32 %v273, 0.0
  %296 = vst [vmem:[%s3] sm:$0xff] %v276
  %297 = vst [vmem:[%s3 + $0x8] sm:$0xff] %v277
  %298 = vst [vmem:[%s3 + $0x10] sm:$0xff] %v278
  %299 = vst [vmem:[%s3 + $0x18] sm:$0xff] %v279
  %300 = vst [vmem:[%s3 + $0x20] sm:$0xff] %v280
  %301 = vst [vmem:[%s3 + $0x28] sm:$0xff] %v281
  %302 = vst [vmem:[%s3 + $0x30] sm:$0xff] %v282
  %303 = vst [vmem:[%s3 + $0x38] sm:$0xff] %v283
  %304 = vst [vmem:[%s3 + $0x40] sm:$0xff] %v284
  %305 = vst [vmem:[%s3 + $0x48] sm:$0xff] %v285
  %306 = vst [vmem:[%s3 + $0x50] sm:$0xff] %v286
  %307 = vst [vmem:[%s3 + $0x58] sm:$0xff] %v287
  %308 = vst [vmem:[%s3 + $0x60] sm:$0xff] %v288
  %309 = vst [vmem:[%s3 + $0x68] sm:$0xff] %v289
  %310 = vst [vmem:[%s3 + $0x70] sm:$0xff] %v290
  %311 = vst [vmem:[%s3 + $0x78] sm:$0xff] %v291
  %312 = vst [vmem:[%s3 + $0x80] sm:$0xff] %v292
  %313 = vst [vmem:[%s3 + $0x88] sm:$0xff] %v293
  %314 = vst [vmem:[%s3 + $0x90] sm:$0xff] %v294
  %315 = vst [vmem:[%s3 + $0x98] sm:$0xff] %v295
  // Predicated region
  $region14: #{mobilevit_track_forward.10} parent=0 // pred_check
    _
  $region15: #{mobilevit_track_forward.10} parent=0 // pred_check_branch
    %317 = sbr.rel (0) target = $region17
  $region16: #{mobilevit_track_forward.10} parent=0 // pred_region
    _
  $region17: #{mobilevit_track_forward.10} parent=0 // pred_fallthru
    _
  // Predicated region
  $region18: #{mobilevit_track_forward.10} parent=0 // pred_check
    _
  $region19: #{mobilevit_track_forward.10} parent=0 // pred_check_branch
    %319 = sbr.rel (0) target = $region21
  $region20: #{mobilevit_track_forward.10} parent=0 // pred_region
    _
  $region21: #{mobilevit_track_forward.10} parent=0 // pred_fallthru
    _

// kernel: mobilevit_track_forward.12
$region0: #{mobilevit_track_forward.12}
  #allocation0 [shape = 'u32[]', space=smem, size = 0x4, offset = 0x4, fixed_abs, tag = 'smem constant byte address 0x4 - core index']
  #allocation1 [shape = 'u32[144,128]{1,0:T(1,128)}', space=vmem, size = 0x12000, scoped, tag = 'internal scratch']
  %s0 = inlined_call_operand.vmem [shape: f32[2,16,16], index: 0, kind: input, shape index: {}]
  %s1 = inlined_call_operand.vmem [shape: bf16[3,16,16], index: 1, kind: input, shape index: {}]
  %s2 = inlined_call_operand.vmem [shape: f32[3,1,16], index: 2, kind: input, shape index: {}]
  %s3 = inlined_call_operand.vmem [shape: bf16[16,16], index: 3, kind: input, shape index: {}]
  %s4 = inlined_call_operand.vmem [shape: f32[1,16], index: 4, kind: input, shape index: {}]
  %s5 = inlined_call_operand.vmem [shape: f32[2,16,16], index: 5, kind: output, shape index: {}]
  %s6 = sld [smem:[#allocation0]]
  $region30: #{mobilevit_track_forward.12} parent=0
    _
  %s8 = ssub.s32 1, %s6
  %s9 = scalar_select 0, %s8, %s6
  // Predicated region
  $region2: #{mobilevit_track_forward.12} parent=0 // pred_check
    _
  $region3: #{mobilevit_track_forward.12} parent=0 // pred_check_branch
    %11 = sbr.rel (0) target = $region5
  $region4: #{mobilevit_track_forward.12} parent=0 // pred_region
    _
  $region5: #{mobilevit_track_forward.12} parent=0 // pred_fallthru
    _
  // Predicated region
  $region6: #{mobilevit_track_forward.12} parent=0 // pred_check
    _
  $region7: #{mobilevit_track_forward.12} parent=0 // pred_check_branch
    %13 = sbr.rel (0) target = $region9
  $region8: #{mobilevit_track_forward.12} parent=0 // pred_region
    _
  $region9: #{mobilevit_track_forward.12} parent=0 // pred_fallthru
    _
  // Predicated region
  $region10: #{mobilevit_track_forward.12} parent=0 // pred_check
    _
  $region11: #{mobilevit_track_forward.12} parent=0 // pred_check_branch
    %15 = sbr.rel (0) target = $region13
  $region12: #{mobilevit_track_forward.12} parent=0 // pred_region
    _
  $region13: #{mobilevit_track_forward.12} parent=0 // pred_fallthru
    _
  // Predicated region
  $region14: #{mobilevit_track_forward.12} parent=0 // pred_check
    _
  $region15: #{mobilevit_track_forward.12} parent=0 // pred_check_branch
    %17 = sbr.rel (0) target = $region17
  $region16: #{mobilevit_track_forward.12} parent=0 // pred_region
    _
  $region17: #{mobilevit_track_forward.12} parent=0 // pred_fallthru
    _
  // Predicated region
  $region18: #{mobilevit_track_forward.12} parent=0 // pred_check
    _
  $region19: #{mobilevit_track_forward.12} parent=0 // pred_check_branch
    %19 = sbr.rel (0) target = $region21
  $region20: #{mobilevit_track_forward.12} parent=0 // pred_region
    _
  $region21: #{mobilevit_track_forward.12} parent=0 // pred_fallthru
    _
  %v21 = vld [vmem:[%s0] sm:$0xff]
  %v22 = vld [vmem:[%s0 + $0x8] sm:$0xff]
  %v23 = vld [vmem:[%s0 + $0x10] sm:$0xff]
  %v24 = vld [vmem:[%s0 + $0x18] sm:$0xff]
  %v25 = vpack.c.bf16 %v22, %v21
  %v26 = vpack.c.bf16 %v24, %v23
  %v27 = vld [vmem:[%s1] sm:$0xf]
  %v28 = vld [vmem:[%s1 + $0x4] sm:$0xf]
  %v29 = vld [vmem:[%s2] sm:$0x1]
  %v31 = vlaneseq
  %v32 = vshrl.u32 %v31, 7
  %v33 = vsub.s32 0, %v32
  %v34 = vrot.slane %v29, %v33
  %v38 = vunpack.c.l.b16 %v27
  %v39 = vunpack.c.l.b16 %v28
  %v40 = vpack.c.b16 %v39, %v38
  %vm42 = vcmask 130048
  %v44 = vsel %vm42, %v25, 0
  %v47 = vsel %vm42, %v26, 0
  %49 = vmatprep.subr.bf16.mxu0 0
  %50 = vmatpush1.bf16.msra.mxu0 %v40
  %51 = vmatprep.subr.bf16.mxu0 0
  %52 = vmatpush1.bf16.msra.mxu0 0
  %53 = vmatprep.subr.bf16.mxu0 0
  %54 = vmatpush1.bf16.msra.mxu0 0
  %55 = vmatprep.subr.bf16.mxu0 0
  %56 = vmatpush1.bf16.msra.mxu0 0
  %57 = vmatprep.subr.bf16.mxu0 0
  %58 = vmatpush1.bf16.msra.mxu0 0
  %59 = vmatprep.subr.bf16.mxu0 0
  %60 = vmatpush1.bf16.msra.mxu0 0
  %61 = vmatprep.subr.bf16.mxu0 0
  %62 = vmatpush1.bf16.msra.mxu0 0
  %63 = vmatprep.subr.bf16.mxu0 0
  %64 = vmatpush1.bf16.msra.mxu0 0
  %65 = vmatprep.subr.bf16.mxu0 0
  %66 = vmatpush1.bf16.msra.mxu0 0
  %67 = vmatprep.subr.bf16.mxu0 0
  %68 = vmatpush1.bf16.msra.mxu0 0
  %69 = vmatprep.subr.bf16.mxu0 0
  %70 = vmatpush1.bf16.msra.mxu0 0
  %71 = vmatprep.subr.bf16.mxu0 0
  %72 = vmatpush1.bf16.msra.mxu0 0
  %73 = vmatprep.subr.bf16.mxu0 0
  %74 = vmatpush1.bf16.msra.mxu0 0
  %75 = vmatprep.subr.bf16.mxu0 0
  %76 = vmatpush1.bf16.msra.mxu0 0
  %77 = vmatprep.subr.bf16.mxu0 0
  %78 = vmatpush1.bf16.msra.mxu0 0
  %79 = vmatprep.subr.bf16.mxu0 0
  %80 = vmatpush1.bf16.msra.mxu0 0
  %81 = vmatprep.mubr.bf16.mxu0 0
  %82 = vmatmul.mubr.bf16.gmra.mrb[0].mxu0 %v44
  %v83 = vpop.f32.mrb[0].mxu0
  %v84 = vadd.f32 %v34, %v83
  %v85 = vpop.f32.mrb[0].mxu0
  %v86 = vpop.f32.mrb[0].mxu0
  %v87 = vadd.f32 %v34, %v86
  %v88 = vpop.f32.mrb[0].mxu0
  %89 = vmatprep.mubr.bf16.mxu0 0
  %90 = vmatmul.mubr.bf16.gmra.mrb[0].mxu0 %v47
  %v91 = vpop.f32.mrb[0].mxu0
  %v92 = vadd.f32 %v34, %v91
  %v93 = vpop.f32.mrb[0].mxu0
  %v94 = vpop.f32.mrb[0].mxu0
  %v95 = vadd.f32 %v34, %v94
  %v96 = vpop.f32.mrb[0].mxu0
  %97 = vdwg.mxu0
  %s98 = scalar_lea.vmem %s1, 8
  %v99 = vld [vmem:[%s98] sm:$0xf]
  %v100 = vld [vmem:[%s98 + $0x4] sm:$0xf]
  %s101 = scalar_lea.vmem %s2, 1
  %v102 = vld [vmem:[%s101] sm:$0x1]
  %v104 = vlaneseq
  %v105 = vshrl.u32 %v104, 7
  %v106 = vsub.s32 0, %v105
  %v107 = vrot.slane %v102, %v106
  %v111 = vunpack.c.l.b16 %v99
  %v112 = vunpack.c.l.b16 %v100
  %v113 = vpack.c.b16 %v112, %v111
  %115 = vmatprep.subr.bf16.mxu0 0
  %116 = vmatpush1.bf16.msra.mxu0 %v113
  %117 = vmatprep.subr.bf16.mxu0 0
  %118 = vmatpush1.bf16.msra.mxu0 0
  %119 = vmatprep.subr.bf16.mxu0 0
  %120 = vmatpush1.bf16.msra.mxu0 0
  %121 = vmatprep.subr.bf16.mxu0 0
  %122 = vmatpush1.bf16.msra.mxu0 0
  %123 = vmatprep.subr.bf16.mxu0 0
  %124 = vmatpush1.bf16.msra.mxu0 0
  %125 = vmatprep.subr.bf16.mxu0 0
  %126 = vmatpush1.bf16.msra.mxu0 0
  %127 = vmatprep.subr.bf16.mxu0 0
  %128 = vmatpush1.bf16.msra.mxu0 0
  %129 = vmatprep.subr.bf16.mxu0 0
  %130 = vmatpush1.bf16.msra.mxu0 0
  %131 = vmatprep.subr.bf16.mxu0 0
  %132 = vmatpush1.bf16.msra.mxu0 0
  %133 = vmatprep.subr.bf16.mxu0 0
  %134 = vmatpush1.bf16.msra.mxu0 0
  %135 = vmatprep.subr.bf16.mxu0 0
  %136 = vmatpush1.bf16.msra.mxu0 0
  %137 = vmatprep.subr.bf16.mxu0 0
  %138 = vmatpush1.bf16.msra.mxu0 0
  %139 = vmatprep.subr.bf16.mxu0 0
  %140 = vmatpush1.bf16.msra.mxu0 0
  %141 = vmatprep.subr.bf16.mxu0 0
  %142 = vmatpush1.bf16.msra.mxu0 0
  %143 = vmatprep.subr.bf16.mxu0 0
  %144 = vmatpush1.bf16.msra.mxu0 0
  %145 = vmatprep.subr.bf16.mxu0 0
  %146 = vmatpush1.bf16.msra.mxu0 0
  %147 = vmatprep.mubr.bf16.mxu0 0
  %148 = vmatmul.mubr.bf16.gmra.mrb[0].mxu0 %v44
  %v149 = vpop.f32.mrb[0].mxu0
  %v150 = vadd.f32 %v107, %v149
  %v151 = vpop.f32.mrb[0].mxu0
  %v152 = vpop.f32.mrb[0].mxu0
  %v153 = vadd.f32 %v107, %v152
  %v154 = vpop.f32.mrb[0].mxu0
  %155 = vmatprep.mubr.bf16.mxu0 0
  %156 = vmatmul.mubr.bf16.gmra.mrb[0].mxu0 %v47
  %v157 = vpop.f32.mrb[0].mxu0
  %v158 = vadd.f32 %v107, %v157
  %v159 = vpop.f32.mrb[0].mxu0
  %v160 = vpop.f32.mrb[0].mxu0
  %v161 = vadd.f32 %v107, %v160
  %v162 = vpop.f32.mrb[0].mxu0
  %163 = vdwg.mxu0
  %s164 = scalar_lea.vmem %s1, 16
  %v165 = vld [vmem:[%s164] sm:$0xf]
  %v166 = vld [vmem:[%s164 + $0x4] sm:$0xf]
  %s167 = scalar_lea.vmem %s2, 2
  %v168 = vld [vmem:[%s167] sm:$0x1]
  %v170 = vlaneseq
  %v171 = vshrl.u32 %v170, 7
  %v172 = vsub.s32 0, %v171
  %v173 = vrot.slane %v168, %v172
  %v177 = vunpack.c.l.b16 %v165
  %v178 = vunpack.c.l.b16 %v166
  %v179 = vpack.c.b16 %v178, %v177
  %181 = vmatprep.subr.bf16.mxu0 0
  %182 = vmatpush1.bf16.msra.mxu0 %v179
  %183 = vmatprep.subr.bf16.mxu0 0
  %184 = vmatpush1.bf16.msra.mxu0 0
  %185 = vmatprep.subr.bf16.mxu0 0
  %186 = vmatpush1.bf16.msra.mxu0 0
  %187 = vmatprep.subr.bf16.mxu0 0
  %188 = vmatpush1.bf16.msra.mxu0 0
  %189 = vmatprep.subr.bf16.mxu0 0
  %190 = vmatpush1.bf16.msra.mxu0 0
  %191 = vmatprep.subr.bf16.mxu0 0
  %192 = vmatpush1.bf16.msra.mxu0 0
  %193 = vmatprep.subr.bf16.mxu0 0
  %194 = vmatpush1.bf16.msra.mxu0 0
  %195 = vmatprep.subr.bf16.mxu0 0
  %196 = vmatpush1.bf16.msra.mxu0 0
  %197 = vmatprep.subr.bf16.mxu0 0
  %198 = vmatpush1.bf16.msra.mxu0 0
  %199 = vmatprep.subr.bf16.mxu0 0
  %200 = vmatpush1.bf16.msra.mxu0 0
  %201 = vmatprep.subr.bf16.mxu0 0
  %202 = vmatpush1.bf16.msra.mxu0 0
  %203 = vmatprep.subr.bf16.mxu0 0
  %204 = vmatpush1.bf16.msra.mxu0 0
  %205 = vmatprep.subr.bf16.mxu0 0
  %206 = vmatpush1.bf16.msra.mxu0 0
  %207 = vmatprep.subr.bf16.mxu0 0
  %208 = vmatpush1.bf16.msra.mxu0 0
  %209 = vmatprep.subr.bf16.mxu0 0
  %210 = vmatpush1.bf16.msra.mxu0 0
  %211 = vmatprep.subr.bf16.mxu0 0
  %212 = vmatpush1.bf16.msra.mxu0 0
  %213 = vmatprep.mubr.bf16.mxu0 0
  %214 = vmatmul.mubr.bf16.gmra.mrb[0].mxu0 %v44
  %v215 = vpop.f32.mrb[0].mxu0
  %v216 = vadd.f32 %v173, %v215
  %v217 = vpop.f32.mrb[0].mxu0
  %v218 = vpop.f32.mrb[0].mxu0
  %v219 = vadd.f32 %v173, %v218
  %v220 = vpop.f32.mrb[0].mxu0
  %221 = vmatprep.mubr.bf16.mxu0 0
  %222 = vmatmul.mubr.bf16.gmra.mrb[0].mxu0 %v47
  %v223 = vpop.f32.mrb[0].mxu0
  %v224 = vadd.f32 %v173, %v223
  %v225 = vpop.f32.mrb[0].mxu0
  %v226 = vpop.f32.mrb[0].mxu0
  %v227 = vadd.f32 %v173, %v226
  %v228 = vpop.f32.mrb[0].mxu0
  %229 = vdwg.mxu0
  %v230 = vpack.c.bf16 %v87, %v84
  %v231 = vpack.c.bf16 %v95, %v92
  %v232 = vpack.c.bf16 %v153, %v150
  %v233 = vpack.c.bf16 %v161, %v158
  %v235 = vsel %vm42, %v230, 0
  %v238 = vsel %vm42, %v232, 0
  %240 = vmatprep.subr.bf16.mxu0 0
  %241 = vmatpush1.bf16.xpose.msra.mxu0 %v238
  %242 = vmatprep.subr.bf16.mxu0 0
  %243 = vmatpush1.bf16.xpose.msra.mxu0 0
  %244 = vmatprep.subr.bf16.mxu0 0
  %245 = vmatpush1.bf16.xpose.msra.mxu0 0
  %246 = vmatprep.subr.bf16.mxu0 0
  %247 = vmatpush1.bf16.xpose.msra.mxu0 0
  %248 = vmatprep.subr.bf16.mxu0 0
  %249 = vmatpush1.bf16.xpose.msra.mxu0 0
  %250 = vmatprep.subr.bf16.mxu0 0
  %251 = vmatpush1.bf16.xpose.msra.mxu0 0
  %252 = vmatprep.subr.bf16.mxu0 0
  %253 = vmatpush1.bf16.xpose.msra.mxu0 0
  %254 = vmatprep.subr.bf16.mxu0 0
  %255 = vmatpush1.bf16.xpose.msra.mxu0 0
  %256 = vmatprep.subr.bf16.mxu0 0
  %257 = vmatpush1.bf16.xpose.msra.mxu0 0
  %258 = vmatprep.subr.bf16.mxu0 0
  %259 = vmatpush1.bf16.xpose.msra.mxu0 0
  %260 = vmatprep.subr.bf16.mxu0 0
  %261 = vmatpush1.bf16.xpose.msra.mxu0 0
  %262 = vmatprep.subr.bf16.mxu0 0
  %263 = vmatpush1.bf16.xpose.msra.mxu0 0
  %264 = vmatprep.subr.bf16.mxu0 0
  %265 = vmatpush1.bf16.xpose.msra.mxu0 0
  %266 = vmatprep.subr.bf16.mxu0 0
  %267 = vmatpush1.bf16.xpose.msra.mxu0 0
  %268 = vmatprep.subr.bf16.mxu0 0
  %269 = vmatpush1.bf16.xpose.msra.mxu0 0
  %270 = vmatprep.subr.bf16.mxu0 0
  %271 = vmatpush1.bf16.xpose.msra.mxu0 0
  %272 = vmatprep.mubr.bf16.mxu0 0
  %273 = vmatmul.mubr.bf16.gmra.mrb[0].mxu0 %v235
  %v274 = vpop.f32.mrb[0].mxu0
  %v275 = vadd.f32 0.0, %v274
  %v276 = vpop.f32.mrb[0].mxu0
  %v277 = vpop.f32.mrb[0].mxu0
  %v278 = vadd.f32 0.0, %v277
  %v279 = vpop.f32.mrb[0].mxu0
  %280 = vdwg.mxu0
  %v282 = vsel %vm42, %v231, 0
  %v285 = vsel %vm42, %v233, 0
  %287 = vmatprep.subr.bf16.mxu0 0
  %288 = vmatpush1.bf16.xpose.msra.mxu0 %v285
  %289 = vmatprep.subr.bf16.mxu0 0
  %290 = vmatpush1.bf16.xpose.msra.mxu0 0
  %291 = vmatprep.subr.bf16.mxu0 0
  %292 = vmatpush1.bf16.xpose.msra.mxu0 0
  %293 = vmatprep.subr.bf16.mxu0 0
  %294 = vmatpush1.bf16.xpose.msra.mxu0 0
  %295 = vmatprep.subr.bf16.mxu0 0
  %296 = vmatpush1.bf16.xpose.msra.mxu0 0
  %297 = vmatprep.subr.bf16.mxu0 0
  %298 = vmatpush1.bf16.xpose.msra.mxu0 0
  %299 = vmatprep.subr.bf16.mxu0 0
  %300 = vmatpush1.bf16.xpose.msra.mxu0 0
  %301 = vmatprep.subr.bf16.mxu0 0
  %302 = vmatpush1.bf16.xpose.msra.mxu0 0
  %303 = vmatprep.subr.bf16.mxu0 0
  %304 = vmatpush1.bf16.xpose.msra.mxu0 0
  %305 = vmatprep.subr.bf16.mxu0 0
  %306 = vmatpush1.bf16.xpose.msra.mxu0 0
  %307 = vmatprep.subr.bf16.mxu0 0
  %308 = vmatpush1.bf16.xpose.msra.mxu0 0
  %309 = vmatprep.subr.bf16.mxu0 0
  %310 = vmatpush1.bf16.xpose.msra.mxu0 0
  %311 = vmatprep.subr.bf16.mxu0 0
  %312 = vmatpush1.bf16.xpose.msra.mxu0 0
  %313 = vmatprep.subr.bf16.mxu0 0
  %314 = vmatpush1.bf16.xpose.msra.mxu0 0
  %315 = vmatprep.subr.bf16.mxu0 0
  %316 = vmatpush1.bf16.xpose.msra.mxu0 0
  %317 = vmatprep.subr.bf16.mxu0 0
  %318 = vmatpush1.bf16.xpose.msra.mxu0 0
  %319 = vmatprep.mubr.bf16.mxu0 0
  %320 = vmatmul.mubr.bf16.gmra.mrb[0].mxu0 %v282
  %v321 = vpop.f32.mrb[0].mxu0
  %v322 = vadd.f32 0.0, %v321
  %v323 = vpop.f32.mrb[0].mxu0
  %v324 = vpop.f32.mrb[0].mxu0
  %v325 = vadd.f32 0.0, %v324
  %v326 = vpop.f32.mrb[0].mxu0
  %327 = vdwg.mxu0
  %v328 = vmul.f32 %v275, 0.25
  %v329 = vmul.f32 %v278, 0.25
  %v330 = vmul.f32 %v322, 0.25
  %v331 = vmul.f32 %v325, 0.25
  %v332 = vsel %vm42, %v328, -inf
  %333 = vmax.xlane.f32.xlu0 %v332
  %v334 = vpop.xlane.xlu0 %333
  %v335 = vsel %vm42, %v329, -inf
  %336 = vmax.xlane.f32.xlu0 %v335
  %v337 = vpop.xlane.xlu0 %336
  %v338 = vsel %vm42, %v330, -inf
  %339 = vmax.xlane.f32.xlu0 %v338
  %v340 = vpop.xlane.xlu0 %339
  %v341 = vsel %vm42, %v331, -inf
  %342 = vmax.xlane.f32.xlu0 %v341
  %v343 = vpop.xlane.xlu0 %342
  %v344 = vsub.f32 %v328, %v334
  %v345 = vsub.f32 %v329, %v337
  %v346 = vsub.f32 %v330, %v340
  %v347 = vsub.f32 %v331, %v343
  %v348 = vmul.f32 %v344, 1.442695
  %v349 = vpow.pop %v348
  %v350 = vmul.f32 %v345, 1.442695
  %v351 = vpow.pop %v350
  %v352 = vmul.f32 %v346, 1.442695
  %v353 = vpow.pop %v352
  %v354 = vmul.f32 %v347, 1.442695
  %v355 = vpow.pop %v354
  %v356 = vsel %vm42, %v349, 0.0
  %357 = vadd.xlane.f32.xlu0 %v356
  %v358 = vpop.xlane.xlu0 %357
  %v359 = vsel %vm42, %v351, 0.0
  %360 = vadd.xlane.f32.xlu0 %v359
  %v361 = vpop.xlane.xlu0 %360
  %v362 = vsel %vm42, %v353, 0.0
  %363 = vadd.xlane.f32.xlu0 %v362
  %v364 = vpop.xlane.xlu0 %363
  %v365 = vsel %vm42, %v355, 0.0
  %366 = vadd.xlane.f32.xlu0 %v365
  %v367 = vpop.xlane.xlu0 %366
  %v368 = vrcp.pop %v358
  %v369 = vrcp.pop %v361
  %v370 = vrcp.pop %v364
  %v371 = vrcp.pop %v367
  %v372 = vmul.f32 %v349, %v368
  %v373 = vmul.f32 %v351, %v369
  %v374 = vmul.f32 %v353, %v370
  %v375 = vmul.f32 %v355, %v371
  %v376 = vpack.c.bf16 %v373, %v372
  %v377 = vpack.c.bf16 %v375, %v374
  %v378 = vpack.c.bf16 %v219, %v216
  %v379 = vpack.c.bf16 %v227, %v224
  %v381 = vsel %vm42, %v376, 0
  %383 = vmatprep.subr.bf16.mxu0 0
  %384 = vmatpush1.bf16.msra.mxu0 %v378
  %385 = vmatprep.subr.bf16.mxu0 0
  %386 = vmatpush1.bf16.msra.mxu0 0
  %387 = vmatprep.subr.bf16.mxu0 0
  %388 = vmatpush1.bf16.msra.mxu0 0
  %389 = vmatprep.subr.bf16.mxu0 0
  %390 = vmatpush1.bf16.msra.mxu0 0
  %391 = vmatprep.subr.bf16.mxu0 0
  %392 = vmatpush1.bf16.msra.mxu0 0
  %393 = vmatprep.subr.bf16.mxu0 0
  %394 = vmatpush1.bf16.msra.mxu0 0
  %395 = vmatprep.subr.bf16.mxu0 0
  %396 = vmatpush1.bf16.msra.mxu0 0
  %397 = vmatprep.subr.bf16.mxu0 0
  %398 = vmatpush1.bf16.msra.mxu0 0
  %399 = vmatprep.subr.bf16.mxu0 0
  %400 = vmatpush1.bf16.msra.mxu0 0
  %401 = vmatprep.subr.bf16.mxu0 0
  %402 = vmatpush1.bf16.msra.mxu0 0
  %403 = vmatprep.subr.bf16.mxu0 0
  %404 = vmatpush1.bf16.msra.mxu0 0
  %405 = vmatprep.subr.bf16.mxu0 0
  %406 = vmatpush1.bf16.msra.mxu0 0
  %407 = vmatprep.subr.bf16.mxu0 0
  %408 = vmatpush1.bf16.msra.mxu0 0
  %409 = vmatprep.subr.bf16.mxu0 0
  %410 = vmatpush1.bf16.msra.mxu0 0
  %411 = vmatprep.subr.bf16.mxu0 0
  %412 = vmatpush1.bf16.msra.mxu0 0
  %413 = vmatprep.subr.bf16.mxu0 0
  %414 = vmatpush1.bf16.msra.mxu0 0
  %415 = vmatprep.mubr.bf16.mxu0 0
  %416 = vmatmul.mubr.bf16.gmra.mrb[0].mxu0 %v381
  %v417 = vpop.f32.mrb[0].mxu0
  %v418 = vadd.f32 0.0, %v417
  %v419 = vpop.f32.mrb[0].mxu0
  %v420 = vpop.f32.mrb[0].mxu0
  %v421 = vadd.f32 0.0, %v420
  %v422 = vpop.f32.mrb[0].mxu0
  %423 = vdwg.mxu0
  %v425 = vsel %vm42, %v377, 0
  %427 = vmatprep.subr.bf16.mxu0 0
  %428 = vmatpush1.bf16.msra.mxu0 %v379
  %429 = vmatprep.subr.bf16.mxu0 0
  %430 = vmatpush1.bf16.msra.mxu0 0
  %431 = vmatprep.subr.bf16.mxu0 0
  %432 = vmatpush1.bf16.msra.mxu0 0
  %433 = vmatprep.subr.bf16.mxu0 0
  %434 = vmatpush1.bf16.msra.mxu0 0
  %435 = vmatprep.subr.bf16.mxu0 0
  %436 = vmatpush1.bf16.msra.mxu0 0
  %437 = vmatprep.subr.bf16.mxu0 0
  %438 = vmatpush1.bf16.msra.mxu0 0
  %439 = vmatprep.subr.bf16.mxu0 0
  %440 = vmatpush1.bf16.msra.mxu0 0
  %441 = vmatprep.subr.bf16.mxu0 0
  %442 = vmatpush1.bf16.msra.mxu0 0
  %443 = vmatprep.subr.bf16.mxu0 0
  %444 = vmatpush1.bf16.msra.mxu0 0
  %445 = vmatprep.subr.bf16.mxu0 0
  %446 = vmatpush1.bf16.msra.mxu0 0
  %447 = vmatprep.subr.bf16.mxu0 0
  %448 = vmatpush1.bf16.msra.mxu0 0
  %449 = vmatprep.subr.bf16.mxu0 0
  %450 = vmatpush1.bf16.msra.mxu0 0
  %451 = vmatprep.subr.bf16.mxu0 0
  %452 = vmatpush1.bf16.msra.mxu0 0
  %453 = vmatprep.subr.bf16.mxu0 0
  %454 = vmatpush1.bf16.msra.mxu0 0
  %455 = vmatprep.subr.bf16.mxu0 0
  %456 = vmatpush1.bf16.msra.mxu0 0
  %457 = vmatprep.subr.bf16.mxu0 0
  %458 = vmatpush1.bf16.msra.mxu0 0
  %459 = vmatprep.mubr.bf16.mxu0 0
  %460 = vmatmul.mubr.bf16.gmra.mrb[0].mxu0 %v425
  %v461 = vpop.f32.mrb[0].mxu0
  %v462 = vadd.f32 0.0, %v461
  %v463 = vpop.f32.mrb[0].mxu0
  %v464 = vpop.f32.mrb[0].mxu0
  %v465 = vadd.f32 0.0, %v464
  %v466 = vpop.f32.mrb[0].mxu0
  %467 = vdwg.mxu0
  %v468 = vpack.c.bf16 %v421, %v418
  %v469 = vpack.c.bf16 %v465, %v462
  %v470 = vld [vmem:[%s3] sm:$0xf]
  %v471 = vld [vmem:[%s3 + $0x4] sm:$0xf]
  %v472 = vld [vmem:[%s4] sm:$0x1]
  %v474 = vlaneseq
  %v475 = vshrl.u32 %v474, 7
  %v476 = vsub.s32 0, %v475
  %v477 = vrot.slane %v472, %v476
  %v481 = vunpack.c.l.b16 %v470
  %v482 = vunpack.c.l.b16 %v471
  %v483 = vpack.c.b16 %v482, %v481
  %v486 = vsel %vm42, %v468, 0
  %v489 = vsel %vm42, %v469, 0
  %491 = vmatprep.subr.bf16.mxu0 0
  %492 = vmatpush1.bf16.msra.mxu0 %v483
  %493 = vmatprep.subr.bf16.mxu0 0
  %494 = vmatpush1.bf16.msra.mxu0 0
  %495 = vmatprep.subr.bf16.mxu0 0
  %496 = vmatpush1.bf16.msra.mxu0 0
  %497 = vmatprep.subr.bf16.mxu0 0
  %498 = vmatpush1.bf16.msra.mxu0 0
  %499 = vmatprep.subr.bf16.mxu0 0
  %500 = vmatpush1.bf16.msra.mxu0 0
  %501 = vmatprep.subr.bf16.mxu0 0
  %502 = vmatpush1.bf16.msra.mxu0 0
  %503 = vmatprep.subr.bf16.mxu0 0
  %504 = vmatpush1.bf16.msra.mxu0 0
  %505 = vmatprep.subr.bf16.mxu0 0
  %506 = vmatpush1.bf16.msra.mxu0 0
  %507 = vmatprep.subr.bf16.mxu0 0
  %508 = vmatpush1.bf16.msra.mxu0 0
  %509 = vmatprep.subr.bf16.mxu0 0
  %510 = vmatpush1.bf16.msra.mxu0 0
  %511 = vmatprep.subr.bf16.mxu0 0
  %512 = vmatpush1.bf16.msra.mxu0 0
  %513 = vmatprep.subr.bf16.mxu0 0
  %514 = vmatpush1.bf16.msra.mxu0 0
  %515 = vmatprep.subr.bf16.mxu0 0
  %516 = vmatpush1.bf16.msra.mxu0 0
  %517 = vmatprep.subr.bf16.mxu0 0
  %518 = vmatpush1.bf16.msra.mxu0 0
  %519 = vmatprep.subr.bf16.mxu0 0
  %520 = vmatpush1.bf16.msra.mxu0 0
  %521 = vmatprep.subr.bf16.mxu0 0
  %522 = vmatpush1.bf16.msra.mxu0 0
  %523 = vmatprep.mubr.bf16.mxu0 0
  %524 = vmatmul.mubr.bf16.gmra.mrb[0].mxu0 %v486
  %v525 = vpop.f32.mrb[0].mxu0
  %v526 = vadd.f32 %v477, %v525
  %v527 = vpop.f32.mrb[0].mxu0
  %v528 = vpop.f32.mrb[0].mxu0
  %v529 = vadd.f32 %v477, %v528
  %v530 = vpop.f32.mrb[0].mxu0
  %531 = vmatprep.mubr.bf16.mxu0 0
  %532 = vmatmul.mubr.bf16.gmra.mrb[0].mxu0 %v489
  %v533 = vpop.f32.mrb[0].mxu0
  %v534 = vadd.f32 %v477, %v533
  %v535 = vpop.f32.mrb[0].mxu0
  %v536 = vpop.f32.mrb[0].mxu0
  %v537 = vadd.f32 %v477, %v536
  %v538 = vpop.f32.mrb[0].mxu0
  %539 = vdwg.mxu0
  %v540 = vadd.f32 %v21, %v526
  %v541 = vadd.f32 %v22, %v529
  %v542 = vadd.f32 %v23, %v534
  %v543 = vadd.f32 %v24, %v537
  %544 = vst.msk [vmem:[%s5] sm:$0xff] %vm42, %v540
  %545 = vst.msk [vmem:[%s5 + $0x8] sm:$0xff] %vm42, %v541
  %546 = vst.msk [vmem:[%s5 + $0x10] sm:$0xff] %vm42, %v542
  %547 = vst.msk [vmem:[%s5 + $0x18] sm:$0xff] %vm42, %v543
  // Predicated region
  $region22: #{mobilevit_track_forward.12} parent=0 // pred_check
    _
  $region23: #{mobilevit_track_forward.12} parent=0 // pred_check_branch
    %549 = sbr.rel (0) target = $region25
  $region24: #{mobilevit_track_forward.12} parent=0 // pred_region
    _
  $region25: #{mobilevit_track_forward.12} parent=0 // pred_fallthru
    _
  // Predicated region
  $region26: #{mobilevit_track_forward.12} parent=0 // pred_check
    _
  $region27: #{mobilevit_track_forward.12} parent=0 // pred_check_branch
    %551 = sbr.rel (0) target = $region29
  $region28: #{mobilevit_track_forward.12} parent=0 // pred_region
    _
  $region29: #{mobilevit_track_forward.12} parent=0 // pred_fallthru
    _

// kernel: mobilevit_track_forward.11
$region0: #{mobilevit_track_forward.11}
  #allocation0 [shape = 'u32[]', space=smem, size = 0x4, offset = 0x4, fixed_abs, tag = 'smem constant byte address 0x4 - core index']
  #allocation1 [shape = 'u32[144,128]{1,0:T(1,128)}', space=vmem, size = 0x12000, scoped, tag = 'internal scratch']
  %s0 = inlined_call_operand.vmem [shape: f32[2,64,16], index: 0, kind: input, shape index: {}]
  %s1 = inlined_call_operand.vmem [shape: bf16[3,16,16], index: 1, kind: input, shape index: {}]
  %s2 = inlined_call_operand.vmem [shape: f32[3,1,16], index: 2, kind: input, shape index: {}]
  %s3 = inlined_call_operand.vmem [shape: bf16[16,16], index: 3, kind: input, shape index: {}]
  %s4 = inlined_call_operand.vmem [shape: f32[1,16], index: 4, kind: input, shape index: {}]
  %s5 = inlined_call_operand.vmem [shape: f32[2,64,16], index: 5, kind: output, shape index: {}]
  %s6 = sld [smem:[#allocation0]]
  $region30: #{mobilevit_track_forward.11} parent=0
    _
  %s8 = ssub.s32 1, %s6
  %s9 = scalar_select 0, %s8, %s6
  // Predicated region
  $region2: #{mobilevit_track_forward.11} parent=0 // pred_check
    _
  $region3: #{mobilevit_track_forward.11} parent=0 // pred_check_branch
    %11 = sbr.rel (0) target = $region5
  $region4: #{mobilevit_track_forward.11} parent=0 // pred_region
    _
  $region5: #{mobilevit_track_forward.11} parent=0 // pred_fallthru
    _
  // Predicated region
  $region6: #{mobilevit_track_forward.11} parent=0 // pred_check
    _
  $region7: #{mobilevit_track_forward.11} parent=0 // pred_check_branch
    %13 = sbr.rel (0) target = $region9
  $region8: #{mobilevit_track_forward.11} parent=0 // pred_region
    _
  $region9: #{mobilevit_track_forward.11} parent=0 // pred_fallthru
    _
  // Predicated region
  $region10: #{mobilevit_track_forward.11} parent=0 // pred_check
    _
  $region11: #{mobilevit_track_forward.11} parent=0 // pred_check_branch
    %15 = sbr.rel (0) target = $region13
  $region12: #{mobilevit_track_forward.11} parent=0 // pred_region
    _
  $region13: #{mobilevit_track_forward.11} parent=0 // pred_fallthru
    _
  // Predicated region
  $region14: #{mobilevit_track_forward.11} parent=0 // pred_check
    _
  $region15: #{mobilevit_track_forward.11} parent=0 // pred_check_branch
    %17 = sbr.rel (0) target = $region17
  $region16: #{mobilevit_track_forward.11} parent=0 // pred_region
    _
  $region17: #{mobilevit_track_forward.11} parent=0 // pred_fallthru
    _
  // Predicated region
  $region18: #{mobilevit_track_forward.11} parent=0 // pred_check
    _
  $region19: #{mobilevit_track_forward.11} parent=0 // pred_check_branch
    %19 = sbr.rel (0) target = $region21
  $region20: #{mobilevit_track_forward.11} parent=0 // pred_region
    _
  $region21: #{mobilevit_track_forward.11} parent=0 // pred_fallthru
    _
  %v21 = vld [vmem:[%s0] sm:$0xff]
  %v22 = vld [vmem:[%s0 + $0x8] sm:$0xff]
  %v23 = vld [vmem:[%s0 + $0x10] sm:$0xff]
  %v24 = vld [vmem:[%s0 + $0x18] sm:$0xff]
  %v25 = vld [vmem:[%s0 + $0x20] sm:$0xff]
  %v26 = vld [vmem:[%s0 + $0x28] sm:$0xff]
  %v27 = vld [vmem:[%s0 + $0x30] sm:$0xff]
  %v28 = vld [vmem:[%s0 + $0x38] sm:$0xff]
  %v29 = vld [vmem:[%s0 + $0x40] sm:$0xff]
  %v30 = vld [vmem:[%s0 + $0x48] sm:$0xff]
  %v31 = vld [vmem:[%s0 + $0x50] sm:$0xff]
  %v32 = vld [vmem:[%s0 + $0x58] sm:$0xff]
  %v33 = vld [vmem:[%s0 + $0x60] sm:$0xff]
  %v34 = vld [vmem:[%s0 + $0x68] sm:$0xff]
  %v35 = vld [vmem:[%s0 + $0x70] sm:$0xff]
  %v36 = vld [vmem:[%s0 + $0x78] sm:$0xff]
  %v37 = vpack.c.bf16 %v22, %v21
  %v38 = vpack.c.bf16 %v24, %v23
  %v39 = vpack.c.bf16 %v26, %v25
  %v40 = vpack.c.bf16 %v28, %v27
  %v41 = vpack.c.bf16 %v30, %v29
  %v42 = vpack.c.bf16 %v32, %v31
  %v43 = vpack.c.bf16 %v34, %v33
  %v44 = vpack.c.bf16 %v36, %v35
  %v45 = vld [vmem:[%s1] sm:$0xf]
  %v46 = vld [vmem:[%s1 + $0x4] sm:$0xf]
  %v47 = vld [vmem:[%s2] sm:$0x1]
  %v49 = vlaneseq
  %v50 = vshrl.u32 %v49, 7
  %v51 = vsub.s32 0, %v50
  %v52 = vrot.slane %v47, %v51
  %v56 = vunpack.c.l.b16 %v45
  %v57 = vunpack.c.l.b16 %v46
  %v58 = vpack.c.b16 %v57, %v56
  %vm60 = vcmask 130048
  %v62 = vsel %vm60, %v37, 0
  %v65 = vsel %vm60, %v38, 0
  %v68 = vsel %vm60, %v39, 0
  %v71 = vsel %vm60, %v40, 0
  %v74 = vsel %vm60, %v41, 0
  %v77 = vsel %vm60, %v42, 0
  %v80 = vsel %vm60, %v43, 0
  %v83 = vsel %vm60, %v44, 0
  %85 = vmatprep.subr.bf16.mxu0 0
  %86 = vmatpush1.bf16.msra.mxu0 %v58
  %87 = vmatprep.subr.bf16.mxu0 0
  %88 = vmatpush1.bf16.msra.mxu0 0
  %89 = vmatprep.subr.bf16.mxu0 0
  %90 = vmatpush1.bf16.msra.mxu0 0
  %91 = vmatprep.subr.bf16.mxu0 0
  %92 = vmatpush1.bf16.msra.mxu0 0
  %93 = vmatprep.subr.bf16.mxu0 0
  %94 = vmatpush1.bf16.msra.mxu0 0
  %95 = vmatprep.subr.bf16.mxu0 0
  %96 = vmatpush1.bf16.msra.mxu0 0
  %97 = vmatprep.subr.bf16.mxu0 0
  %98 = vmatpush1.bf16.msra.mxu0 0
  %99 = vmatprep.subr.bf16.mxu0 0
  %100 = vmatpush1.bf16.msra.mxu0 0
  %101 = vmatprep.subr.bf16.mxu0 0
  %102 = vmatpush1.bf16.msra.mxu0 0
  %103 = vmatprep.subr.bf16.mxu0 0
  %104 = vmatpush1.bf16.msra.mxu0 0
  %105 = vmatprep.subr.bf16.mxu0 0
  %106 = vmatpush1.bf16.msra.mxu0 0
  %107 = vmatprep.subr.bf16.mxu0 0
  %108 = vmatpush1.bf16.msra.mxu0 0
  %109 = vmatprep.subr.bf16.mxu0 0
  %110 = vmatpush1.bf16.msra.mxu0 0
  %111 = vmatprep.subr.bf16.mxu0 0
  %112 = vmatpush1.bf16.msra.mxu0 0
  %113 = vmatprep.subr.bf16.mxu0 0
  %114 = vmatpush1.bf16.msra.mxu0 0
  %115 = vmatprep.subr.bf16.mxu0 0
  %116 = vmatpush1.bf16.msra.mxu0 0
  %117 = vmatprep.mubr.bf16.mxu0 0
  %118 = vmatmul.mubr.bf16.gmra.mrb[0].mxu0 %v62
  %v119 = vpop.f32.mrb[0].mxu0
  %v120 = vadd.f32 %v52, %v119
  %v121 = vpop.f32.mrb[0].mxu0
  %v122 = vpop.f32.mrb[0].mxu0
  %v123 = vadd.f32 %v52, %v122
  %v124 = vpop.f32.mrb[0].mxu0
  %125 = vmatprep.mubr.bf16.mxu0 0
  %126 = vmatmul.mubr.bf16.gmra.mrb[0].mxu0 %v65
  %v127 = vpop.f32.mrb[0].mxu0
  %v128 = vadd.f32 %v52, %v127
  %v129 = vpop.f32.mrb[0].mxu0
  %v130 = vpop.f32.mrb[0].mxu0
  %v131 = vadd.f32 %v52, %v130
  %v132 = vpop.f32.mrb[0].mxu0
  %133 = vmatprep.mubr.bf16.mxu0 0
  %134 = vmatmul.mubr.bf16.gmra.mrb[0].mxu0 %v68
  %v135 = vpop.f32.mrb[0].mxu0
  %v136 = vadd.f32 %v52, %v135
  %v137 = vpop.f32.mrb[0].mxu0
  %v138 = vpop.f32.mrb[0].mxu0
  %v139 = vadd.f32 %v52, %v138
  %v140 = vpop.f32.mrb[0].mxu0
  %141 = vmatprep.mubr.bf16.mxu0 0
  %142 = vmatmul.mubr.bf16.gmra.mrb[0].mxu0 %v71
  %v143 = vpop.f32.mrb[0].mxu0
  %v144 = vadd.f32 %v52, %v143
  %v145 = vpop.f32.mrb[0].mxu0
  %v146 = vpop.f32.mrb[0].mxu0
  %v147 = vadd.f32 %v52, %v146
  %v148 = vpop.f32.mrb[0].mxu0
  %149 = vmatprep.mubr.bf16.mxu0 0
  %150 = vmatmul.mubr.bf16.gmra.mrb[0].mxu0 %v74
  %v151 = vpop.f32.mrb[0].mxu0
  %v152 = vadd.f32 %v52, %v151
  %v153 = vpop.f32.mrb[0].mxu0
  %v154 = vpop.f32.mrb[0].mxu0
  %v155 = vadd.f32 %v52, %v154
  %v156 = vpop.f32.mrb[0].mxu0
  %157 = vmatprep.mubr.bf16.mxu0 0
  %158 = vmatmul.mubr.bf16.gmra.mrb[0].mxu0 %v77
  %v159 = vpop.f32.mrb[0].mxu0
  %v160 = vadd.f32 %v52, %v159
  %v161 = vpop.f32.mrb[0].mxu0
  %v162 = vpop.f32.mrb[0].mxu0
  %v163 = vadd.f32 %v52, %v162
  %v164 = vpop.f32.mrb[0].mxu0
  %165 = vmatprep.mubr.bf16.mxu0 0
  %166 = vmatmul.mubr.bf16.gmra.mrb[0].mxu0 %v80
  %v167 = vpop.f32.mrb[0].mxu0
  %v168 = vadd.f32 %v52, %v167
  %v169 = vpop.f32.mrb[0].mxu0
  %v170 = vpop.f32.mrb[0].mxu0
  %v171 = vadd.f32 %v52, %v170
  %v172 = vpop.f32.mrb[0].mxu0
  %173 = vmatprep.mubr.bf16.mxu0 0
  %174 = vmatmul.mubr.bf16.gmra.mrb[0].mxu0 %v83
  %v175 = vpop.f32.mrb[0].mxu0
  %v176 = vadd.f32 %v52, %v175
  %v177 = vpop.f32.mrb[0].mxu0
  %v178 = vpop.f32.mrb[0].mxu0
  %v179 = vadd.f32 %v52, %v178
  %v180 = vpop.f32.mrb[0].mxu0
  %181 = vdwg.mxu0
  %s182 = scalar_lea.vmem %s1, 8
  %v183 = vld [vmem:[%s182] sm:$0xf]
  %v184 = vld [vmem:[%s182 + $0x4] sm:$0xf]
  %s185 = scalar_lea.vmem %s2, 1
  %v186 = vld [vmem:[%s185] sm:$0x1]
  %v188 = vlaneseq
  %v189 = vshrl.u32 %v188, 7
  %v190 = vsub.s32 0, %v189
  %v191 = vrot.slane %v186, %v190
  %v195 = vunpack.c.l.b16 %v183
  %v196 = vunpack.c.l.b16 %v184
  %v197 = vpack.c.b16 %v196, %v195
  %199 = vmatprep.subr.bf16.mxu0 0
  %200 = vmatpush1.bf16.msra.mxu0 %v197
  %201 = vmatprep.subr.bf16.mxu0 0
  %202 = vmatpush1.bf16.msra.mxu0 0
  %203 = vmatprep.subr.bf16.mxu0 0
  %204 = vmatpush1.bf16.msra.mxu0 0
  %205 = vmatprep.subr.bf16.mxu0 0
  %206 = vmatpush1.bf16.msra.mxu0 0
  %207 = vmatprep.subr.bf16.mxu0 0
  %208 = vmatpush1.bf16.msra.mxu0 0
  %209 = vmatprep.subr.bf16.mxu0 0
  %210 = vmatpush1.bf16.msra.mxu0 0
  %211 = vmatprep.subr.bf16.mxu0 0
  %212 = vmatpush1.bf16.msra.mxu0 0
  %213 = vmatprep.subr.bf16.mxu0 0
  %214 = vmatpush1.bf16.msra.mxu0 0
  %215 = vmatprep.subr.bf16.mxu0 0
  %216 = vmatpush1.bf16.msra.mxu0 0
  %217 = vmatprep.subr.bf16.mxu0 0
  %218 = vmatpush1.bf16.msra.mxu0 0
  %219 = vmatprep.subr.bf16.mxu0 0
  %220 = vmatpush1.bf16.msra.mxu0 0
  %221 = vmatprep.subr.bf16.mxu0 0
  %222 = vmatpush1.bf16.msra.mxu0 0
  %223 = vmatprep.subr.bf16.mxu0 0
  %224 = vmatpush1.bf16.msra.mxu0 0
  %225 = vmatprep.subr.bf16.mxu0 0
  %226 = vmatpush1.bf16.msra.mxu0 0
  %227 = vmatprep.subr.bf16.mxu0 0
  %228 = vmatpush1.bf16.msra.mxu0 0
  %229 = vmatprep.subr.bf16.mxu0 0
  %230 = vmatpush1.bf16.msra.mxu0 0
  %231 = vmatprep.mubr.bf16.mxu0 0
  %232 = vmatmul.mubr.bf16.gmra.mrb[0].mxu0 %v62
  %v233 = vpop.f32.mrb[0].mxu0
  %v234 = vadd.f32 %v191, %v233
  %v235 = vpop.f32.mrb[0].mxu0
  %v236 = vpop.f32.mrb[0].mxu0
  %v237 = vadd.f32 %v191, %v236
  %v238 = vpop.f32.mrb[0].mxu0
  %239 = vmatprep.mubr.bf16.mxu0 0
  %240 = vmatmul.mubr.bf16.gmra.mrb[0].mxu0 %v65
  %v241 = vpop.f32.mrb[0].mxu0
  %v242 = vadd.f32 %v191, %v241
  %v243 = vpop.f32.mrb[0].mxu0
  %v244 = vpop.f32.mrb[0].mxu0
  %v245 = vadd.f32 %v191, %v244
  %v246 = vpop.f32.mrb[0].mxu0
  %247 = vmatprep.mubr.bf16.mxu0 0
  %248 = vmatmul.mubr.bf16.gmra.mrb[0].mxu0 %v68
  %v249 = vpop.f32.mrb[0].mxu0
  %v250 = vadd.f32 %v191, %v249
  %v251 = vpop.f32.mrb[0].mxu0
  %v252 = vpop.f32.mrb[0].mxu0
  %v253 = vadd.f32 %v191, %v252
  %v254 = vpop.f32.mrb[0].mxu0
  %255 = vmatprep.mubr.bf16.mxu0 0
  %256 = vmatmul.mubr.bf16.gmra.mrb[0].mxu0 %v71
  %v257 = vpop.f32.mrb[0].mxu0
  %v258 = vadd.f32 %v191, %v257
  %v259 = vpop.f32.mrb[0].mxu0
  %v260 = vpop.f32.mrb[0].mxu0
  %v261 = vadd.f32 %v191, %v260
  %v262 = vpop.f32.mrb[0].mxu0
  %263 = vmatprep.mubr.bf16.mxu0 0
  %264 = vmatmul.mubr.bf16.gmra.mrb[0].mxu0 %v74
  %v265 = vpop.f32.mrb[0].mxu0
  %v266 = vadd.f32 %v191, %v265
  %v267 = vpop.f32.mrb[0].mxu0
  %v268 = vpop.f32.mrb[0].mxu0
  %v269 = vadd.f32 %v191, %v268
  %v270 = vpop.f32.mrb[0].mxu0
  %271 = vmatprep.mubr.bf16.mxu0 0
  %272 = vmatmul.mubr.bf16.gmra.mrb[0].mxu0 %v77
  %v273 = vpop.f32.mrb[0].mxu0
  %v274 = vadd.f32 %v191, %v273
  %v275 = vpop.f32.mrb[0].mxu0
  %v276 = vpop.f32.mrb[0].mxu0
  %v277 = vadd.f32 %v191, %v276
  %v278 = vpop.f32.mrb[0].mxu0
  %279 = vmatprep.mubr.bf16.mxu0 0
  %280 = vmatmul.mubr.bf16.gmra.mrb[0].mxu0 %v80
  %v281 = vpop.f32.mrb[0].mxu0
  %v282 = vadd.f32 %v191, %v281
  %v283 = vpop.f32.mrb[0].mxu0
  %v284 = vpop.f32.mrb[0].mxu0
  %v285 = vadd.f32 %v191, %v284
  %v286 = vpop.f32.mrb[0].mxu0
  %287 = vmatprep.mubr.bf16.mxu0 0
  %288 = vmatmul.mubr.bf16.gmra.mrb[0].mxu0 %v83
  %v289 = vpop.f32.mrb[0].mxu0
  %v290 = vadd.f32 %v191, %v289
  %v291 = vpop.f32.mrb[0].mxu0
  %v292 = vpop.f32.mrb[0].mxu0
  %v293 = vadd.f32 %v191, %v292
  %v294 = vpop.f32.mrb[0].mxu0
  %295 = vdwg.mxu0
  %s296 = scalar_lea.vmem %s1, 16
  %v297 = vld [vmem:[%s296] sm:$0xf]
  %v298 = vld [vmem:[%s296 + $0x4] sm:$0xf]
  %s299 = scalar_lea.vmem %s2, 2
  %v300 = vld [vmem:[%s299] sm:$0x1]
  %v302 = vlaneseq
  %v303 = vshrl.u32 %v302, 7
  %v304 = vsub.s32 0, %v303
  %v305 = vrot.slane %v300, %v304
  %v309 = vunpack.c.l.b16 %v297
  %v310 = vunpack.c.l.b16 %v298
  %v311 = vpack.c.b16 %v310, %v309
  %313 = vmatprep.subr.bf16.mxu0 0
  %314 = vmatpush1.bf16.msra.mxu0 %v311
  %315 = vmatprep.subr.bf16.mxu0 0
  %316 = vmatpush1.bf16.msra.mxu0 0
  %317 = vmatprep.subr.bf16.mxu0 0
  %318 = vmatpush1.bf16.msra.mxu0 0
  %319 = vmatprep.subr.bf16.mxu0 0
  %320 = vmatpush1.bf16.msra.mxu0 0
  %321 = vmatprep.subr.bf16.mxu0 0
  %322 = vmatpush1.bf16.msra.mxu0 0
  %323 = vmatprep.subr.bf16.mxu0 0
  %324 = vmatpush1.bf16.msra.mxu0 0
  %325 = vmatprep.subr.bf16.mxu0 0
  %326 = vmatpush1.bf16.msra.mxu0 0
  %327 = vmatprep.subr.bf16.mxu0 0
  %328 = vmatpush1.bf16.msra.mxu0 0
  %329 = vmatprep.subr.bf16.mxu0 0
  %330 = vmatpush1.bf16.msra.mxu0 0
  %331 = vmatprep.subr.bf16.mxu0 0
  %332 = vmatpush1.bf16.msra.mxu0 0
  %333 = vmatprep.subr.bf16.mxu0 0
  %334 = vmatpush1.bf16.msra.mxu0 0
  %335 = vmatprep.subr.bf16.mxu0 0
  %336 = vmatpush1.bf16.msra.mxu0 0
  %337 = vmatprep.subr.bf16.mxu0 0
  %338 = vmatpush1.bf16.msra.mxu0 0
  %339 = vmatprep.subr.bf16.mxu0 0
  %340 = vmatpush1.bf16.msra.mxu0 0
  %341 = vmatprep.subr.bf16.mxu0 0
  %342 = vmatpush1.bf16.msra.mxu0 0
  %343 = vmatprep.subr.bf16.mxu0 0
  %344 = vmatpush1.bf16.msra.mxu0 0
  %345 = vmatprep.mubr.bf16.mxu0 0
  %346 = vmatmul.mubr.bf16.gmra.mrb[0].mxu0 %v62
  %v347 = vpop.f32.mrb[0].mxu0
  %v348 = vadd.f32 %v305, %v347
  %v349 = vpop.f32.mrb[0].mxu0
  %v350 = vpop.f32.mrb[0].mxu0
  %v351 = vadd.f32 %v305, %v350
  %v352 = vpop.f32.mrb[0].mxu0
  %353 = vmatprep.mubr.bf16.mxu0 0
  %354 = vmatmul.mubr.bf16.gmra.mrb[0].mxu0 %v65
  %v355 = vpop.f32.mrb[0].mxu0
  %v356 = vadd.f32 %v305, %v355
  %v357 = vpop.f32.mrb[0].mxu0
  %v358 = vpop.f32.mrb[0].mxu0
  %v359 = vadd.f32 %v305, %v358
  %v360 = vpop.f32.mrb[0].mxu0
  %361 = vmatprep.mubr.bf16.mxu0 0
  %362 = vmatmul.mubr.bf16.gmra.mrb[0].mxu0 %v68
  %v363 = vpop.f32.mrb[0].mxu0
  %v364 = vadd.f32 %v305, %v363
  %v365 = vpop.f32.mrb[0].mxu0
  %v366 = vpop.f32.mrb[0].mxu0
  %v367 = vadd.f32 %v305, %v366
  %v368 = vpop.f32.mrb[0].mxu0
  %369 = vmatprep.mubr.bf16.mxu0 0
  %370 = vmatmul.mubr.bf16.gmra.mrb[0].mxu0 %v71
  %v371 = vpop.f32.mrb[0].mxu0
  %v372 = vadd.f32 %v305, %v371
  %v373 = vpop.f32.mrb[0].mxu0
  %v374 = vpop.f32.mrb[0].mxu0
  %v375 = vadd.f32 %v305, %v374
  %v376 = vpop.f32.mrb[0].mxu0
  %377 = vmatprep.mubr.bf16.mxu0 0
  %378 = vmatmul.mubr.bf16.gmra.mrb[0].mxu0 %v74
  %v379 = vpop.f32.mrb[0].mxu0
  %v380 = vadd.f32 %v305, %v379
  %v381 = vpop.f32.mrb[0].mxu0
  %v382 = vpop.f32.mrb[0].mxu0
  %v383 = vadd.f32 %v305, %v382
  %v384 = vpop.f32.mrb[0].mxu0
  %385 = vmatprep.mubr.bf16.mxu0 0
  %386 = vmatmul.mubr.bf16.gmra.mrb[0].mxu0 %v77
  %v387 = vpop.f32.mrb[0].mxu0
  %v388 = vadd.f32 %v305, %v387
  %v389 = vpop.f32.mrb[0].mxu0
  %v390 = vpop.f32.mrb[0].mxu0
  %v391 = vadd.f32 %v305, %v390
  %v392 = vpop.f32.mrb[0].mxu0
  %393 = vmatprep.mubr.bf16.mxu0 0
  %394 = vmatmul.mubr.bf16.gmra.mrb[0].mxu0 %v80
  %v395 = vpop.f32.mrb[0].mxu0
  %v396 = vadd.f32 %v305, %v395
  %v397 = vpop.f32.mrb[0].mxu0
  %v398 = vpop.f32.mrb[0].mxu0
  %v399 = vadd.f32 %v305, %v398
  %v400 = vpop.f32.mrb[0].mxu0
  %401 = vmatprep.mubr.bf16.mxu0 0
  %402 = vmatmul.mubr.bf16.gmra.mrb[0].mxu0 %v83
  %v403 = vpop.f32.mrb[0].mxu0
  %v404 = vadd.f32 %v305, %v403
  %v405 = vpop.f32.mrb[0].mxu0
  %v406 = vpop.f32.mrb[0].mxu0
  %v407 = vadd.f32 %v305, %v406
  %v408 = vpop.f32.mrb[0].mxu0
  %409 = vdwg.mxu0
  %v410 = vpack.c.bf16 %v123, %v120
  %v411 = vpack.c.bf16 %v131, %v128
  %v412 = vpack.c.bf16 %v139, %v136
  %v413 = vpack.c.bf16 %v147, %v144
  %v414 = vpack.c.bf16 %v155, %v152
  %v415 = vpack.c.bf16 %v163, %v160
  %v416 = vpack.c.bf16 %v171, %v168
  %v417 = vpack.c.bf16 %v179, %v176
  %v418 = vpack.c.bf16 %v237, %v234
  %v419 = vpack.c.bf16 %v245, %v242
  %v420 = vpack.c.bf16 %v253, %v250
  %v421 = vpack.c.bf16 %v261, %v258
  %v422 = vpack.c.bf16 %v269, %v266
  %v423 = vpack.c.bf16 %v277, %v274
  %v424 = vpack.c.bf16 %v285, %v282
  %v425 = vpack.c.bf16 %v293, %v290
  %v427 = vsel %vm60, %v410, 0
  %v430 = vsel %vm60, %v411, 0
  %v433 = vsel %vm60, %v412, 0
  %v436 = vsel %vm60, %v413, 0
  %v439 = vsel %vm60, %v418, 0
  %v442 = vsel %vm60, %v419, 0
  %v445 = vsel %vm60, %v420, 0
  %v448 = vsel %vm60, %v421, 0
  %450 = vmatprep.subr.bf16.mxu0 0
  %451 = vmatpush1.bf16.xpose.msra.mxu0 %v439
  %452 = vmatprep.subr.bf16.mxu0 0
  %453 = vmatpush1.bf16.xpose.msra.mxu0 %v442
  %454 = vmatprep.subr.bf16.mxu0 0
  %455 = vmatpush1.bf16.xpose.msra.mxu0 %v445
  %456 = vmatprep.subr.bf16.mxu0 0
  %457 = vmatpush1.bf16.xpose.msra.mxu0 %v448
  %458 = vmatprep.subr.bf16.mxu0 0
  %459 = vmatpush1.bf16.xpose.msra.mxu0 0
  %460 = vmatprep.subr.bf16.mxu0 0
  %461 = vmatpush1.bf16.xpose.msra.mxu0 0
  %462 = vmatprep.subr.bf16.mxu0 0
  %463 = vmatpush1.bf16.xpose.msra.mxu0 0
  %464 = vmatprep.subr.bf16.mxu0 0
  %465 = vmatpush1.bf16.xpose.msra.mxu0 0
  %466 = vmatprep.subr.bf16.mxu0 0
  %467 = vmatpush1.bf16.xpose.msra.mxu0 0
  %468 = vmatprep.subr.bf16.mxu0 0
  %469 = vmatpush1.bf16.xpose.msra.mxu0 0
  %470 = vmatprep.subr.bf16.mxu0 0
  %471 = vmatpush1.bf16.xpose.msra.mxu0 0
  %472 = vmatprep.subr.bf16.mxu0 0
  %473 = vmatpush1.bf16.xpose.msra.mxu0 0
  %474 = vmatprep.subr.bf16.mxu0 0
  %475 = vmatpush1.bf16.xpose.msra.mxu0 0
  %476 = vmatprep.subr.bf16.mxu0 0
  %477 = vmatpush1.bf16.xpose.msra.mxu0 0
  %478 = vmatprep.subr.bf16.mxu0 0
  %479 = vmatpush1.bf16.xpose.msra.mxu0 0
  %480 = vmatprep.subr.bf16.mxu0 0
  %481 = vmatpush1.bf16.xpose.msra.mxu0 0
  %482 = vmatprep.mubr.bf16.mxu0 0
  %483 = vmatmul.mubr.bf16.gmra.mrb[0].mxu0 %v427
  %v484 = vpop.f32.mrb[0].mxu0
  %v485 = vadd.f32 0.0, %v484
  %v486 = vpop.f32.mrb[0].mxu0
  %v487 = vpop.f32.mrb[0].mxu0
  %v488 = vadd.f32 0.0, %v487
  %v489 = vpop.f32.mrb[0].mxu0
  %490 = vmatprep.mubr.bf16.mxu0 0
  %491 = vmatmul.mubr.bf16.gmra.mrb[0].mxu0 %v430
  %v492 = vpop.f32.mrb[0].mxu0
  %v493 = vadd.f32 0.0, %v492
  %v494 = vpop.f32.mrb[0].mxu0
  %v495 = vpop.f32.mrb[0].mxu0
  %v496 = vadd.f32 0.0, %v495
  %v497 = vpop.f32.mrb[0].mxu0
  %498 = vmatprep.mubr.bf16.mxu0 0
  %499 = vmatmul.mubr.bf16.gmra.mrb[0].mxu0 %v433
  %v500 = vpop.f32.mrb[0].mxu0
  %v501 = vadd.f32 0.0, %v500
  %v502 = vpop.f32.mrb[0].mxu0
  %v503 = vpop.f32.mrb[0].mxu0
  %v504 = vadd.f32 0.0, %v503
  %v505 = vpop.f32.mrb[0].mxu0
  %506 = vmatprep.mubr.bf16.mxu0 0
  %507 = vmatmul.mubr.bf16.gmra.mrb[0].mxu0 %v436
  %v508 = vpop.f32.mrb[0].mxu0
  %v509 = vadd.f32 0.0, %v508
  %v510 = vpop.f32.mrb[0].mxu0
  %v511 = vpop.f32.mrb[0].mxu0
  %v512 = vadd.f32 0.0, %v511
  %v513 = vpop.f32.mrb[0].mxu0
  %514 = vdwg.mxu0
  %v516 = vsel %vm60, %v414, 0
  %v519 = vsel %vm60, %v415, 0
  %v522 = vsel %vm60, %v416, 0
  %v525 = vsel %vm60, %v417, 0
  %v528 = vsel %vm60, %v422, 0
  %v531 = vsel %vm60, %v423, 0
  %v534 = vsel %vm60, %v424, 0
  %v537 = vsel %vm60, %v425, 0
  %539 = vmatprep.subr.bf16.mxu0 0
  %540 = vmatpush1.bf16.xpose.msra.mxu0 %v528
  %541 = vmatprep.subr.bf16.mxu0 0
  %542 = vmatpush1.bf16.xpose.msra.mxu0 %v531
  %543 = vmatprep.subr.bf16.mxu0 0
  %544 = vmatpush1.bf16.xpose.msra.mxu0 %v534
  %545 = vmatprep.subr.bf16.mxu0 0
  %546 = vmatpush1.bf16.xpose.msra.mxu0 %v537
  %547 = vmatprep.subr.bf16.mxu0 0
  %548 = vmatpush1.bf16.xpose.msra.mxu0 0
  %549 = vmatprep.subr.bf16.mxu0 0
  %550 = vmatpush1.bf16.xpose.msra.mxu0 0
  %551 = vmatprep.subr.bf16.mxu0 0
  %552 = vmatpush1.bf16.xpose.msra.mxu0 0
  %553 = vmatprep.subr.bf16.mxu0 0
  %554 = vmatpush1.bf16.xpose.msra.mxu0 0
  %555 = vmatprep.subr.bf16.mxu0 0
  %556 = vmatpush1.bf16.xpose.msra.mxu0 0
  %557 = vmatprep.subr.bf16.mxu0 0
  %558 = vmatpush1.bf16.xpose.msra.mxu0 0
  %559 = vmatprep.subr.bf16.mxu0 0
  %560 = vmatpush1.bf16.xpose.msra.mxu0 0
  %561 = vmatprep.subr.bf16.mxu0 0
  %562 = vmatpush1.bf16.xpose.msra.mxu0 0
  %563 = vmatprep.subr.bf16.mxu0 0
  %564 = vmatpush1.bf16.xpose.msra.mxu0 0
  %565 = vmatprep.subr.bf16.mxu0 0
  %566 = vmatpush1.bf16.xpose.msra.mxu0 0
  %567 = vmatprep.subr.bf16.mxu0 0
  %568 = vmatpush1.bf16.xpose.msra.mxu0 0
  %569 = vmatprep.subr.bf16.mxu0 0
  %570 = vmatpush1.bf16.xpose.msra.mxu0 0
  %571 = vmatprep.mubr.bf16.mxu0 0
  %572 = vmatmul.mubr.bf16.gmra.mrb[0].mxu0 %v516
  %v573 = vpop.f32.mrb[0].mxu0
  %v574 = vadd.f32 0.0, %v573
  %v575 = vpop.f32.mrb[0].mxu0
  %v576 = vpop.f32.mrb[0].mxu0
  %v577 = vadd.f32 0.0, %v576
  %v578 = vpop.f32.mrb[0].mxu0
  %579 = vmatprep.mubr.bf16.mxu0 0
  %580 = vmatmul.mubr.bf16.gmra.mrb[0].mxu0 %v519
  %v581 = vpop.f32.mrb[0].mxu0
  %v582 = vadd.f32 0.0, %v581
  %v583 = vpop.f32.mrb[0].mxu0
  %v584 = vpop.f32.mrb[0].mxu0
  %v585 = vadd.f32 0.0, %v584
  %v586 = vpop.f32.mrb[0].mxu0
  %587 = vmatprep.mubr.bf16.mxu0 0
  %588 = vmatmul.mubr.bf16.gmra.mrb[0].mxu0 %v522
  %v589 = vpop.f32.mrb[0].mxu0
  %v590 = vadd.f32 0.0, %v589
  %v591 = vpop.f32.mrb[0].mxu0
  %v592 = vpop.f32.mrb[0].mxu0
  %v593 = vadd.f32 0.0, %v592
  %v594 = vpop.f32.mrb[0].mxu0
  %595 = vmatprep.mubr.bf16.mxu0 0
  %596 = vmatmul.mubr.bf16.gmra.mrb[0].mxu0 %v525
  %v597 = vpop.f32.mrb[0].mxu0
  %v598 = vadd.f32 0.0, %v597
  %v599 = vpop.f32.mrb[0].mxu0
  %v600 = vpop.f32.mrb[0].mxu0
  %v601 = vadd.f32 0.0, %v600
  %v602 = vpop.f32.mrb[0].mxu0
  %603 = vdwg.mxu0
  %v604 = vmul.f32 %v485, 0.25
  %v605 = vmul.f32 %v488, 0.25
  %v606 = vmul.f32 %v493, 0.25
  %v607 = vmul.f32 %v496, 0.25
  %v608 = vmul.f32 %v501, 0.25
  %v609 = vmul.f32 %v504, 0.25
  %v610 = vmul.f32 %v509, 0.25
  %v611 = vmul.f32 %v512, 0.25
  %v612 = vmul.f32 %v574, 0.25
  %v613 = vmul.f32 %v577, 0.25
  %v614 = vmul.f32 %v582, 0.25
  %v615 = vmul.f32 %v585, 0.25
  %v616 = vmul.f32 %v590, 0.25
  %v617 = vmul.f32 %v593, 0.25
  %v618 = vmul.f32 %v598, 0.25
  %v619 = vmul.f32 %v601, 0.25
  %vm620 = vcmask 523264
  %v621 = vsel %vm620, %v604, -inf
  %622 = vmax.xlane.f32.xlu0 %v621
  %v623 = vpop.xlane.xlu0 %622
  %v624 = vsel %vm620, %v605, -inf
  %625 = vmax.xlane.f32.xlu0 %v624
  %v626 = vpop.xlane.xlu0 %625
  %v627 = vsel %vm620, %v606, -inf
  %628 = vmax.xlane.f32.xlu0 %v627
  %v629 = vpop.xlane.xlu0 %628
  %v630 = vsel %vm620, %v607, -inf
  %631 = vmax.xlane.f32.xlu0 %v630
  %v632 = vpop.xlane.xlu0 %631
  %v633 = vsel %vm620, %v608, -inf
  %634 = vmax.xlane.f32.xlu0 %v633
  %v635 = vpop.xlane.xlu0 %634
  %v636 = vsel %vm620, %v609, -inf
  %637 = vmax.xlane.f32.xlu0 %v636
  %v638 = vpop.xlane.xlu0 %637
  %v639 = vsel %vm620, %v610, -inf
  %640 = vmax.xlane.f32.xlu0 %v639
  %v641 = vpop.xlane.xlu0 %640
  %v642 = vsel %vm620, %v611, -inf
  %643 = vmax.xlane.f32.xlu0 %v642
  %v644 = vpop.xlane.xlu0 %643
  %v645 = vsel %vm620, %v612, -inf
  %646 = vmax.xlane.f32.xlu0 %v645
  %v647 = vpop.xlane.xlu0 %646
  %v648 = vsel %vm620, %v613, -inf
  %649 = vmax.xlane.f32.xlu0 %v648
  %v650 = vpop.xlane.xlu0 %649
  %v651 = vsel %vm620, %v614, -inf
  %652 = vmax.xlane.f32.xlu0 %v651
  %v653 = vpop.xlane.xlu0 %652
  %v654 = vsel %vm620, %v615, -inf
  %655 = vmax.xlane.f32.xlu0 %v654
  %v656 = vpop.xlane.xlu0 %655
  %v657 = vsel %vm620, %v616, -inf
  %658 = vmax.xlane.f32.xlu0 %v657
  %v659 = vpop.xlane.xlu0 %658
  %v660 = vsel %vm620, %v617, -inf
  %661 = vmax.xlane.f32.xlu0 %v660
  %v662 = vpop.xlane.xlu0 %661
  %v663 = vsel %vm620, %v618, -inf
  %664 = vmax.xlane.f32.xlu0 %v663
  %v665 = vpop.xlane.xlu0 %664
  %v666 = vsel %vm620, %v619, -inf
  %667 = vmax.xlane.f32.xlu0 %v666
  %v668 = vpop.xlane.xlu0 %667
  %v669 = vsub.f32 %v604, %v623
  %v670 = vsub.f32 %v605, %v626
  %v671 = vsub.f32 %v606, %v629
  %v672 = vsub.f32 %v607, %v632
  %v673 = vsub.f32 %v608, %v635
  %v674 = vsub.f32 %v609, %v638
  %v675 = vsub.f32 %v610, %v641
  %v676 = vsub.f32 %v611, %v644
  %v677 = vsub.f32 %v612, %v647
  %v678 = vsub.f32 %v613, %v650
  %v679 = vsub.f32 %v614, %v653
  %v680 = vsub.f32 %v615, %v656
  %v681 = vsub.f32 %v616, %v659
  %v682 = vsub.f32 %v617, %v662
  %v683 = vsub.f32 %v618, %v665
  %v684 = vsub.f32 %v619, %v668
  %v685 = vmul.f32 %v669, 1.442695
  %v686 = vpow.pop %v685
  %v687 = vmul.f32 %v670, 1.442695
  %v688 = vpow.pop %v687
  %v689 = vmul.f32 %v671, 1.442695
  %v690 = vpow.pop %v689
  %v691 = vmul.f32 %v672, 1.442695
  %v692 = vpow.pop %v691
  %v693 = vmul.f32 %v673, 1.442695
  %v694 = vpow.pop %v693
  %v695 = vmul.f32 %v674, 1.442695
  %v696 = vpow.pop %v695
  %v697 = vmul.f32 %v675, 1.442695
  %v698 = vpow.pop %v697
  %v699 = vmul.f32 %v676, 1.442695
  %v700 = vpow.pop %v699
  %v701 = vmul.f32 %v677, 1.442695
  %v702 = vpow.pop %v701
  %v703 = vmul.f32 %v678, 1.442695
  %v704 = vpow.pop %v703
  %v705 = vmul.f32 %v679, 1.442695
  %v706 = vpow.pop %v705
  %v707 = vmul.f32 %v680, 1.442695
  %v708 = vpow.pop %v707
  %v709 = vmul.f32 %v681, 1.442695
  %v710 = vpow.pop %v709
  %v711 = vmul.f32 %v682, 1.442695
  %v712 = vpow.pop %v711
  %v713 = vmul.f32 %v683, 1.442695
  %v714 = vpow.pop %v713
  %v715 = vmul.f32 %v684, 1.442695
  %v716 = vpow.pop %v715
  %v717 = vsel %vm620, %v686, 0.0
  %718 = vadd.xlane.f32.xlu0 %v717
  %v719 = vpop.xlane.xlu0 %718
  %v720 = vsel %vm620, %v688, 0.0
  %721 = vadd.xlane.f32.xlu0 %v720
  %v722 = vpop.xlane.xlu0 %721
  %v723 = vsel %vm620, %v690, 0.0
  %724 = vadd.xlane.f32.xlu0 %v723
  %v725 = vpop.xlane.xlu0 %724
  %v726 = vsel %vm620, %v692, 0.0
  %727 = vadd.xlane.f32.xlu0 %v726
  %v728 = vpop.xlane.xlu0 %727
  %v729 = vsel %vm620, %v694, 0.0
  %730 = vadd.xlane.f32.xlu0 %v729
  %v731 = vpop.xlane.xlu0 %730
  %v732 = vsel %vm620, %v696, 0.0
  %733 = vadd.xlane.f32.xlu0 %v732
  %v734 = vpop.xlane.xlu0 %733
  %v735 = vsel %vm620, %v698, 0.0
  %736 = vadd.xlane.f32.xlu0 %v735
  %v737 = vpop.xlane.xlu0 %736
  %v738 = vsel %vm620, %v700, 0.0
  %739 = vadd.xlane.f32.xlu0 %v738
  %v740 = vpop.xlane.xlu0 %739
  %v741 = vsel %vm620, %v702, 0.0
  %742 = vadd.xlane.f32.xlu0 %v741
  %v743 = vpop.xlane.xlu0 %742
  %v744 = vsel %vm620, %v704, 0.0
  %745 = vadd.xlane.f32.xlu0 %v744
  %v746 = vpop.xlane.xlu0 %745
  %v747 = vsel %vm620, %v706, 0.0
  %748 = vadd.xlane.f32.xlu0 %v747
  %v749 = vpop.xlane.xlu0 %748
  %v750 = vsel %vm620, %v708, 0.0
  %751 = vadd.xlane.f32.xlu0 %v750
  %v752 = vpop.xlane.xlu0 %751
  %v753 = vsel %vm620, %v710, 0.0
  %754 = vadd.xlane.f32.xlu0 %v753
  %v755 = vpop.xlane.xlu0 %754
  %v756 = vsel %vm620, %v712, 0.0
  %757 = vadd.xlane.f32.xlu0 %v756
  %v758 = vpop.xlane.xlu0 %757
  %v759 = vsel %vm620, %v714, 0.0
  %760 = vadd.xlane.f32.xlu0 %v759
  %v761 = vpop.xlane.xlu0 %760
  %v762 = vsel %vm620, %v716, 0.0
  %763 = vadd.xlane.f32.xlu0 %v762
  %v764 = vpop.xlane.xlu0 %763
  %v765 = vrcp.pop %v719
  %v766 = vrcp.pop %v722
  %v767 = vrcp.pop %v725
  %v768 = vrcp.pop %v728
  %v769 = vrcp.pop %v731
  %v770 = vrcp.pop %v734
  %v771 = vrcp.pop %v737
  %v772 = vrcp.pop %v740
  %v773 = vrcp.pop %v743
  %v774 = vrcp.pop %v746
  %v775 = vrcp.pop %v749
  %v776 = vrcp.pop %v752
  %v777 = vrcp.pop %v755
  %v778 = vrcp.pop %v758
  %v779 = vrcp.pop %v761
  %v780 = vrcp.pop %v764
  %v781 = vmul.f32 %v686, %v765
  %v782 = vmul.f32 %v688, %v766
  %v783 = vmul.f32 %v690, %v767
  %v784 = vmul.f32 %v692, %v768
  %v785 = vmul.f32 %v694, %v769
  %v786 = vmul.f32 %v696, %v770
  %v787 = vmul.f32 %v698, %v771
  %v788 = vmul.f32 %v700, %v772
  %v789 = vmul.f32 %v702, %v773
  %v790 = vmul.f32 %v704, %v774
  %v791 = vmul.f32 %v706, %v775
  %v792 = vmul.f32 %v708, %v776
  %v793 = vmul.f32 %v710, %v777
  %v794 = vmul.f32 %v712, %v778
  %v795 = vmul.f32 %v714, %v779
  %v796 = vmul.f32 %v716, %v780
  %v797 = vpack.c.bf16 %v782, %v781
  %v798 = vpack.c.bf16 %v784, %v783
  %v799 = vpack.c.bf16 %v786, %v785
  %v800 = vpack.c.bf16 %v788, %v787
  %v801 = vpack.c.bf16 %v790, %v789
  %v802 = vpack.c.bf16 %v792, %v791
  %v803 = vpack.c.bf16 %v794, %v793
  %v804 = vpack.c.bf16 %v796, %v795
  %v805 = vpack.c.bf16 %v351, %v348
  %v806 = vpack.c.bf16 %v359, %v356
  %v807 = vpack.c.bf16 %v367, %v364
  %v808 = vpack.c.bf16 %v375, %v372
  %v809 = vpack.c.bf16 %v383, %v380
  %v810 = vpack.c.bf16 %v391, %v388
  %v811 = vpack.c.bf16 %v399, %v396
  %v812 = vpack.c.bf16 %v407, %v404
  %v814 = vsel %vm620, %v797, 0
  %v817 = vsel %vm620, %v798, 0
  %v820 = vsel %vm620, %v799, 0
  %v823 = vsel %vm620, %v800, 0
  %825 = vmatprep.subr.bf16.mxu0 0
  %826 = vmatpush1.bf16.msra.mxu0 %v805
  %827 = vmatprep.subr.bf16.mxu0 0
  %828 = vmatpush1.bf16.msra.mxu0 %v806
  %829 = vmatprep.subr.bf16.mxu0 0
  %830 = vmatpush1.bf16.msra.mxu0 %v807
  %831 = vmatprep.subr.bf16.mxu0 0
  %832 = vmatpush1.bf16.msra.mxu0 %v808
  %833 = vmatprep.subr.bf16.mxu0 0
  %834 = vmatpush1.bf16.msra.mxu0 0
  %835 = vmatprep.subr.bf16.mxu0 0
  %836 = vmatpush1.bf16.msra.mxu0 0
  %837 = vmatprep.subr.bf16.mxu0 0
  %838 = vmatpush1.bf16.msra.mxu0 0
  %839 = vmatprep.subr.bf16.mxu0 0
  %840 = vmatpush1.bf16.msra.mxu0 0
  %841 = vmatprep.subr.bf16.mxu0 0
  %842 = vmatpush1.bf16.msra.mxu0 0
  %843 = vmatprep.subr.bf16.mxu0 0
  %844 = vmatpush1.bf16.msra.mxu0 0
  %845 = vmatprep.subr.bf16.mxu0 0
  %846 = vmatpush1.bf16.msra.mxu0 0
  %847 = vmatprep.subr.bf16.mxu0 0
  %848 = vmatpush1.bf16.msra.mxu0 0
  %849 = vmatprep.subr.bf16.mxu0 0
  %850 = vmatpush1.bf16.msra.mxu0 0
  %851 = vmatprep.subr.bf16.mxu0 0
  %852 = vmatpush1.bf16.msra.mxu0 0
  %853 = vmatprep.subr.bf16.mxu0 0
  %854 = vmatpush1.bf16.msra.mxu0 0
  %855 = vmatprep.subr.bf16.mxu0 0
  %856 = vmatpush1.bf16.msra.mxu0 0
  %857 = vmatprep.mubr.bf16.mxu0 0
  %858 = vmatmul.mubr.bf16.gmra.mrb[0].mxu0 %v814
  %v859 = vpop.f32.mrb[0].mxu0
  %v860 = vadd.f32 0.0, %v859
  %v861 = vpop.f32.mrb[0].mxu0
  %v862 = vpop.f32.mrb[0].mxu0
  %v863 = vadd.f32 0.0, %v862
  %v864 = vpop.f32.mrb[0].mxu0
  %865 = vmatprep.mubr.bf16.mxu0 0
  %866 = vmatmul.mubr.bf16.gmra.mrb[0].mxu0 %v817
  %v867 = vpop.f32.mrb[0].mxu0
  %v868 = vadd.f32 0.0, %v867
  %v869 = vpop.f32.mrb[0].mxu0
  %v870 = vpop.f32.mrb[0].mxu0
  %v871 = vadd.f32 0.0, %v870
  %v872 = vpop.f32.mrb[0].mxu0
  %873 = vmatprep.mubr.bf16.mxu0 0
  %874 = vmatmul.mubr.bf16.gmra.mrb[0].mxu0 %v820
  %v875 = vpop.f32.mrb[0].mxu0
  %v876 = vadd.f32 0.0, %v875
  %v877 = vpop.f32.mrb[0].mxu0
  %v878 = vpop.f32.mrb[0].mxu0
  %v879 = vadd.f32 0.0, %v878
  %v880 = vpop.f32.mrb[0].mxu0
  %881 = vmatprep.mubr.bf16.mxu0 0
  %882 = vmatmul.mubr.bf16.gmra.mrb[0].mxu0 %v823
  %v883 = vpop.f32.mrb[0].mxu0
  %v884 = vadd.f32 0.0, %v883
  %v885 = vpop.f32.mrb[0].mxu0
  %v886 = vpop.f32.mrb[0].mxu0
  %v887 = vadd.f32 0.0, %v886
  %v888 = vpop.f32.mrb[0].mxu0
  %889 = vdwg.mxu0
  %v891 = vsel %vm620, %v801, 0
  %v894 = vsel %vm620, %v802, 0
  %v897 = vsel %vm620, %v803, 0
  %v900 = vsel %vm620, %v804, 0
  %902 = vmatprep.subr.bf16.mxu0 0
  %903 = vmatpush1.bf16.msra.mxu0 %v809
  %904 = vmatprep.subr.bf16.mxu0 0
  %905 = vmatpush1.bf16.msra.mxu0 %v810
  %906 = vmatprep.subr.bf16.mxu0 0
  %907 = vmatpush1.bf16.msra.mxu0 %v811
  %908 = vmatprep.subr.bf16.mxu0 0
  %909 = vmatpush1.bf16.msra.mxu0 %v812
  %910 = vmatprep.subr.bf16.mxu0 0
  %911 = vmatpush1.bf16.msra.mxu0 0
  %912 = vmatprep.subr.bf16.mxu0 0
  %913 = vmatpush1.bf16.msra.mxu0 0
  %914 = vmatprep.subr.bf16.mxu0 0
  %915 = vmatpush1.bf16.msra.mxu0 0
  %916 = vmatprep.subr.bf16.mxu0 0
  %917 = vmatpush1.bf16.msra.mxu0 0
  %918 = vmatprep.subr.bf16.mxu0 0
  %919 = vmatpush1.bf16.msra.mxu0 0
  %920 = vmatprep.subr.bf16.mxu0 0
  %921 = vmatpush1.bf16.msra.mxu0 0
  %922 = vmatprep.subr.bf16.mxu0 0
  %923 = vmatpush1.bf16.msra.mxu0 0
  %924 = vmatprep.subr.bf16.mxu0 0
  %925 = vmatpush1.bf16.msra.mxu0 0
  %926 = vmatprep.subr.bf16.mxu0 0
  %927 = vmatpush1.bf16.msra.mxu0 0
  %928 = vmatprep.subr.bf16.mxu0 0
  %929 = vmatpush1.bf16.msra.mxu0 0
  %930 = vmatprep.subr.bf16.mxu0 0
  %931 = vmatpush1.bf16.msra.mxu0 0
  %932 = vmatprep.subr.bf16.mxu0 0
  %933 = vmatpush1.bf16.msra.mxu0 0
  %934 = vmatprep.mubr.bf16.mxu0 0
  %935 = vmatmul.mubr.bf16.gmra.mrb[0].mxu0 %v891
  %v936 = vpop.f32.mrb[0].mxu0
  %v937 = vadd.f32 0.0, %v936
  %v938 = vpop.f32.mrb[0].mxu0
  %v939 = vpop.f32.mrb[0].mxu0
  %v940 = vadd.f32 0.0, %v939
  %v941 = vpop.f32.mrb[0].mxu0
  %942 = vmatprep.mubr.bf16.mxu0 0
  %943 = vmatmul.mubr.bf16.gmra.mrb[0].mxu0 %v894
  %v944 = vpop.f32.mrb[0].mxu0
  %v945 = vadd.f32 0.0, %v944
  %v946 = vpop.f32.mrb[0].mxu0
  %v947 = vpop.f32.mrb[0].mxu0
  %v948 = vadd.f32 0.0, %v947
  %v949 = vpop.f32.mrb[0].mxu0
  %950 = vmatprep.mubr.bf16.mxu0 0
  %951 = vmatmul.mubr.bf16.gmra.mrb[0].mxu0 %v897
  %v952 = vpop.f32.mrb[0].mxu0
  %v953 = vadd.f32 0.0, %v952
  %v954 = vpop.f32.mrb[0].mxu0
  %v955 = vpop.f32.mrb[0].mxu0
  %v956 = vadd.f32 0.0, %v955
  %v957 = vpop.f32.mrb[0].mxu0
  %958 = vmatprep.mubr.bf16.mxu0 0
  %959 = vmatmul.mubr.bf16.gmra.mrb[0].mxu0 %v900
  %v960 = vpop.f32.mrb[0].mxu0
  %v961 = vadd.f32 0.0, %v960
  %v962 = vpop.f32.mrb[0].mxu0
  %v963 = vpop.f32.mrb[0].mxu0
  %v964 = vadd.f32 0.0, %v963
  %v965 = vpop.f32.mrb[0].mxu0
  %966 = vdwg.mxu0
  %v967 = vpack.c.bf16 %v863, %v860
  %v968 = vpack.c.bf16 %v871, %v868
  %v969 = vpack.c.bf16 %v879, %v876
  %v970 = vpack.c.bf16 %v887, %v884
  %v971 = vpack.c.bf16 %v940, %v937
  %v972 = vpack.c.bf16 %v948, %v945
  %v973 = vpack.c.bf16 %v956, %v953
  %v974 = vpack.c.bf16 %v964, %v961
  %v975 = vld [vmem:[%s3] sm:$0xf]
  %v976 = vld [vmem:[%s3 + $0x4] sm:$0xf]
  %v977 = vld [vmem:[%s4] sm:$0x1]
  %v979 = vlaneseq
  %v980 = vshrl.u32 %v979, 7
  %v981 = vsub.s32 0, %v980
  %v982 = vrot.slane %v977, %v981
  %v986 = vunpack.c.l.b16 %v975
  %v987 = vunpack.c.l.b16 %v976
  %v988 = vpack.c.b16 %v987, %v986
  %v991 = vsel %vm60, %v967, 0
  %v994 = vsel %vm60, %v968, 0
  %v997 = vsel %vm60, %v969, 0
  %v1000 = vsel %vm60, %v970, 0
  %v1003 = vsel %vm60, %v971, 0
  %v1006 = vsel %vm60, %v972, 0
  %v1009 = vsel %vm60, %v973, 0
  %v1012 = vsel %vm60, %v974, 0
  %1014 = vmatprep.subr.bf16.mxu0 0
  %1015 = vmatpush1.bf16.msra.mxu0 %v988
  %1016 = vmatprep.subr.bf16.mxu0 0
  %1017 = vmatpush1.bf16.msra.mxu0 0
  %1018 = vmatprep.subr.bf16.mxu0 0
  %1019 = vmatpush1.bf16.msra.mxu0 0
  %1020 = vmatprep.subr.bf16.mxu0 0
  %1021 = vmatpush1.bf16.msra.mxu0 0
  %1022 = vmatprep.subr.bf16.mxu0 0
  %1023 = vmatpush1.bf16.msra.mxu0 0
  %1024 = vmatprep.subr.bf16.mxu0 0
  %1025 = vmatpush1.bf16.msra.mxu0 0
  %1026 = vmatprep.subr.bf16.mxu0 0
  %1027 = vmatpush1.bf16.msra.mxu0 0
  %1028 = vmatprep.subr.bf16.mxu0 0
  %1029 = vmatpush1.bf16.msra.mxu0 0
  %1030 = vmatprep.subr.bf16.mxu0 0
  %1031 = vmatpush1.bf16.msra.mxu0 0
  %1032 = vmatprep.subr.bf16.mxu0 0
  %1033 = vmatpush1.bf16.msra.mxu0 0
  %1034 = vmatprep.subr.bf16.mxu0 0
  %1035 = vmatpush1.bf16.msra.mxu0 0
  %1036 = vmatprep.subr.bf16.mxu0 0
  %1037 = vmatpush1.bf16.msra.mxu0 0
  %1038 = vmatprep.subr.bf16.mxu0 0
  %1039 = vmatpush1.bf16.msra.mxu0 0
  %1040 = vmatprep.subr.bf16.mxu0 0
  %1041 = vmatpush1.bf16.msra.mxu0 0
  %1042 = vmatprep.subr.bf16.mxu0 0
  %1043 = vmatpush1.bf16.msra.mxu0 0
  %1044 = vmatprep.subr.bf16.mxu0 0
  %1045 = vmatpush1.bf16.msra.mxu0 0
  %1046 = vmatprep.mubr.bf16.mxu0 0
  %1047 = vmatmul.mubr.bf16.gmra.mrb[0].mxu0 %v991
  %v1048 = vpop.f32.mrb[0].mxu0
  %v1049 = vadd.f32 %v982, %v1048
  %v1050 = vpop.f32.mrb[0].mxu0
  %v1051 = vpop.f32.mrb[0].mxu0
  %v1052 = vadd.f32 %v982, %v1051
  %v1053 = vpop.f32.mrb[0].mxu0
  %1054 = vmatprep.mubr.bf16.mxu0 0
  %1055 = vmatmul.mubr.bf16.gmra.mrb[0].mxu0 %v994
  %v1056 = vpop.f32.mrb[0].mxu0
  %v1057 = vadd.f32 %v982, %v1056
  %v1058 = vpop.f32.mrb[0].mxu0
  %v1059 = vpop.f32.mrb[0].mxu0
  %v1060 = vadd.f32 %v982, %v1059
  %v1061 = vpop.f32.mrb[0].mxu0
  %1062 = vmatprep.mubr.bf16.mxu0 0
  %1063 = vmatmul.mubr.bf16.gmra.mrb[0].mxu0 %v997
  %v1064 = vpop.f32.mrb[0].mxu0
  %v1065 = vadd.f32 %v982, %v1064
  %v1066 = vpop.f32.mrb[0].mxu0
  %v1067 = vpop.f32.mrb[0].mxu0
  %v1068 = vadd.f32 %v982, %v1067
  %v1069 = vpop.f32.mrb[0].mxu0
  %1070 = vmatprep.mubr.bf16.mxu0 0
  %1071 = vmatmul.mubr.bf16.gmra.mrb[0].mxu0 %v1000
  %v1072 = vpop.f32.mrb[0].mxu0
  %v1073 = vadd.f32 %v982, %v1072
  %v1074 = vpop.f32.mrb[0].mxu0
  %v1075 = vpop.f32.mrb[0].mxu0
  %v1076 = vadd.f32 %v982, %v1075
  %v1077 = vpop.f32.mrb[0].mxu0
  %1078 = vmatprep.mubr.bf16.mxu0 0
  %1079 = vmatmul.mubr.bf16.gmra.mrb[0].mxu0 %v1003
  %v1080 = vpop.f32.mrb[0].mxu0
  %v1081 = vadd.f32 %v982, %v1080
  %v1082 = vpop.f32.mrb[0].mxu0
  %v1083 = vpop.f32.mrb[0].mxu0
  %v1084 = vadd.f32 %v982, %v1083
  %v1085 = vpop.f32.mrb[0].mxu0
  %1086 = vmatprep.mubr.bf16.mxu0 0
  %1087 = vmatmul.mubr.bf16.gmra.mrb[0].mxu0 %v1006
  %v1088 = vpop.f32.mrb[0].mxu0
  %v1089 = vadd.f32 %v982, %v1088
  %v1090 = vpop.f32.mrb[0].mxu0
  %v1091 = vpop.f32.mrb[0].mxu0
  %v1092 = vadd.f32 %v982, %v1091
  %v1093 = vpop.f32.mrb[0].mxu0
  %1094 = vmatprep.mubr.bf16.mxu0 0
  %1095 = vmatmul.mubr.bf16.gmra.mrb[0].mxu0 %v1009
  %v1096 = vpop.f32.mrb[0].mxu0
  %v1097 = vadd.f32 %v982, %v1096
  %v1098 = vpop.f32.mrb[0].mxu0
  %v1099 = vpop.f32.mrb[0].mxu0
  %v1100 = vadd.f32 %v982, %v1099
  %v1101 = vpop.f32.mrb[0].mxu0
  %1102 = vmatprep.mubr.bf16.mxu0 0
  %1103 = vmatmul.mubr.bf16.gmra.mrb[0].mxu0 %v1012
  %v1104 = vpop.f32.mrb[0].mxu0
  %v1105 = vadd.f32 %v982, %v1104
  %v1106 = vpop.f32.mrb[0].mxu0
  %v1107 = vpop.f32.mrb[0].mxu0
  %v1108 = vadd.f32 %v982, %v1107
  %v1109 = vpop.f32.mrb[0].mxu0
  %1110 = vdwg.mxu0
  %v1111 = vadd.f32 %v21, %v1049
  %v1112 = vadd.f32 %v22, %v1052
  %v1113 = vadd.f32 %v23, %v1057
  %v1114 = vadd.f32 %v24, %v1060
  %v1115 = vadd.f32 %v25, %v1065
  %v1116 = vadd.f32 %v26, %v1068
  %v1117 = vadd.f32 %v27, %v1073
  %v1118 = vadd.f32 %v28, %v1076
  %v1119 = vadd.f32 %v29, %v1081
  %v1120 = vadd.f32 %v30, %v1084
  %v1121 = vadd.f32 %v31, %v1089
  %v1122 = vadd.f32 %v32, %v1092
  %v1123 = vadd.f32 %v33, %v1097
  %v1124 = vadd.f32 %v34, %v1100
  %v1125 = vadd.f32 %v35, %v1105
  %v1126 = vadd.f32 %v36, %v1108
  %1127 = vst.msk [vmem:[%s5] sm:$0xff] %vm60, %v1111
  %1128 = vst.msk [vmem:[%s5 + $0x8] sm:$0xff] %vm60, %v1112
  %1129 = vst.msk [vmem:[%s5 + $0x10] sm:$0xff] %vm60, %v1113
  %1130 = vst.msk [vmem:[%s5 + $0x18] sm:$0xff] %vm60, %v1114
  %1131 = vst.msk [vmem:[%s5 + $0x20] sm:$0xff] %vm60, %v1115
  %1132 = vst.msk [vmem:[%s5 + $0x28] sm:$0xff] %vm60, %v1116
  %1133 = vst.msk [vmem:[%s5 + $0x30] sm:$0xff] %vm60, %v1117
  %1134 = vst.msk [vmem:[%s5 + $0x38] sm:$0xff] %vm60, %v1118
  %1135 = vst.msk [vmem:[%s5 + $0x40] sm:$0xff] %vm60, %v1119
  %1136 = vst.msk [vmem:[%s5 + $0x48] sm:$0xff] %vm60, %v1120
  %1137 = vst.msk [vmem:[%s5 + $0x50] sm:$0xff] %vm60, %v1121
  %1138 = vst.msk [vmem:[%s5 + $0x58] sm:$0xff] %vm60, %v1122
  %1139 = vst.msk [vmem:[%s5 + $0x60] sm:$0xff] %vm60, %v1123
  %1140 = vst.msk [vmem:[%s5 + $0x68] sm:$0xff] %vm60, %v1124
  %1141 = vst.msk [vmem:[%s5 + $0x70] sm:$0xff] %vm60, %v1125
  %1142 = vst.msk [vmem:[%s5 + $0x78] sm:$0xff] %vm60, %v1126
  // Predicated region
  $region22: #{mobilevit_track_forward.11} parent=0 // pred_check
    _
  $region23: #{mobilevit_track_forward.11} parent=0 // pred_check_branch
    %1144 = sbr.rel (0) target = $region25
  $region24: #{mobilevit_track_forward.11} parent=0 // pred_region
    _
  $region25: #{mobilevit_track_forward.11} parent=0 // pred_fallthru
    _
  // Predicated region
  $region26: #{mobilevit_track_forward.11} parent=0 // pred_check
    _
  $region27: #{mobilevit_track_forward.11} parent=0 // pred_check_branch
    %1146 = sbr.rel (0) target = $region29
  $region28: #{mobilevit_track_forward.11} parent=0 // pred_region
    _
  $region29: #{mobilevit_track_forward.11} parent=0 // pred_fallthru
    _

// kernel: mobilevit_track_forward.13
$region0: #{mobilevit_track_forward.13}
  #allocation0 [shape = 'u32[]', space=smem, size = 0x4, offset = 0x4, fixed_abs, tag = 'smem constant byte address 0x4 - core index']
  #allocation1 [shape = 'u32[144,128]{1,0:T(1,128)}', space=vmem, size = 0x12000, scoped, tag = 'internal scratch']
  %s0 = inlined_call_operand.vmem [shape: bf16[160,16], index: 0, kind: input, shape index: {}]
  %s1 = inlined_call_operand.vmem [shape: bf16[16,128], index: 1, kind: input, shape index: {}]
  %s2 = inlined_call_operand.vmem [shape: f32[1,128], index: 2, kind: input, shape index: {}]
  %s3 = inlined_call_operand.vmem [shape: f32[160,128], index: 3, kind: output, shape index: {}]
  %s4 = sld [smem:[#allocation0]]
  $region22: #{mobilevit_track_forward.13} parent=0
    _
  %s6 = ssub.s32 1, %s4
  %s7 = scalar_select 0, %s6, %s4
  // Predicated region
  $region2: #{mobilevit_track_forward.13} parent=0 // pred_check
    _
  $region3: #{mobilevit_track_forward.13} parent=0 // pred_check_branch
    %9 = sbr.rel (0) target = $region5
  $region4: #{mobilevit_track_forward.13} parent=0 // pred_region
    _
  $region5: #{mobilevit_track_forward.13} parent=0 // pred_fallthru
    _
  // Predicated region
  $region6: #{mobilevit_track_forward.13} parent=0 // pred_check
    _
  $region7: #{mobilevit_track_forward.13} parent=0 // pred_check_branch
    %11 = sbr.rel (0) target = $region9
  $region8: #{mobilevit_track_forward.13} parent=0 // pred_region
    _
  $region9: #{mobilevit_track_forward.13} parent=0 // pred_fallthru
    _
  // Predicated region
  $region10: #{mobilevit_track_forward.13} parent=0 // pred_check
    _
  $region11: #{mobilevit_track_forward.13} parent=0 // pred_check_branch
    %13 = sbr.rel (0) target = $region13
  $region12: #{mobilevit_track_forward.13} parent=0 // pred_region
    _
  $region13: #{mobilevit_track_forward.13} parent=0 // pred_fallthru
    _
  %v15 = vld [vmem:[%s0] sm:$0xf]
  %v16 = vld [vmem:[%s0 + $0x4] sm:$0xf]
  %v17 = vld [vmem:[%s0 + $0x8] sm:$0xf]
  %v18 = vld [vmem:[%s0 + $0xc] sm:$0xf]
  %v19 = vld [vmem:[%s0 + $0x10] sm:$0xf]
  %v20 = vld [vmem:[%s0 + $0x14] sm:$0xf]
  %v21 = vld [vmem:[%s0 + $0x18] sm:$0xf]
  %v22 = vld [vmem:[%s0 + $0x1c] sm:$0xf]
  %v23 = vld [vmem:[%s0 + $0x20] sm:$0xf]
  %v24 = vld [vmem:[%s0 + $0x24] sm:$0xf]
  %v25 = vld [vmem:[%s0 + $0x28] sm:$0xf]
  %v26 = vld [vmem:[%s0 + $0x2c] sm:$0xf]
  %v27 = vld [vmem:[%s0 + $0x30] sm:$0xf]
  %v28 = vld [vmem:[%s0 + $0x34] sm:$0xf]
  %v29 = vld [vmem:[%s0 + $0x38] sm:$0xf]
  %v30 = vld [vmem:[%s0 + $0x3c] sm:$0xf]
  %v31 = vld [vmem:[%s0 + $0x40] sm:$0xf]
  %v32 = vld [vmem:[%s0 + $0x44] sm:$0xf]
  %v33 = vld [vmem:[%s0 + $0x48] sm:$0xf]
  %v34 = vld [vmem:[%s0 + $0x4c] sm:$0xf]
  %v35 = vld [vmem:[%s1] sm:$0xf]
  %v36 = vld [vmem:[%s1 + $0x4] sm:$0xf]
  %v37 = vld [vmem:[%s2] sm:$0x1]
  %v39 = vlaneseq
  %v40 = vshrl.u32 %v39, 7
  %v41 = vsub.s32 0, %v40
  %v42 = vrot.slane %v37, %v41
  %v64 = vunpack.c.l.b16 %v15
  %v65 = vunpack.c.l.b16 %v16
  %v66 = vunpack.c.l.b16 %v17
  %v67 = vunpack.c.l.b16 %v18
  %v68 = vunpack.c.l.b16 %v19
  %v69 = vunpack.c.l.b16 %v20
  %v70 = vunpack.c.l.b16 %v21
  %v71 = vunpack.c.l.b16 %v22
  %v72 = vunpack.c.l.b16 %v23
  %v73 = vunpack.c.l.b16 %v24
  %v74 = vunpack.c.l.b16 %v25
  %v75 = vunpack.c.l.b16 %v26
  %v76 = vunpack.c.l.b16 %v27
  %v77 = vunpack.c.l.b16 %v28
  %v78 = vunpack.c.l.b16 %v29
  %v79 = vunpack.c.l.b16 %v30
  %v80 = vunpack.c.l.b16 %v31
  %v81 = vunpack.c.l.b16 %v32
  %v82 = vunpack.c.l.b16 %v33
  %v83 = vunpack.c.l.b16 %v34
  %v84 = vpack.c.b16 %v65, %v64
  %v85 = vpack.c.b16 %v67, %v66
  %v86 = vpack.c.b16 %v69, %v68
  %v87 = vpack.c.b16 %v71, %v70
  %v88 = vpack.c.b16 %v73, %v72
  %v89 = vpack.c.b16 %v75, %v74
  %v90 = vpack.c.b16 %v77, %v76
  %v91 = vpack.c.b16 %v79, %v78
  %v92 = vpack.c.b16 %v81, %v80
  %v93 = vpack.c.b16 %v83, %v82
  %v96 = vunpack.c.l.b16 %v35
  %v97 = vunpack.c.l.b16 %v36
  %v98 = vpack.c.b16 %v97, %v96
  %vm100 = vcmask 130048
  %v102 = vsel %vm100, %v84, 0
  %v105 = vsel %vm100, %v85, 0
  %v108 = vsel %vm100, %v86, 0
  %v111 = vsel %vm100, %v87, 0
  %v114 = vsel %vm100, %v88, 0
  %v117 = vsel %vm100, %v89, 0
  %v120 = vsel %vm100, %v90, 0
  %v123 = vsel %vm100, %v91, 0
  %v126 = vsel %vm100, %v92, 0
  %v129 = vsel %vm100, %v93, 0
  %131 = vmatprep.subr.bf16.mxu0 0
  %132 = vmatpush1.bf16.msra.mxu0 %v98
  %133 = vmatprep.subr.bf16.mxu0 0
  %134 = vmatpush1.bf16.msra.mxu0 0
  %135 = vmatprep.subr.bf16.mxu0 0
  %136 = vmatpush1.bf16.msra.mxu0 0
  %137 = vmatprep.subr.bf16.mxu0 0
  %138 = vmatpush1.bf16.msra.mxu0 0
  %139 = vmatprep.subr.bf16.mxu0 0
  %140 = vmatpush1.bf16.msra.mxu0 0
  %141 = vmatprep.subr.bf16.mxu0 0
  %142 = vmatpush1.bf16.msra.mxu0 0
  %143 = vmatprep.subr.bf16.mxu0 0
  %144 = vmatpush1.bf16.msra.mxu0 0
  %145 = vmatprep.subr.bf16.mxu0 0
  %146 = vmatpush1.bf16.msra.mxu0 0
  %147 = vmatprep.subr.bf16.mxu0 0
  %148 = vmatpush1.bf16.msra.mxu0 0
  %149 = vmatprep.subr.bf16.mxu0 0
  %150 = vmatpush1.bf16.msra.mxu0 0
  %151 = vmatprep.subr.bf16.mxu0 0
  %152 = vmatpush1.bf16.msra.mxu0 0
  %153 = vmatprep.subr.bf16.mxu0 0
  %154 = vmatpush1.bf16.msra.mxu0 0
  %155 = vmatprep.subr.bf16.mxu0 0
  %156 = vmatpush1.bf16.msra.mxu0 0
  %157 = vmatprep.subr.bf16.mxu0 0
  %158 = vmatpush1.bf16.msra.mxu0 0
  %159 = vmatprep.subr.bf16.mxu0 0
  %160 = vmatpush1.bf16.msra.mxu0 0
  %161 = vmatprep.subr.bf16.mxu0 0
  %162 = vmatpush1.bf16.msra.mxu0 0
  %163 = vmatprep.mubr.bf16.mxu0 0
  %164 = vmatmul.mubr.bf16.gmra.mrb[0].mxu0 %v102
  %v165 = vpop.f32.mrb[0].mxu0
  %v166 = vadd.f32 %v42, %v165
  %v167 = vpop.f32.mrb[0].mxu0
  %v168 = vpop.f32.mrb[0].mxu0
  %v169 = vadd.f32 %v42, %v168
  %v170 = vpop.f32.mrb[0].mxu0
  %171 = vmatprep.mubr.bf16.mxu0 0
  %172 = vmatmul.mubr.bf16.gmra.mrb[0].mxu0 %v105
  %v173 = vpop.f32.mrb[0].mxu0
  %v174 = vadd.f32 %v42, %v173
  %v175 = vpop.f32.mrb[0].mxu0
  %v176 = vpop.f32.mrb[0].mxu0
  %v177 = vadd.f32 %v42, %v176
  %v178 = vpop.f32.mrb[0].mxu0
  %179 = vmatprep.mubr.bf16.mxu0 0
  %180 = vmatmul.mubr.bf16.gmra.mrb[0].mxu0 %v108
  %v181 = vpop.f32.mrb[0].mxu0
  %v182 = vadd.f32 %v42, %v181
  %v183 = vpop.f32.mrb[0].mxu0
  %v184 = vpop.f32.mrb[0].mxu0
  %v185 = vadd.f32 %v42, %v184
  %v186 = vpop.f32.mrb[0].mxu0
  %187 = vmatprep.mubr.bf16.mxu0 0
  %188 = vmatmul.mubr.bf16.gmra.mrb[0].mxu0 %v111
  %v189 = vpop.f32.mrb[0].mxu0
  %v190 = vadd.f32 %v42, %v189
  %v191 = vpop.f32.mrb[0].mxu0
  %v192 = vpop.f32.mrb[0].mxu0
  %v193 = vadd.f32 %v42, %v192
  %v194 = vpop.f32.mrb[0].mxu0
  %195 = vmatprep.mubr.bf16.mxu0 0
  %196 = vmatmul.mubr.bf16.gmra.mrb[0].mxu0 %v114
  %v197 = vpop.f32.mrb[0].mxu0
  %v198 = vadd.f32 %v42, %v197
  %v199 = vpop.f32.mrb[0].mxu0
  %v200 = vpop.f32.mrb[0].mxu0
  %v201 = vadd.f32 %v42, %v200
  %v202 = vpop.f32.mrb[0].mxu0
  %203 = vmatprep.mubr.bf16.mxu0 0
  %204 = vmatmul.mubr.bf16.gmra.mrb[0].mxu0 %v117
  %v205 = vpop.f32.mrb[0].mxu0
  %v206 = vadd.f32 %v42, %v205
  %v207 = vpop.f32.mrb[0].mxu0
  %v208 = vpop.f32.mrb[0].mxu0
  %v209 = vadd.f32 %v42, %v208
  %v210 = vpop.f32.mrb[0].mxu0
  %211 = vmatprep.mubr.bf16.mxu0 0
  %212 = vmatmul.mubr.bf16.gmra.mrb[0].mxu0 %v120
  %v213 = vpop.f32.mrb[0].mxu0
  %v214 = vadd.f32 %v42, %v213
  %v215 = vpop.f32.mrb[0].mxu0
  %v216 = vpop.f32.mrb[0].mxu0
  %v217 = vadd.f32 %v42, %v216
  %v218 = vpop.f32.mrb[0].mxu0
  %219 = vmatprep.mubr.bf16.mxu0 0
  %220 = vmatmul.mubr.bf16.gmra.mrb[0].mxu0 %v123
  %v221 = vpop.f32.mrb[0].mxu0
  %v222 = vadd.f32 %v42, %v221
  %v223 = vpop.f32.mrb[0].mxu0
  %v224 = vpop.f32.mrb[0].mxu0
  %v225 = vadd.f32 %v42, %v224
  %v226 = vpop.f32.mrb[0].mxu0
  %227 = vmatprep.mubr.bf16.mxu0 0
  %228 = vmatmul.mubr.bf16.gmra.mrb[0].mxu0 %v126
  %v229 = vpop.f32.mrb[0].mxu0
  %v230 = vadd.f32 %v42, %v229
  %v231 = vpop.f32.mrb[0].mxu0
  %v232 = vpop.f32.mrb[0].mxu0
  %v233 = vadd.f32 %v42, %v232
  %v234 = vpop.f32.mrb[0].mxu0
  %235 = vmatprep.mubr.bf16.mxu0 0
  %236 = vmatmul.mubr.bf16.gmra.mrb[0].mxu0 %v129
  %v237 = vpop.f32.mrb[0].mxu0
  %v238 = vadd.f32 %v42, %v237
  %v239 = vpop.f32.mrb[0].mxu0
  %v240 = vpop.f32.mrb[0].mxu0
  %v241 = vadd.f32 %v42, %v240
  %v242 = vpop.f32.mrb[0].mxu0
  %243 = vdwg.mxu0
  %244 = vst [vmem:[%s3] sm:$0xff] %v166
  %245 = vst [vmem:[%s3 + $0x8] sm:$0xff] %v169
  %246 = vst [vmem:[%s3 + $0x10] sm:$0xff] %v174
  %247 = vst [vmem:[%s3 + $0x18] sm:$0xff] %v177
  %248 = vst [vmem:[%s3 + $0x20] sm:$0xff] %v182
  %249 = vst [vmem:[%s3 + $0x28] sm:$0xff] %v185
  %250 = vst [vmem:[%s3 + $0x30] sm:$0xff] %v190
  %251 = vst [vmem:[%s3 + $0x38] sm:$0xff] %v193
  %252 = vst [vmem:[%s3 + $0x40] sm:$0xff] %v198
  %253 = vst [vmem:[%s3 + $0x48] sm:$0xff] %v201
  %254 = vst [vmem:[%s3 + $0x50] sm:$0xff] %v206
  %255 = vst [vmem:[%s3 + $0x58] sm:$0xff] %v209
  %256 = vst [vmem:[%s3 + $0x60] sm:$0xff] %v214
  %257 = vst [vmem:[%s3 + $0x68] sm:$0xff] %v217
  %258 = vst [vmem:[%s3 + $0x70] sm:$0xff] %v222
  %259 = vst [vmem:[%s3 + $0x78] sm:$0xff] %v225
  %260 = vst [vmem:[%s3 + $0x80] sm:$0xff] %v230
  %261 = vst [vmem:[%s3 + $0x88] sm:$0xff] %v233
  %262 = vst [vmem:[%s3 + $0x90] sm:$0xff] %v238
  %263 = vst [vmem:[%s3 + $0x98] sm:$0xff] %v241
  // Predicated region
  $region14: #{mobilevit_track_forward.13} parent=0 // pred_check
    _
  $region15: #{mobilevit_track_forward.13} parent=0 // pred_check_branch
    %265 = sbr.rel (0) target = $region17
  $region16: #{mobilevit_track_forward.13} parent=0 // pred_region
    _
  $region17: #{mobilevit_track_forward.13} parent=0 // pred_fallthru
    _
  // Predicated region
  $region18: #{mobilevit_track_forward.13} parent=0 // pred_check
    _
  $region19: #{mobilevit_track_forward.13} parent=0 // pred_check_branch
    %267 = sbr.rel (0) target = $region21
  $region20: #{mobilevit_track_forward.13} parent=0 // pred_region
    _
  $region21: #{mobilevit_track_forward.13} parent=0 // pred_fallthru
    _

// kernel: mobilevit_track_forward.14
$region0: #{mobilevit_track_forward.14}
  #allocation0 [shape = 'u32[]', space=smem, size = 0x4, offset = 0x4, fixed_abs, tag = 'smem constant byte address 0x4 - core index']
  #allocation1 [shape = 'u32[144,128]{1,0:T(1,128)}', space=vmem, size = 0x12000, scoped, tag = 'internal scratch']
  %s0 = inlined_call_operand.vmem [shape: bf16[2,16,16], index: 0, kind: input, shape index: {}]
  %s1 = inlined_call_operand.vmem [shape: bf16[2,64,16], index: 1, kind: input, shape index: {}]
  %s2 = inlined_call_operand.vmem [shape: bf16[16,16], index: 2, kind: input, shape index: {}]
  %s3 = inlined_call_operand.vmem [shape: f32[1,1,16], index: 3, kind: input, shape index: {}]
  %s4 = inlined_call_operand.vmem [shape: f32[2,64,16], index: 4, kind: output, shape index: {}]
  %s5 = sld [smem:[#allocation0]]
  $region26: #{mobilevit_track_forward.14} parent=0
    _
  %s7 = ssub.s32 1, %s5
  %s8 = scalar_select 0, %s7, %s5
  // Predicated region
  $region2: #{mobilevit_track_forward.14} parent=0 // pred_check
    _
  $region3: #{mobilevit_track_forward.14} parent=0 // pred_check_branch
    %10 = sbr.rel (0) target = $region5
  $region4: #{mobilevit_track_forward.14} parent=0 // pred_region
    _
  $region5: #{mobilevit_track_forward.14} parent=0 // pred_fallthru
    _
  // Predicated region
  $region6: #{mobilevit_track_forward.14} parent=0 // pred_check
    _
  $region7: #{mobilevit_track_forward.14} parent=0 // pred_check_branch
    %12 = sbr.rel (0) target = $region9
  $region8: #{mobilevit_track_forward.14} parent=0 // pred_region
    _
  $region9: #{mobilevit_track_forward.14} parent=0 // pred_fallthru
    _
  // Predicated region
  $region10: #{mobilevit_track_forward.14} parent=0 // pred_check
    _
  $region11: #{mobilevit_track_forward.14} parent=0 // pred_check_branch
    %14 = sbr.rel (0) target = $region13
  $region12: #{mobilevit_track_forward.14} parent=0 // pred_region
    _
  $region13: #{mobilevit_track_forward.14} parent=0 // pred_fallthru
    _
  // Predicated region
  $region14: #{mobilevit_track_forward.14} parent=0 // pred_check
    _
  $region15: #{mobilevit_track_forward.14} parent=0 // pred_check_branch
    %16 = sbr.rel (0) target = $region17
  $region16: #{mobilevit_track_forward.14} parent=0 // pred_region
    _
  $region17: #{mobilevit_track_forward.14} parent=0 // pred_fallthru
    _
  %v18 = vld [vmem:[%s0] sm:$0xf]
  %v19 = vld [vmem:[%s0 + $0x4] sm:$0xf]
  %v20 = vld [vmem:[%s0 + $0x8] sm:$0xf]
  %v21 = vld [vmem:[%s0 + $0xc] sm:$0xf]
  %v22 = vld [vmem:[%s1] sm:$0xf]
  %v23 = vld [vmem:[%s1 + $0x4] sm:$0xf]
  %v24 = vld [vmem:[%s1 + $0x8] sm:$0xf]
  %v25 = vld [vmem:[%s1 + $0xc] sm:$0xf]
  %v26 = vld [vmem:[%s1 + $0x10] sm:$0xf]
  %v27 = vld [vmem:[%s1 + $0x14] sm:$0xf]
  %v28 = vld [vmem:[%s1 + $0x18] sm:$0xf]
  %v29 = vld [vmem:[%s1 + $0x1c] sm:$0xf]
  %v30 = vld [vmem:[%s1 + $0x20] sm:$0xf]
  %v31 = vld [vmem:[%s1 + $0x24] sm:$0xf]
  %v32 = vld [vmem:[%s1 + $0x28] sm:$0xf]
  %v33 = vld [vmem:[%s1 + $0x2c] sm:$0xf]
  %v34 = vld [vmem:[%s1 + $0x30] sm:$0xf]
  %v35 = vld [vmem:[%s1 + $0x34] sm:$0xf]
  %v36 = vld [vmem:[%s1 + $0x38] sm:$0xf]
  %v37 = vld [vmem:[%s1 + $0x3c] sm:$0xf]
  %v46 = vunpack.c.l.b16 %v22
  %v47 = vunpack.c.l.b16 %v23
  %v48 = vunpack.c.l.b16 %v24
  %v49 = vunpack.c.l.b16 %v25
  %v50 = vunpack.c.l.b16 %v26
  %v51 = vunpack.c.l.b16 %v27
  %v52 = vunpack.c.l.b16 %v28
  %v53 = vunpack.c.l.b16 %v29
  %v54 = vpack.c.b16 %v47, %v46
  %v55 = vpack.c.b16 %v49, %v48
  %v56 = vpack.c.b16 %v51, %v50
  %v57 = vpack.c.b16 %v53, %v52
  %v60 = vunpack.c.l.b16 %v18
  %v61 = vunpack.c.l.b16 %v19
  %v62 = vpack.c.b16 %v61, %v60
  %vm63 = vcmask 130048
  %v65 = vsel %vm63, %v54, 0
  %v68 = vsel %vm63, %v55, 0
  %v71 = vsel %vm63, %v56, 0
  %v74 = vsel %vm63, %v57, 0
  %v77 = vsel %vm63, %v62, 0
  %79 = vmatprep.subr.bf16.mxu0 0
  %80 = vmatpush1.bf16.xpose.msra.mxu0 %v77
  %81 = vmatprep.subr.bf16.mxu0 0
  %82 = vmatpush1.bf16.xpose.msra.mxu0 0
  %83 = vmatprep.subr.bf16.mxu0 0
  %84 = vmatpush1.bf16.xpose.msra.mxu0 0
  %85 = vmatprep.subr.bf16.mxu0 0
  %86 = vmatpush1.bf16.xpose.msra.mxu0 0
  %87 = vmatprep.subr.bf16.mxu0 0
  %88 = vmatpush1.bf16.xpose.msra.mxu0 0
  %89 = vmatprep.subr.bf16.mxu0 0
  %90 = vmatpush1.bf16.xpose.msra.mxu0 0
  %91 = vmatprep.subr.bf16.mxu0 0
  %92 = vmatpush1.bf16.xpose.msra.mxu0 0
  %93 = vmatprep.subr.bf16.mxu0 0
  %94 = vmatpush1.bf16.xpose.msra.mxu0 0
  %95 = vmatprep.subr.bf16.mxu0 0
  %96 = vmatpush1.bf16.xpose.msra.mxu0 0
  %97 = vmatprep.subr.bf16.mxu0 0
  %98 = vmatpush1.bf16.xpose.msra.mxu0 0
  %99 = vmatprep.subr.bf16.mxu0 0
  %100 = vmatpush1.bf16.xpose.msra.mxu0 0
  %101 = vmatprep.subr.bf16.mxu0 0
  %102 = vmatpush1.bf16.xpose.msra.mxu0 0
  %103 = vmatprep.subr.bf16.mxu0 0
  %104 = vmatpush1.bf16.xpose.msra.mxu0 0
  %105 = vmatprep.subr.bf16.mxu0 0
  %106 = vmatpush1.bf16.xpose.msra.mxu0 0
  %107 = vmatprep.subr.bf16.mxu0 0
  %108 = vmatpush1.bf16.xpose.msra.mxu0 0
  %109 = vmatprep.subr.bf16.mxu0 0
  %110 = vmatpush1.bf16.xpose.msra.mxu0 0
  %111 = vmatprep.mubr.bf16.mxu0 0
  %112 = vmatmul.mubr.bf16.gmra.mrb[0].mxu0 %v65
  %v113 = vpop.f32.mrb[0].mxu0
  %v114 = vadd.f32 0.0, %v113
  %v115 = vpop.f32.mrb[0].mxu0
  %v116 = vpop.f32.mrb[0].mxu0
  %v117 = vadd.f32 0.0, %v116
  %v118 = vpop.f32.mrb[0].mxu0
  %119 = vmatprep.mubr.bf16.mxu0 0
  %120 = vmatmul.mubr.bf16.gmra.mrb[0].mxu0 %v68
  %v121 = vpop.f32.mrb[0].mxu0
  %v122 = vadd.f32 0.0, %v121
  %v123 = vpop.f32.mrb[0].mxu0
  %v124 = vpop.f32.mrb[0].mxu0
  %v125 = vadd.f32 0.0, %v124
  %v126 = vpop.f32.mrb[0].mxu0
  %127 = vmatprep.mubr.bf16.mxu0 0
  %128 = vmatmul.mubr.bf16.gmra.mrb[0].mxu0 %v71
  %v129 = vpop.f32.mrb[0].mxu0
  %v130 = vadd.f32 0.0, %v129
  %v131 = vpop.f32.mrb[0].mxu0
  %v132 = vpop.f32.mrb[0].mxu0
  %v133 = vadd.f32 0.0, %v132
  %v134 = vpop.f32.mrb[0].mxu0
  %135 = vmatprep.mubr.bf16.mxu0 0
  %136 = vmatmul.mubr.bf16.gmra.mrb[0].mxu0 %v74
  %v137 = vpop.f32.mrb[0].mxu0
  %v138 = vadd.f32 0.0, %v137
  %v139 = vpop.f32.mrb[0].mxu0
  %v140 = vpop.f32.mrb[0].mxu0
  %v141 = vadd.f32 0.0, %v140
  %v142 = vpop.f32.mrb[0].mxu0
  %143 = vdwg.mxu0
  %v152 = vunpack.c.l.b16 %v30
  %v153 = vunpack.c.l.b16 %v31
  %v154 = vunpack.c.l.b16 %v32
  %v155 = vunpack.c.l.b16 %v33
  %v156 = vunpack.c.l.b16 %v34
  %v157 = vunpack.c.l.b16 %v35
  %v158 = vunpack.c.l.b16 %v36
  %v159 = vunpack.c.l.b16 %v37
  %v160 = vpack.c.b16 %v153, %v152
  %v161 = vpack.c.b16 %v155, %v154
  %v162 = vpack.c.b16 %v157, %v156
  %v163 = vpack.c.b16 %v159, %v158
  %v166 = vunpack.c.l.b16 %v20
  %v167 = vunpack.c.l.b16 %v21
  %v168 = vpack.c.b16 %v167, %v166
  %v170 = vsel %vm63, %v160, 0
  %v173 = vsel %vm63, %v161, 0
  %v176 = vsel %vm63, %v162, 0
  %v179 = vsel %vm63, %v163, 0
  %v182 = vsel %vm63, %v168, 0
  %184 = vmatprep.subr.bf16.mxu0 0
  %185 = vmatpush1.bf16.xpose.msra.mxu0 %v182
  %186 = vmatprep.subr.bf16.mxu0 0
  %187 = vmatpush1.bf16.xpose.msra.mxu0 0
  %188 = vmatprep.subr.bf16.mxu0 0
  %189 = vmatpush1.bf16.xpose.msra.mxu0 0
  %190 = vmatprep.subr.bf16.mxu0 0
  %191 = vmatpush1.bf16.xpose.msra.mxu0 0
  %192 = vmatprep.subr.bf16.mxu0 0
  %193 = vmatpush1.bf16.xpose.msra.mxu0 0
  %194 = vmatprep.subr.bf16.mxu0 0
  %195 = vmatpush1.bf16.xpose.msra.mxu0 0
  %196 = vmatprep.subr.bf16.mxu0 0
  %197 = vmatpush1.bf16.xpose.msra.mxu0 0
  %198 = vmatprep.subr.bf16.mxu0 0
  %199 = vmatpush1.bf16.xpose.msra.mxu0 0
  %200 = vmatprep.subr.bf16.mxu0 0
  %201 = vmatpush1.bf16.xpose.msra.mxu0 0
  %202 = vmatprep.subr.bf16.mxu0 0
  %203 = vmatpush1.bf16.xpose.msra.mxu0 0
  %204 = vmatprep.subr.bf16.mxu0 0
  %205 = vmatpush1.bf16.xpose.msra.mxu0 0
  %206 = vmatprep.subr.bf16.mxu0 0
  %207 = vmatpush1.bf16.xpose.msra.mxu0 0
  %208 = vmatprep.subr.bf16.mxu0 0
  %209 = vmatpush1.bf16.xpose.msra.mxu0 0
  %210 = vmatprep.subr.bf16.mxu0 0
  %211 = vmatpush1.bf16.xpose.msra.mxu0 0
  %212 = vmatprep.subr.bf16.mxu0 0
  %213 = vmatpush1.bf16.xpose.msra.mxu0 0
  %214 = vmatprep.subr.bf16.mxu0 0
  %215 = vmatpush1.bf16.xpose.msra.mxu0 0
  %216 = vmatprep.mubr.bf16.mxu0 0
  %217 = vmatmul.mubr.bf16.gmra.mrb[0].mxu0 %v170
  %v218 = vpop.f32.mrb[0].mxu0
  %v219 = vadd.f32 0.0, %v218
  %v220 = vpop.f32.mrb[0].mxu0
  %v221 = vpop.f32.mrb[0].mxu0
  %v222 = vadd.f32 0.0, %v221
  %v223 = vpop.f32.mrb[0].mxu0
  %224 = vmatprep.mubr.bf16.mxu0 0
  %225 = vmatmul.mubr.bf16.gmra.mrb[0].mxu0 %v173
  %v226 = vpop.f32.mrb[0].mxu0
  %v227 = vadd.f32 0.0, %v226
  %v228 = vpop.f32.mrb[0].mxu0
  %v229 = vpop.f32.mrb[0].mxu0
  %v230 = vadd.f32 0.0, %v229
  %v231 = vpop.f32.mrb[0].mxu0
  %232 = vmatprep.mubr.bf16.mxu0 0
  %233 = vmatmul.mubr.bf16.gmra.mrb[0].mxu0 %v176
  %v234 = vpop.f32.mrb[0].mxu0
  %v235 = vadd.f32 0.0, %v234
  %v236 = vpop.f32.mrb[0].mxu0
  %v237 = vpop.f32.mrb[0].mxu0
  %v238 = vadd.f32 0.0, %v237
  %v239 = vpop.f32.mrb[0].mxu0
  %240 = vmatprep.mubr.bf16.mxu0 0
  %241 = vmatmul.mubr.bf16.gmra.mrb[0].mxu0 %v179
  %v242 = vpop.f32.mrb[0].mxu0
  %v243 = vadd.f32 0.0, %v242
  %v244 = vpop.f32.mrb[0].mxu0
  %v245 = vpop.f32.mrb[0].mxu0
  %v246 = vadd.f32 0.0, %v245
  %v247 = vpop.f32.mrb[0].mxu0
  %248 = vdwg.mxu0
  %v249 = vpack.c.bf16 %v117, %v114
  %v250 = vpack.c.bf16 %v125, %v122
  %v251 = vpack.c.bf16 %v133, %v130
  %v252 = vpack.c.bf16 %v141, %v138
  %v253 = vpack.c.bf16 %v222, %v219
  %v254 = vpack.c.bf16 %v230, %v227
  %v255 = vpack.c.bf16 %v238, %v235
  %v256 = vpack.c.bf16 %v246, %v243
  %v257 = vld [vmem:[%s2] sm:$0xf]
  %v258 = vld [vmem:[%s2 + $0x4] sm:$0xf]
  %v261 = vunpack.c.l.b16 %v257
  %v262 = vunpack.c.l.b16 %v258
  %v263 = vpack.c.b16 %v262, %v261
  %v266 = vsel %vm63, %v249, 0
  %v269 = vsel %vm63, %v250, 0
  %v272 = vsel %vm63, %v251, 0
  %v275 = vsel %vm63, %v252, 0
  %v278 = vsel %vm63, %v253, 0
  %v281 = vsel %vm63, %v254, 0
  %v284 = vsel %vm63, %v255, 0
  %v287 = vsel %vm63, %v256, 0
  %289 = vmatprep.subr.bf16.mxu0 0
  %290 = vmatpush1.bf16.msra.mxu0 %v263
  %291 = vmatprep.subr.bf16.mxu0 0
  %292 = vmatpush1.bf16.msra.mxu0 0
  %293 = vmatprep.subr.bf16.mxu0 0
  %294 = vmatpush1.bf16.msra.mxu0 0
  %295 = vmatprep.subr.bf16.mxu0 0
  %296 = vmatpush1.bf16.msra.mxu0 0
  %297 = vmatprep.subr.bf16.mxu0 0
  %298 = vmatpush1.bf16.msra.mxu0 0
  %299 = vmatprep.subr.bf16.mxu0 0
  %300 = vmatpush1.bf16.msra.mxu0 0
  %301 = vmatprep.subr.bf16.mxu0 0
  %302 = vmatpush1.bf16.msra.mxu0 0
  %303 = vmatprep.subr.bf16.mxu0 0
  %304 = vmatpush1.bf16.msra.mxu0 0
  %305 = vmatprep.subr.bf16.mxu0 0
  %306 = vmatpush1.bf16.msra.mxu0 0
  %307 = vmatprep.subr.bf16.mxu0 0
  %308 = vmatpush1.bf16.msra.mxu0 0
  %309 = vmatprep.subr.bf16.mxu0 0
  %310 = vmatpush1.bf16.msra.mxu0 0
  %311 = vmatprep.subr.bf16.mxu0 0
  %312 = vmatpush1.bf16.msra.mxu0 0
  %313 = vmatprep.subr.bf16.mxu0 0
  %314 = vmatpush1.bf16.msra.mxu0 0
  %315 = vmatprep.subr.bf16.mxu0 0
  %316 = vmatpush1.bf16.msra.mxu0 0
  %317 = vmatprep.subr.bf16.mxu0 0
  %318 = vmatpush1.bf16.msra.mxu0 0
  %319 = vmatprep.subr.bf16.mxu0 0
  %320 = vmatpush1.bf16.msra.mxu0 0
  %321 = vmatprep.mubr.bf16.mxu0 0
  %322 = vmatmul.mubr.bf16.gmra.mrb[0].mxu0 %v266
  %v323 = vpop.f32.mrb[0].mxu0
  %v324 = vadd.f32 0.0, %v323
  %v325 = vpop.f32.mrb[0].mxu0
  %v326 = vpop.f32.mrb[0].mxu0
  %v327 = vadd.f32 0.0, %v326
  %v328 = vpop.f32.mrb[0].mxu0
  %329 = vmatprep.mubr.bf16.mxu0 0
  %330 = vmatmul.mubr.bf16.gmra.mrb[0].mxu0 %v269
  %v331 = vpop.f32.mrb[0].mxu0
  %v332 = vadd.f32 0.0, %v331
  %v333 = vpop.f32.mrb[0].mxu0
  %v334 = vpop.f32.mrb[0].mxu0
  %v335 = vadd.f32 0.0, %v334
  %v336 = vpop.f32.mrb[0].mxu0
  %337 = vmatprep.mubr.bf16.mxu0 0
  %338 = vmatmul.mubr.bf16.gmra.mrb[0].mxu0 %v272
  %v339 = vpop.f32.mrb[0].mxu0
  %v340 = vadd.f32 0.0, %v339
  %v341 = vpop.f32.mrb[0].mxu0
  %v342 = vpop.f32.mrb[0].mxu0
  %v343 = vadd.f32 0.0, %v342
  %v344 = vpop.f32.mrb[0].mxu0
  %345 = vmatprep.mubr.bf16.mxu0 0
  %346 = vmatmul.mubr.bf16.gmra.mrb[0].mxu0 %v275
  %v347 = vpop.f32.mrb[0].mxu0
  %v348 = vadd.f32 0.0, %v347
  %v349 = vpop.f32.mrb[0].mxu0
  %v350 = vpop.f32.mrb[0].mxu0
  %v351 = vadd.f32 0.0, %v350
  %v352 = vpop.f32.mrb[0].mxu0
  %353 = vmatprep.mubr.bf16.mxu0 0
  %354 = vmatmul.mubr.bf16.gmra.mrb[0].mxu0 %v278
  %v355 = vpop.f32.mrb[0].mxu0
  %v356 = vadd.f32 0.0, %v355
  %v357 = vpop.f32.mrb[0].mxu0
  %v358 = vpop.f32.mrb[0].mxu0
  %v359 = vadd.f32 0.0, %v358
  %v360 = vpop.f32.mrb[0].mxu0
  %361 = vmatprep.mubr.bf16.mxu0 0
  %362 = vmatmul.mubr.bf16.gmra.mrb[0].mxu0 %v281
  %v363 = vpop.f32.mrb[0].mxu0
  %v364 = vadd.f32 0.0, %v363
  %v365 = vpop.f32.mrb[0].mxu0
  %v366 = vpop.f32.mrb[0].mxu0
  %v367 = vadd.f32 0.0, %v366
  %v368 = vpop.f32.mrb[0].mxu0
  %369 = vmatprep.mubr.bf16.mxu0 0
  %370 = vmatmul.mubr.bf16.gmra.mrb[0].mxu0 %v284
  %v371 = vpop.f32.mrb[0].mxu0
  %v372 = vadd.f32 0.0, %v371
  %v373 = vpop.f32.mrb[0].mxu0
  %v374 = vpop.f32.mrb[0].mxu0
  %v375 = vadd.f32 0.0, %v374
  %v376 = vpop.f32.mrb[0].mxu0
  %377 = vmatprep.mubr.bf16.mxu0 0
  %378 = vmatmul.mubr.bf16.gmra.mrb[0].mxu0 %v287
  %v379 = vpop.f32.mrb[0].mxu0
  %v380 = vadd.f32 0.0, %v379
  %v381 = vpop.f32.mrb[0].mxu0
  %v382 = vpop.f32.mrb[0].mxu0
  %v383 = vadd.f32 0.0, %v382
  %v384 = vpop.f32.mrb[0].mxu0
  %385 = vdwg.mxu0
  %v386 = vld [vmem:[%s3] sm:$0x1]
  %v388 = vlaneseq
  %v389 = vshrl.u32 %v388, 7
  %v390 = vsub.s32 0, %v389
  %v391 = vrot.slane %v386, %v390
  %v393 = vadd.f32 %v324, %v391
  %v394 = vadd.f32 %v327, %v391
  %v395 = vadd.f32 %v332, %v391
  %v396 = vadd.f32 %v335, %v391
  %v397 = vadd.f32 %v340, %v391
  %v398 = vadd.f32 %v343, %v391
  %v399 = vadd.f32 %v348, %v391
  %v400 = vadd.f32 %v351, %v391
  %v401 = vadd.f32 %v356, %v391
  %v402 = vadd.f32 %v359, %v391
  %v403 = vadd.f32 %v364, %v391
  %v404 = vadd.f32 %v367, %v391
  %v405 = vadd.f32 %v372, %v391
  %v406 = vadd.f32 %v375, %v391
  %v407 = vadd.f32 %v380, %v391
  %v408 = vadd.f32 %v383, %v391
  %v409 = vmax.f32 %v393, 0.0
  %v410 = vmax.f32 %v394, 0.0
  %v411 = vmax.f32 %v395, 0.0
  %v412 = vmax.f32 %v396, 0.0
  %v413 = vmax.f32 %v397, 0.0
  %v414 = vmax.f32 %v398, 0.0
  %v415 = vmax.f32 %v399, 0.0
  %v416 = vmax.f32 %v400, 0.0
  %v417 = vmax.f32 %v401, 0.0
  %v418 = vmax.f32 %v402, 0.0
  %v419 = vmax.f32 %v403, 0.0
  %v420 = vmax.f32 %v404, 0.0
  %v421 = vmax.f32 %v405, 0.0
  %v422 = vmax.f32 %v406, 0.0
  %v423 = vmax.f32 %v407, 0.0
  %v424 = vmax.f32 %v408, 0.0
  %425 = vst.msk [vmem:[%s4] sm:$0xff] %vm63, %v409
  %426 = vst.msk [vmem:[%s4 + $0x8] sm:$0xff] %vm63, %v410
  %427 = vst.msk [vmem:[%s4 + $0x10] sm:$0xff] %vm63, %v411
  %428 = vst.msk [vmem:[%s4 + $0x18] sm:$0xff] %vm63, %v412
  %429 = vst.msk [vmem:[%s4 + $0x20] sm:$0xff] %vm63, %v413
  %430 = vst.msk [vmem:[%s4 + $0x28] sm:$0xff] %vm63, %v414
  %431 = vst.msk [vmem:[%s4 + $0x30] sm:$0xff] %vm63, %v415
  %432 = vst.msk [vmem:[%s4 + $0x38] sm:$0xff] %vm63, %v416
  %433 = vst.msk [vmem:[%s4 + $0x40] sm:$0xff] %vm63, %v417
  %434 = vst.msk [vmem:[%s4 + $0x48] sm:$0xff] %vm63, %v418
  %435 = vst.msk [vmem:[%s4 + $0x50] sm:$0xff] %vm63, %v419
  %436 = vst.msk [vmem:[%s4 + $0x58] sm:$0xff] %vm63, %v420
  %437 = vst.msk [vmem:[%s4 + $0x60] sm:$0xff] %vm63, %v421
  %438 = vst.msk [vmem:[%s4 + $0x68] sm:$0xff] %vm63, %v422
  %439 = vst.msk [vmem:[%s4 + $0x70] sm:$0xff] %vm63, %v423
  %440 = vst.msk [vmem:[%s4 + $0x78] sm:$0xff] %vm63, %v424
  // Predicated region
  $region18: #{mobilevit_track_forward.14} parent=0 // pred_check
    _
  $region19: #{mobilevit_track_forward.14} parent=0 // pred_check_branch
    %442 = sbr.rel (0) target = $region21
  $region20: #{mobilevit_track_forward.14} parent=0 // pred_region
    _
  $region21: #{mobilevit_track_forward.14} parent=0 // pred_fallthru
    _
  // Predicated region
  $region22: #{mobilevit_track_forward.14} parent=0 // pred_check
    _
  $region23: #{mobilevit_track_forward.14} parent=0 // pred_check_branch
    %444 = sbr.rel (0) target = $region25
  $region24: #{mobilevit_track_forward.14} parent=0 // pred_region
    _
  $region25: #{mobilevit_track_forward.14} parent=0 // pred_fallthru
    _

// kernel: mobilevit_track_forward.15
$region0: #{mobilevit_track_forward.15}
  #allocation0 [shape = 'u32[]', space=smem, size = 0x4, offset = 0x4, fixed_abs, tag = 'smem constant byte address 0x4 - core index']
  #allocation1 [shape = 'u32[144,128]{1,0:T(1,128)}', space=vmem, size = 0x12000, scoped, tag = 'internal scratch']
  %s0 = inlined_call_operand.vmem [shape: bf16[128,144], index: 0, kind: input, shape index: {}]
  %s1 = inlined_call_operand.vmem [shape: bf16[144,128], index: 1, kind: input, shape index: {}]
  %s2 = inlined_call_operand.vmem [shape: f32[1,128], index: 2, kind: input, shape index: {}]
  %s3 = inlined_call_operand.vmem [shape: f32[128,128], index: 3, kind: output, shape index: {}]
  %s4 = sld [smem:[#allocation0]]
  $region22: #{mobilevit_track_forward.15} parent=0
    _
  %s6 = ssub.s32 1, %s4
  %s7 = scalar_select 0, %s6, %s4
  // Predicated region
  $region2: #{mobilevit_track_forward.15} parent=0 // pred_check
    _
  $region3: #{mobilevit_track_forward.15} parent=0 // pred_check_branch
    %9 = sbr.rel (0) target = $region5
  $region4: #{mobilevit_track_forward.15} parent=0 // pred_region
    _
  $region5: #{mobilevit_track_forward.15} parent=0 // pred_fallthru
    _
  // Predicated region
  $region6: #{mobilevit_track_forward.15} parent=0 // pred_check
    _
  $region7: #{mobilevit_track_forward.15} parent=0 // pred_check_branch
    %11 = sbr.rel (0) target = $region9
  $region8: #{mobilevit_track_forward.15} parent=0 // pred_region
    _
  $region9: #{mobilevit_track_forward.15} parent=0 // pred_fallthru
    _
  // Predicated region
  $region10: #{mobilevit_track_forward.15} parent=0 // pred_check
    _
  $region11: #{mobilevit_track_forward.15} parent=0 // pred_check_branch
    %13 = sbr.rel (0) target = $region13
  $region12: #{mobilevit_track_forward.15} parent=0 // pred_region
    _
  $region13: #{mobilevit_track_forward.15} parent=0 // pred_fallthru
    _
  %v15 = vld [vmem:[%s0] sm:$0xff]
  %v16 = vld [vmem:[%s0 + $0x8] sm:$0xff]
  %v17 = vld [vmem:[%s0 + $0x10] sm:$0xff]
  %v18 = vld [vmem:[%s0 + $0x18] sm:$0xff]
  %v19 = vld [vmem:[%s0 + $0x20] sm:$0xff]
  %v20 = vld [vmem:[%s0 + $0x28] sm:$0xff]
  %v21 = vld [vmem:[%s0 + $0x30] sm:$0xff]
  %v22 = vld [vmem:[%s0 + $0x38] sm:$0xff]
  %v23 = vld [vmem:[%s0 + $0x40] sm:$0xff]
  %v24 = vld [vmem:[%s0 + $0x48] sm:$0xff]
  %v25 = vld [vmem:[%s0 + $0x50] sm:$0xff]
  %v26 = vld [vmem:[%s0 + $0x58] sm:$0xff]
  %v27 = vld [vmem:[%s0 + $0x60] sm:$0xff]
  %v28 = vld [vmem:[%s0 + $0x68] sm:$0xff]
  %v29 = vld [vmem:[%s0 + $0x70] sm:$0xff]
  %v30 = vld [vmem:[%s0 + $0x78] sm:$0xff]
  %v31 = vld [vmem:[%s1] sm:$0xf]
  %v32 = vld [vmem:[%s1 + $0x4] sm:$0xf]
  %v33 = vld [vmem:[%s1 + $0x8] sm:$0xf]
  %v34 = vld [vmem:[%s1 + $0xc] sm:$0xf]
  %v35 = vld [vmem:[%s1 + $0x10] sm:$0xf]
  %v36 = vld [vmem:[%s1 + $0x14] sm:$0xf]
  %v37 = vld [vmem:[%s1 + $0x18] sm:$0xf]
  %v38 = vld [vmem:[%s1 + $0x1c] sm:$0xf]
  %v39 = vld [vmem:[%s1 + $0x20] sm:$0xf]
  %v40 = vld [vmem:[%s1 + $0x24] sm:$0xf]
  %v41 = vld [vmem:[%s1 + $0x28] sm:$0xf]
  %v42 = vld [vmem:[%s1 + $0x2c] sm:$0xf]
  %v43 = vld [vmem:[%s1 + $0x30] sm:$0xf]
  %v44 = vld [vmem:[%s1 + $0x34] sm:$0xf]
  %v45 = vld [vmem:[%s1 + $0x38] sm:$0xf]
  %v46 = vld [vmem:[%s1 + $0x3c] sm:$0xf]
  %v47 = vld [vmem:[%s1 + $0x40] sm:$0xf]
  %v48 = vld [vmem:[%s1 + $0x44] sm:$0xf]
  %v49 = vld [vmem:[%s2] sm:$0x1]
  %v51 = vlaneseq
  %v52 = vshrl.u32 %v51, 7
  %v53 = vsub.s32 0, %v52
  %v54 = vrot.slane %v49, %v53
  %v72 = vunpack.c.l.b16 %v15
  %v73 = vunpack.c.h.b16 %v15
  %v74 = vunpack.c.l.b16 %v16
  %v75 = vunpack.c.h.b16 %v16
  %v76 = vunpack.c.l.b16 %v17
  %v77 = vunpack.c.h.b16 %v17
  %v78 = vunpack.c.l.b16 %v18
  %v79 = vunpack.c.h.b16 %v18
  %v80 = vunpack.c.l.b16 %v19
  %v81 = vunpack.c.h.b16 %v19
  %v82 = vunpack.c.l.b16 %v20
  %v83 = vunpack.c.h.b16 %v20
  %v84 = vunpack.c.l.b16 %v21
  %v85 = vunpack.c.h.b16 %v21
  %v86 = vunpack.c.l.b16 %v22
  %v87 = vunpack.c.h.b16 %v22
  %v88 = vunpack.c.l.b16 %v23
  %v89 = vunpack.c.h.b16 %v23
  %v90 = vunpack.c.l.b16 %v24
  %v91 = vunpack.c.h.b16 %v24
  %v92 = vunpack.c.l.b16 %v25
  %v93 = vunpack.c.h.b16 %v25
  %v94 = vunpack.c.l.b16 %v26
  %v95 = vunpack.c.h.b16 %v26
  %v96 = vunpack.c.l.b16 %v27
  %v97 = vunpack.c.h.b16 %v27
  %v98 = vunpack.c.l.b16 %v28
  %v99 = vunpack.c.h.b16 %v28
  %v100 = vunpack.c.l.b16 %v29
  %v101 = vunpack.c.h.b16 %v29
  %v102 = vunpack.c.l.b16 %v30
  %v103 = vunpack.c.h.b16 %v30
  %v104 = vpack.c.b16 %v74, %v72
  %v105 = vpack.c.b16 %v75, %v73
  %v106 = vpack.c.b16 %v78, %v76
  %v107 = vpack.c.b16 %v79, %v77
  %v108 = vpack.c.b16 %v82, %v80
  %v109 = vpack.c.b16 %v83, %v81
  %v110 = vpack.c.b16 %v86, %v84
  %v111 = vpack.c.b16 %v87, %v85
  %v112 = vpack.c.b16 %v90, %v88
  %v113 = vpack.c.b16 %v91, %v89
  %v114 = vpack.c.b16 %v94, %v92
  %v115 = vpack.c.b16 %v95, %v93
  %v116 = vpack.c.b16 %v98, %v96
  %v117 = vpack.c.b16 %v99, %v97
  %v118 = vpack.c.b16 %v102, %v100
  %v119 = vpack.c.b16 %v103, %v101
  %v146 = vunpack.c.l.b16 %v31
  %v147 = vunpack.c.l.b16 %v32
  %v148 = vunpack.c.l.b16 %v33
  %v149 = vunpack.c.l.b16 %v34
  %v150 = vunpack.c.l.b16 %v35
  %v151 = vunpack.c.l.b16 %v36
  %v152 = vunpack.c.l.b16 %v37
  %v153 = vunpack.c.l.b16 %v38
  %v154 = vunpack.c.l.b16 %v39
  %v155 = vunpack.c.l.b16 %v40
  %v156 = vunpack.c.l.b16 %v41
  %v157 = vunpack.c.l.b16 %v42
  %v158 = vunpack.c.l.b16 %v43
  %v159 = vunpack.c.l.b16 %v44
  %v160 = vunpack.c.l.b16 %v45
  %v161 = vunpack.c.l.b16 %v46
  %v162 = vunpack.c.l.b16 %v47
  %v163 = vunpack.c.l.b16 %v48
  %v164 = vpack.c.b16 %v147, %v146
  %v165 = vpack.c.b16 %v149, %v148
  %v166 = vpack.c.b16 %v151, %v150
  %v167 = vpack.c.b16 %v153, %v152
  %v168 = vpack.c.b16 %v155, %v154
  %v169 = vpack.c.b16 %v157, %v156
  %v170 = vpack.c.b16 %v159, %v158
  %v171 = vpack.c.b16 %v161, %v160
  %v172 = vpack.c.b16 %v163, %v162
  %vm182 = vcmask 130048
  %v184 = vsel %vm182, %v105, 0
  %v187 = vsel %vm182, %v107, 0
  %v190 = vsel %vm182, %v109, 0
  %v193 = vsel %vm182, %v111, 0
  %v196 = vsel %vm182, %v113, 0
  %v199 = vsel %vm182, %v115, 0
  %v202 = vsel %vm182, %v117, 0
  %v205 = vsel %vm182, %v119, 0
  %207 = vmatprep.subr.bf16.mxu0 0
  %208 = vmatpush1.bf16.msra.mxu0 %v164
  %209 = vmatprep.subr.bf16.mxu0 0
  %210 = vmatpush1.bf16.msra.mxu0 %v165
  %211 = vmatprep.subr.bf16.mxu0 0
  %212 = vmatpush1.bf16.msra.mxu0 %v166
  %213 = vmatprep.subr.bf16.mxu0 0
  %214 = vmatpush1.bf16.msra.mxu0 %v167
  %215 = vmatprep.subr.bf16.mxu0 0
  %216 = vmatpush1.bf16.msra.mxu0 %v168
  %217 = vmatprep.subr.bf16.mxu0 0
  %218 = vmatpush1.bf16.msra.mxu0 %v169
  %219 = vmatprep.subr.bf16.mxu0 0
  %220 = vmatpush1.bf16.msra.mxu0 %v170
  %221 = vmatprep.subr.bf16.mxu0 0
  %222 = vmatpush1.bf16.msra.mxu0 %v171
  %223 = vmatprep.subr.bf16.mxu0 0
  %224 = vmatpush1.bf16.msra.mxu0 %v172
  %225 = vmatprep.subr.bf16.mxu0 0
  %226 = vmatpush1.bf16.msra.mxu0 0
  %227 = vmatprep.subr.bf16.mxu0 0
  %228 = vmatpush1.bf16.msra.mxu0 0
  %229 = vmatprep.subr.bf16.mxu0 0
  %230 = vmatpush1.bf16.msra.mxu0 0
  %231 = vmatprep.subr.bf16.mxu0 0
  %232 = vmatpush1.bf16.msra.mxu0 0
  %233 = vmatprep.subr.bf16.mxu0 0
  %234 = vmatpush1.bf16.msra.mxu0 0
  %235 = vmatprep.subr.bf16.mxu0 0
  %236 = vmatpush1.bf16.msra.mxu0 0
  %237 = vmatprep.subr.bf16.mxu0 0
  %238 = vmatpush1.bf16.msra.mxu0 0
  %239 = vmatprep.mubr.bf16.mxu0 %v184
  %240 = vmatmul.mubr.bf16.gmra.mrb[0].mxu0 %v104
  %v241 = vpop.f32.mrb[0].mxu0
  %v242 = vadd.f32 %v54, %v241
  %v243 = vpop.f32.mrb[0].mxu0
  %v244 = vpop.f32.mrb[0].mxu0
  %v245 = vadd.f32 %v54, %v244
  %v246 = vpop.f32.mrb[0].mxu0
  %247 = vmatprep.mubr.bf16.mxu0 %v187
  %248 = vmatmul.mubr.bf16.gmra.mrb[0].mxu0 %v106
  %v249 = vpop.f32.mrb[0].mxu0
  %v250 = vadd.f32 %v54, %v249
  %v251 = vpop.f32.mrb[0].mxu0
  %v252 = vpop.f32.mrb[0].mxu0
  %v253 = vadd.f32 %v54, %v252
  %v254 = vpop.f32.mrb[0].mxu0
  %255 = vmatprep.mubr.bf16.mxu0 %v190
  %256 = vmatmul.mubr.bf16.gmra.mrb[0].mxu0 %v108
  %v257 = vpop.f32.mrb[0].mxu0
  %v258 = vadd.f32 %v54, %v257
  %v259 = vpop.f32.mrb[0].mxu0
  %v260 = vpop.f32.mrb[0].mxu0
  %v261 = vadd.f32 %v54, %v260
  %v262 = vpop.f32.mrb[0].mxu0
  %263 = vmatprep.mubr.bf16.mxu0 %v193
  %264 = vmatmul.mubr.bf16.gmra.mrb[0].mxu0 %v110
  %v265 = vpop.f32.mrb[0].mxu0
  %v266 = vadd.f32 %v54, %v265
  %v267 = vpop.f32.mrb[0].mxu0
  %v268 = vpop.f32.mrb[0].mxu0
  %v269 = vadd.f32 %v54, %v268
  %v270 = vpop.f32.mrb[0].mxu0
  %271 = vmatprep.mubr.bf16.mxu0 %v196
  %272 = vmatmul.mubr.bf16.gmra.mrb[0].mxu0 %v112
  %v273 = vpop.f32.mrb[0].mxu0
  %v274 = vadd.f32 %v54, %v273
  %v275 = vpop.f32.mrb[0].mxu0
  %v276 = vpop.f32.mrb[0].mxu0
  %v277 = vadd.f32 %v54, %v276
  %v278 = vpop.f32.mrb[0].mxu0
  %279 = vmatprep.mubr.bf16.mxu0 %v199
  %280 = vmatmul.mubr.bf16.gmra.mrb[0].mxu0 %v114
  %v281 = vpop.f32.mrb[0].mxu0
  %v282 = vadd.f32 %v54, %v281
  %v283 = vpop.f32.mrb[0].mxu0
  %v284 = vpop.f32.mrb[0].mxu0
  %v285 = vadd.f32 %v54, %v284
  %v286 = vpop.f32.mrb[0].mxu0
  %287 = vmatprep.mubr.bf16.mxu0 %v202
  %288 = vmatmul.mubr.bf16.gmra.mrb[0].mxu0 %v116
  %v289 = vpop.f32.mrb[0].mxu0
  %v290 = vadd.f32 %v54, %v289
  %v291 = vpop.f32.mrb[0].mxu0
  %v292 = vpop.f32.mrb[0].mxu0
  %v293 = vadd.f32 %v54, %v292
  %v294 = vpop.f32.mrb[0].mxu0
  %295 = vmatprep.mubr.bf16.mxu0 %v205
  %296 = vmatmul.mubr.bf16.gmra.mrb[0].mxu0 %v118
  %v297 = vpop.f32.mrb[0].mxu0
  %v298 = vadd.f32 %v54, %v297
  %v299 = vpop.f32.mrb[0].mxu0
  %v300 = vpop.f32.mrb[0].mxu0
  %v301 = vadd.f32 %v54, %v300
  %v302 = vpop.f32.mrb[0].mxu0
  %303 = vdwg.mxu0
  %v304 = vmax.f32 %v242, 0.0
  %v305 = vmax.f32 %v245, 0.0
  %v306 = vmax.f32 %v250, 0.0
  %v307 = vmax.f32 %v253, 0.0
  %v308 = vmax.f32 %v258, 0.0
  %v309 = vmax.f32 %v261, 0.0
  %v310 = vmax.f32 %v266, 0.0
  %v311 = vmax.f32 %v269, 0.0
  %v312 = vmax.f32 %v274, 0.0
  %v313 = vmax.f32 %v277, 0.0
  %v314 = vmax.f32 %v282, 0.0
  %v315 = vmax.f32 %v285, 0.0
  %v316 = vmax.f32 %v290, 0.0
  %v317 = vmax.f32 %v293, 0.0
  %v318 = vmax.f32 %v298, 0.0
  %v319 = vmax.f32 %v301, 0.0
  %320 = vst [vmem:[%s3] sm:$0xff] %v304
  %321 = vst [vmem:[%s3 + $0x8] sm:$0xff] %v305
  %322 = vst [vmem:[%s3 + $0x10] sm:$0xff] %v306
  %323 = vst [vmem:[%s3 + $0x18] sm:$0xff] %v307
  %324 = vst [vmem:[%s3 + $0x20] sm:$0xff] %v308
  %325 = vst [vmem:[%s3 + $0x28] sm:$0xff] %v309
  %326 = vst [vmem:[%s3 + $0x30] sm:$0xff] %v310
  %327 = vst [vmem:[%s3 + $0x38] sm:$0xff] %v311
  %328 = vst [vmem:[%s3 + $0x40] sm:$0xff] %v312
  %329 = vst [vmem:[%s3 + $0x48] sm:$0xff] %v313
  %330 = vst [vmem:[%s3 + $0x50] sm:$0xff] %v314
  %331 = vst [vmem:[%s3 + $0x58] sm:$0xff] %v315
  %332 = vst [vmem:[%s3 + $0x60] sm:$0xff] %v316
  %333 = vst [vmem:[%s3 + $0x68] sm:$0xff] %v317
  %334 = vst [vmem:[%s3 + $0x70] sm:$0xff] %v318
  %335 = vst [vmem:[%s3 + $0x78] sm:$0xff] %v319
  // Predicated region
  $region14: #{mobilevit_track_forward.15} parent=0 // pred_check
    _
  $region15: #{mobilevit_track_forward.15} parent=0 // pred_check_branch
    %337 = sbr.rel (0) target = $region17
  $region16: #{mobilevit_track_forward.15} parent=0 // pred_region
    _
  $region17: #{mobilevit_track_forward.15} parent=0 // pred_fallthru
    _
  // Predicated region
  $region18: #{mobilevit_track_forward.15} parent=0 // pred_check
    _
  $region19: #{mobilevit_track_forward.15} parent=0 // pred_check_branch
    %339 = sbr.rel (0) target = $region21
  $region20: #{mobilevit_track_forward.15} parent=0 // pred_region
    _
  $region21: #{mobilevit_track_forward.15} parent=0 // pred_fallthru
    _

// kernel: mobilevit_track_forward.16
$region0: #{mobilevit_track_forward.16}
  #allocation0 [shape = 'u32[]', space=smem, size = 0x4, offset = 0x4, fixed_abs, tag = 'smem constant byte address 0x4 - core index']
  #allocation1 [shape = 'u32[144,128]{1,0:T(1,128)}', space=vmem, size = 0x12000, scoped, tag = 'internal scratch']
  %s0 = inlined_call_operand.vmem [shape: bf16[128,216], index: 0, kind: input, shape index: {}]
  %s1 = inlined_call_operand.vmem [shape: bf16[216,128], index: 1, kind: input, shape index: {}]
  %s2 = inlined_call_operand.vmem [shape: f32[1,128], index: 2, kind: input, shape index: {}]
  %s3 = inlined_call_operand.vmem [shape: f32[128,128], index: 3, kind: output, shape index: {}]
  %s4 = sld [smem:[#allocation0]]
  $region22: #{mobilevit_track_forward.16} parent=0
    _
  %s6 = ssub.s32 1, %s4
  %s7 = scalar_select 0, %s6, %s4
  // Predicated region
  $region2: #{mobilevit_track_forward.16} parent=0 // pred_check
    _
  $region3: #{mobilevit_track_forward.16} parent=0 // pred_check_branch
    %9 = sbr.rel (0) target = $region5
  $region4: #{mobilevit_track_forward.16} parent=0 // pred_region
    _
  $region5: #{mobilevit_track_forward.16} parent=0 // pred_fallthru
    _
  // Predicated region
  $region6: #{mobilevit_track_forward.16} parent=0 // pred_check
    _
  $region7: #{mobilevit_track_forward.16} parent=0 // pred_check_branch
    %11 = sbr.rel (0) target = $region9
  $region8: #{mobilevit_track_forward.16} parent=0 // pred_region
    _
  $region9: #{mobilevit_track_forward.16} parent=0 // pred_fallthru
    _
  // Predicated region
  $region10: #{mobilevit_track_forward.16} parent=0 // pred_check
    _
  $region11: #{mobilevit_track_forward.16} parent=0 // pred_check_branch
    %13 = sbr.rel (0) target = $region13
  $region12: #{mobilevit_track_forward.16} parent=0 // pred_region
    _
  $region13: #{mobilevit_track_forward.16} parent=0 // pred_fallthru
    _
  %v15 = vld [vmem:[%s0] sm:$0xff]
  %v16 = vld [vmem:[%s0 + $0x8] sm:$0xff]
  %v17 = vld [vmem:[%s0 + $0x10] sm:$0xff]
  %v18 = vld [vmem:[%s0 + $0x18] sm:$0xff]
  %v19 = vld [vmem:[%s0 + $0x20] sm:$0xff]
  %v20 = vld [vmem:[%s0 + $0x28] sm:$0xff]
  %v21 = vld [vmem:[%s0 + $0x30] sm:$0xff]
  %v22 = vld [vmem:[%s0 + $0x38] sm:$0xff]
  %v23 = vld [vmem:[%s0 + $0x40] sm:$0xff]
  %v24 = vld [vmem:[%s0 + $0x48] sm:$0xff]
  %v25 = vld [vmem:[%s0 + $0x50] sm:$0xff]
  %v26 = vld [vmem:[%s0 + $0x58] sm:$0xff]
  %v27 = vld [vmem:[%s0 + $0x60] sm:$0xff]
  %v28 = vld [vmem:[%s0 + $0x68] sm:$0xff]
  %v29 = vld [vmem:[%s0 + $0x70] sm:$0xff]
  %v30 = vld [vmem:[%s0 + $0x78] sm:$0xff]
  %v31 = vld [vmem:[%s1] sm:$0xf]
  %v32 = vld [vmem:[%s1 + $0x4] sm:$0xf]
  %v33 = vld [vmem:[%s1 + $0x8] sm:$0xf]
  %v34 = vld [vmem:[%s1 + $0xc] sm:$0xf]
  %v35 = vld [vmem:[%s1 + $0x10] sm:$0xf]
  %v36 = vld [vmem:[%s1 + $0x14] sm:$0xf]
  %v37 = vld [vmem:[%s1 + $0x18] sm:$0xf]
  %v38 = vld [vmem:[%s1 + $0x1c] sm:$0xf]
  %v39 = vld [vmem:[%s1 + $0x20] sm:$0xf]
  %v40 = vld [vmem:[%s1 + $0x24] sm:$0xf]
  %v41 = vld [vmem:[%s1 + $0x28] sm:$0xf]
  %v42 = vld [vmem:[%s1 + $0x2c] sm:$0xf]
  %v43 = vld [vmem:[%s1 + $0x30] sm:$0xf]
  %v44 = vld [vmem:[%s1 + $0x34] sm:$0xf]
  %v45 = vld [vmem:[%s1 + $0x38] sm:$0xf]
  %v46 = vld [vmem:[%s1 + $0x3c] sm:$0xf]
  %v47 = vld [vmem:[%s1 + $0x40] sm:$0xf]
  %v48 = vld [vmem:[%s1 + $0x44] sm:$0xf]
  %v49 = vld [vmem:[%s1 + $0x48] sm:$0xf]
  %v50 = vld [vmem:[%s1 + $0x4c] sm:$0xf]
  %v51 = vld [vmem:[%s1 + $0x50] sm:$0xf]
  %v52 = vld [vmem:[%s1 + $0x54] sm:$0xf]
  %v53 = vld [vmem:[%s1 + $0x58] sm:$0xf]
  %v54 = vld [vmem:[%s1 + $0x5c] sm:$0xf]
  %v55 = vld [vmem:[%s1 + $0x60] sm:$0xf]
  %v56 = vld [vmem:[%s1 + $0x64] sm:$0xf]
  %v57 = vld [vmem:[%s1 + $0x68] sm:$0xf]
  %v58 = vld [vmem:[%s2] sm:$0x1]
  %v60 = vlaneseq
  %v61 = vshrl.u32 %v60, 7
  %v62 = vsub.s32 0, %v61
  %v63 = vrot.slane %v58, %v62
  %v81 = vunpack.c.l.b16 %v15
  %v82 = vunpack.c.h.b16 %v15
  %v83 = vunpack.c.l.b16 %v16
  %v84 = vunpack.c.h.b16 %v16
  %v85 = vunpack.c.l.b16 %v17
  %v86 = vunpack.c.h.b16 %v17
  %v87 = vunpack.c.l.b16 %v18
  %v88 = vunpack.c.h.b16 %v18
  %v89 = vunpack.c.l.b16 %v19
  %v90 = vunpack.c.h.b16 %v19
  %v91 = vunpack.c.l.b16 %v20
  %v92 = vunpack.c.h.b16 %v20
  %v93 = vunpack.c.l.b16 %v21
  %v94 = vunpack.c.h.b16 %v21
  %v95 = vunpack.c.l.b16 %v22
  %v96 = vunpack.c.h.b16 %v22
  %v97 = vunpack.c.l.b16 %v23
  %v98 = vunpack.c.h.b16 %v23
  %v99 = vunpack.c.l.b16 %v24
  %v100 = vunpack.c.h.b16 %v24
  %v101 = vunpack.c.l.b16 %v25
  %v102 = vunpack.c.h.b16 %v25
  %v103 = vunpack.c.l.b16 %v26
  %v104 = vunpack.c.h.b16 %v26
  %v105 = vunpack.c.l.b16 %v27
  %v106 = vunpack.c.h.b16 %v27
  %v107 = vunpack.c.l.b16 %v28
  %v108 = vunpack.c.h.b16 %v28
  %v109 = vunpack.c.l.b16 %v29
  %v110 = vunpack.c.h.b16 %v29
  %v111 = vunpack.c.l.b16 %v30
  %v112 = vunpack.c.h.b16 %v30
  %v113 = vpack.c.b16 %v83, %v81
  %v114 = vpack.c.b16 %v84, %v82
  %v115 = vpack.c.b16 %v87, %v85
  %v116 = vpack.c.b16 %v88, %v86
  %v117 = vpack.c.b16 %v91, %v89
  %v118 = vpack.c.b16 %v92, %v90
  %v119 = vpack.c.b16 %v95, %v93
  %v120 = vpack.c.b16 %v96, %v94
  %v121 = vpack.c.b16 %v99, %v97
  %v122 = vpack.c.b16 %v100, %v98
  %v123 = vpack.c.b16 %v103, %v101
  %v124 = vpack.c.b16 %v104, %v102
  %v125 = vpack.c.b16 %v107, %v105
  %v126 = vpack.c.b16 %v108, %v106
  %v127 = vpack.c.b16 %v111, %v109
  %v128 = vpack.c.b16 %v112, %v110
  %v164 = vunpack.c.l.b16 %v31
  %v165 = vunpack.c.l.b16 %v32
  %v166 = vunpack.c.l.b16 %v33
  %v167 = vunpack.c.l.b16 %v34
  %v168 = vunpack.c.l.b16 %v35
  %v169 = vunpack.c.l.b16 %v36
  %v170 = vunpack.c.l.b16 %v37
  %v171 = vunpack.c.l.b16 %v38
  %v172 = vunpack.c.l.b16 %v39
  %v173 = vunpack.c.l.b16 %v40
  %v174 = vunpack.c.l.b16 %v41
  %v175 = vunpack.c.l.b16 %v42
  %v176 = vunpack.c.l.b16 %v43
  %v177 = vunpack.c.l.b16 %v44
  %v178 = vunpack.c.l.b16 %v45
  %v179 = vunpack.c.l.b16 %v46
  %v180 = vunpack.c.l.b16 %v47
  %v181 = vunpack.c.l.b16 %v48
  %v182 = vunpack.c.l.b16 %v49
  %v183 = vunpack.c.l.b16 %v50
  %v184 = vunpack.c.l.b16 %v51
  %v185 = vunpack.c.l.b16 %v52
  %v186 = vunpack.c.l.b16 %v53
  %v187 = vunpack.c.l.b16 %v54
  %v188 = vunpack.c.l.b16 %v55
  %v189 = vunpack.c.l.b16 %v56
  %v190 = vunpack.c.l.b16 %v57
  %v191 = vpack.c.b16 %v165, %v164
  %v192 = vpack.c.b16 %v167, %v166
  %v193 = vpack.c.b16 %v169, %v168
  %v194 = vpack.c.b16 %v171, %v170
  %v195 = vpack.c.b16 %v173, %v172
  %v196 = vpack.c.b16 %v175, %v174
  %v197 = vpack.c.b16 %v177, %v176
  %v198 = vpack.c.b16 %v179, %v178
  %v199 = vpack.c.b16 %v181, %v180
  %v200 = vpack.c.b16 %v183, %v182
  %v201 = vpack.c.b16 %v185, %v184
  %v202 = vpack.c.b16 %v187, %v186
  %v203 = vpack.c.b16 %v189, %v188
  %v204 = vpack.c.b16 %v190, %v190
  %vm218 = vcmask 719872
  %v220 = vsel %vm218, %v114, 0
  %v223 = vsel %vm218, %v116, 0
  %v226 = vsel %vm218, %v118, 0
  %v229 = vsel %vm218, %v120, 0
  %v232 = vsel %vm218, %v122, 0
  %v235 = vsel %vm218, %v124, 0
  %v238 = vsel %vm218, %v126, 0
  %v241 = vsel %vm218, %v128, 0
  %vm243 = vcmask 1043456
  %v245 = vsel %vm243, %v204, 0
  %247 = vmatprep.subr.bf16.mxu0 0
  %248 = vmatpush1.bf16.msra.mxu0 %v191
  %249 = vmatprep.subr.bf16.mxu0 0
  %250 = vmatpush1.bf16.msra.mxu0 %v192
  %251 = vmatprep.subr.bf16.mxu0 0
  %252 = vmatpush1.bf16.msra.mxu0 %v193
  %253 = vmatprep.subr.bf16.mxu0 0
  %254 = vmatpush1.bf16.msra.mxu0 %v194
  %255 = vmatprep.subr.bf16.mxu0 0
  %256 = vmatpush1.bf16.msra.mxu0 %v195
  %257 = vmatprep.subr.bf16.mxu0 0
  %258 = vmatpush1.bf16.msra.mxu0 %v196
  %259 = vmatprep.subr.bf16.mxu0 0
  %260 = vmatpush1.bf16.msra.mxu0 %v197
  %261 = vmatprep.subr.bf16.mxu0 0
  %262 = vmatpush1.bf16.msra.mxu0 %v198
  %263 = vmatprep.subr.bf16.mxu0 0
  %264 = vmatpush1.bf16.msra.mxu0 %v199
  %265 = vmatprep.subr.bf16.mxu0 0
  %266 = vmatpush1.bf16.msra.mxu0 %v200
  %267 = vmatprep.subr.bf16.mxu0 0
  %268 = vmatpush1.bf16.msra.mxu0 %v201
  %269 = vmatprep.subr.bf16.mxu0 0
  %270 = vmatpush1.bf16.msra.mxu0 %v202
  %271 = vmatprep.subr.bf16.mxu0 0
  %272 = vmatpush1.bf16.msra.mxu0 %v203
  %273 = vmatprep.subr.bf16.mxu0 0
  %274 = vmatpush1.bf16.msra.mxu0 %v245
  %275 = vmatprep.subr.bf16.mxu0 0
  %276 = vmatpush1.bf16.msra.mxu0 0
  %277 = vmatprep.subr.bf16.mxu0 0
  %278 = vmatpush1.bf16.msra.mxu0 0
  %279 = vmatprep.mubr.bf16.mxu0 %v220
  %280 = vmatmul.mubr.bf16.gmra.mrb[0].mxu0 %v113
  %v281 = vpop.f32.mrb[0].mxu0
  %v282 = vadd.f32 %v63, %v281
  %v283 = vpop.f32.mrb[0].mxu0
  %v284 = vpop.f32.mrb[0].mxu0
  %v285 = vadd.f32 %v63, %v284
  %v286 = vpop.f32.mrb[0].mxu0
  %287 = vmatprep.mubr.bf16.mxu0 %v223
  %288 = vmatmul.mubr.bf16.gmra.mrb[0].mxu0 %v115
  %v289 = vpop.f32.mrb[0].mxu0
  %v290 = vadd.f32 %v63, %v289
  %v291 = vpop.f32.mrb[0].mxu0
  %v292 = vpop.f32.mrb[0].mxu0
  %v293 = vadd.f32 %v63, %v292
  %v294 = vpop.f32.mrb[0].mxu0
  %295 = vmatprep.mubr.bf16.mxu0 %v226
  %296 = vmatmul.mubr.bf16.gmra.mrb[0].mxu0 %v117
  %v297 = vpop.f32.mrb[0].mxu0
  %v298 = vadd.f32 %v63, %v297
  %v299 = vpop.f32.mrb[0].mxu0
  %v300 = vpop.f32.mrb[0].mxu0
  %v301 = vadd.f32 %v63, %v300
  %v302 = vpop.f32.mrb[0].mxu0
  %303 = vmatprep.mubr.bf16.mxu0 %v229
  %304 = vmatmul.mubr.bf16.gmra.mrb[0].mxu0 %v119
  %v305 = vpop.f32.mrb[0].mxu0
  %v306 = vadd.f32 %v63, %v305
  %v307 = vpop.f32.mrb[0].mxu0
  %v308 = vpop.f32.mrb[0].mxu0
  %v309 = vadd.f32 %v63, %v308
  %v310 = vpop.f32.mrb[0].mxu0
  %311 = vmatprep.mubr.bf16.mxu0 %v232
  %312 = vmatmul.mubr.bf16.gmra.mrb[0].mxu0 %v121
  %v313 = vpop.f32.mrb[0].mxu0
  %v314 = vadd.f32 %v63, %v313
  %v315 = vpop.f32.mrb[0].mxu0
  %v316 = vpop.f32.mrb[0].mxu0
  %v317 = vadd.f32 %v63, %v316
  %v318 = vpop.f32.mrb[0].mxu0
  %319 = vmatprep.mubr.bf16.mxu0 %v235
  %320 = vmatmul.mubr.bf16.gmra.mrb[0].mxu0 %v123
  %v321 = vpop.f32.mrb[0].mxu0
  %v322 = vadd.f32 %v63, %v321
  %v323 = vpop.f32.mrb[0].mxu0
  %v324 = vpop.f32.mrb[0].mxu0
  %v325 = vadd.f32 %v63, %v324
  %v326 = vpop.f32.mrb[0].mxu0
  %327 = vmatprep.mubr.bf16.mxu0 %v238
  %328 = vmatmul.mubr.bf16.gmra.mrb[0].mxu0 %v125
  %v329 = vpop.f32.mrb[0].mxu0
  %v330 = vadd.f32 %v63, %v329
  %v331 = vpop.f32.mrb[0].mxu0
  %v332 = vpop.f32.mrb[0].mxu0
  %v333 = vadd.f32 %v63, %v332
  %v334 = vpop.f32.mrb[0].mxu0
  %335 = vmatprep.mubr.bf16.mxu0 %v241
  %336 = vmatmul.mubr.bf16.gmra.mrb[0].mxu0 %v127
  %v337 = vpop.f32.mrb[0].mxu0
  %v338 = vadd.f32 %v63, %v337
  %v339 = vpop.f32.mrb[0].mxu0
  %v340 = vpop.f32.mrb[0].mxu0
  %v341 = vadd.f32 %v63, %v340
  %v342 = vpop.f32.mrb[0].mxu0
  %343 = vdwg.mxu0
  %v344 = vmax.f32 %v282, 0.0
  %v345 = vmax.f32 %v285, 0.0
  %v346 = vmax.f32 %v290, 0.0
  %v347 = vmax.f32 %v293, 0.0
  %v348 = vmax.f32 %v298, 0.0
  %v349 = vmax.f32 %v301, 0.0
  %v350 = vmax.f32 %v306, 0.0
  %v351 = vmax.f32 %v309, 0.0
  %v352 = vmax.f32 %v314, 0.0
  %v353 = vmax.f32 %v317, 0.0
  %v354 = vmax.f32 %v322, 0.0
  %v355 = vmax.f32 %v325, 0.0
  %v356 = vmax.f32 %v330, 0.0
  %v357 = vmax.f32 %v333, 0.0
  %v358 = vmax.f32 %v338, 0.0
  %v359 = vmax.f32 %v341, 0.0
  %360 = vst [vmem:[%s3] sm:$0xff] %v344
  %361 = vst [vmem:[%s3 + $0x8] sm:$0xff] %v345
  %362 = vst [vmem:[%s3 + $0x10] sm:$0xff] %v346
  %363 = vst [vmem:[%s3 + $0x18] sm:$0xff] %v347
  %364 = vst [vmem:[%s3 + $0x20] sm:$0xff] %v348
  %365 = vst [vmem:[%s3 + $0x28] sm:$0xff] %v349
  %366 = vst [vmem:[%s3 + $0x30] sm:$0xff] %v350
  %367 = vst [vmem:[%s3 + $0x38] sm:$0xff] %v351
  %368 = vst [vmem:[%s3 + $0x40] sm:$0xff] %v352
  %369 = vst [vmem:[%s3 + $0x48] sm:$0xff] %v353
  %370 = vst [vmem:[%s3 + $0x50] sm:$0xff] %v354
  %371 = vst [vmem:[%s3 + $0x58] sm:$0xff] %v355
  %372 = vst [vmem:[%s3 + $0x60] sm:$0xff] %v356
  %373 = vst [vmem:[%s3 + $0x68] sm:$0xff] %v357
  %374 = vst [vmem:[%s3 + $0x70] sm:$0xff] %v358
  %375 = vst [vmem:[%s3 + $0x78] sm:$0xff] %v359
  // Predicated region
  $region14: #{mobilevit_track_forward.16} parent=0 // pred_check
    _
  $region15: #{mobilevit_track_forward.16} parent=0 // pred_check_branch
    %377 = sbr.rel (0) target = $region17
  $region16: #{mobilevit_track_forward.16} parent=0 // pred_region
    _
  $region17: #{mobilevit_track_forward.16} parent=0 // pred_fallthru
    _
  // Predicated region
  $region18: #{mobilevit_track_forward.16} parent=0 // pred_check
    _
  $region19: #{mobilevit_track_forward.16} parent=0 // pred_check_branch
    %379 = sbr.rel (0) target = $region21
  $region20: #{mobilevit_track_forward.16} parent=0 // pred_region
    _
  $region21: #{mobilevit_track_forward.16} parent=0 // pred_fallthru
    _

// kernel: mobilevit_track_forward.17
$region0: #{mobilevit_track_forward.17}
  #allocation0 [shape = 'u32[]', space=smem, size = 0x4, offset = 0x4, fixed_abs, tag = 'smem constant byte address 0x4 - core index']
  #allocation1 [shape = 'u32[144,128]{1,0:T(1,128)}', space=vmem, size = 0x12000, scoped, tag = 'internal scratch']
  %s0 = inlined_call_operand.vmem [shape: bf16[128,12], index: 0, kind: input, shape index: {}]
  %s1 = inlined_call_operand.vmem [shape: bf16[12,128], index: 1, kind: input, shape index: {}]
  %s2 = inlined_call_operand.vmem [shape: f32[1,128], index: 2, kind: input, shape index: {}]
  %s3 = inlined_call_operand.vmem [shape: f32[128,128], index: 3, kind: output, shape index: {}]
  %s4 = sld [smem:[#allocation0]]
  $region22: #{mobilevit_track_forward.17} parent=0
    _
  %s6 = ssub.s32 1, %s4
  %s7 = scalar_select 0, %s6, %s4
  // Predicated region
  $region2: #{mobilevit_track_forward.17} parent=0 // pred_check
    _
  $region3: #{mobilevit_track_forward.17} parent=0 // pred_check_branch
    %9 = sbr.rel (0) target = $region5
  $region4: #{mobilevit_track_forward.17} parent=0 // pred_region
    _
  $region5: #{mobilevit_track_forward.17} parent=0 // pred_fallthru
    _
  // Predicated region
  $region6: #{mobilevit_track_forward.17} parent=0 // pred_check
    _
  $region7: #{mobilevit_track_forward.17} parent=0 // pred_check_branch
    %11 = sbr.rel (0) target = $region9
  $region8: #{mobilevit_track_forward.17} parent=0 // pred_region
    _
  $region9: #{mobilevit_track_forward.17} parent=0 // pred_fallthru
    _
  // Predicated region
  $region10: #{mobilevit_track_forward.17} parent=0 // pred_check
    _
  $region11: #{mobilevit_track_forward.17} parent=0 // pred_check_branch
    %13 = sbr.rel (0) target = $region13
  $region12: #{mobilevit_track_forward.17} parent=0 // pred_region
    _
  $region13: #{mobilevit_track_forward.17} parent=0 // pred_fallthru
    _
  %v15 = vld [vmem:[%s0] sm:$0xf]
  %v16 = vld [vmem:[%s0 + $0x4] sm:$0xf]
  %v17 = vld [vmem:[%s0 + $0x8] sm:$0xf]
  %v18 = vld [vmem:[%s0 + $0xc] sm:$0xf]
  %v19 = vld [vmem:[%s0 + $0x10] sm:$0xf]
  %v20 = vld [vmem:[%s0 + $0x14] sm:$0xf]
  %v21 = vld [vmem:[%s0 + $0x18] sm:$0xf]
  %v22 = vld [vmem:[%s0 + $0x1c] sm:$0xf]
  %v23 = vld [vmem:[%s0 + $0x20] sm:$0xf]
  %v24 = vld [vmem:[%s0 + $0x24] sm:$0xf]
  %v25 = vld [vmem:[%s0 + $0x28] sm:$0xf]
  %v26 = vld [vmem:[%s0 + $0x2c] sm:$0xf]
  %v27 = vld [vmem:[%s0 + $0x30] sm:$0xf]
  %v28 = vld [vmem:[%s0 + $0x34] sm:$0xf]
  %v29 = vld [vmem:[%s0 + $0x38] sm:$0xf]
  %v30 = vld [vmem:[%s0 + $0x3c] sm:$0xf]
  %v31 = vld [vmem:[%s1] sm:$0xf]
  %v32 = vld [vmem:[%s1 + $0x4] sm:$0x3]
  %v33 = vld [vmem:[%s2] sm:$0x1]
  %v35 = vlaneseq
  %v36 = vshrl.u32 %v35, 7
  %v37 = vsub.s32 0, %v36
  %v38 = vrot.slane %v33, %v37
  %v56 = vunpack.c.l.b16 %v15
  %v57 = vunpack.c.l.b16 %v16
  %v58 = vunpack.c.l.b16 %v17
  %v59 = vunpack.c.l.b16 %v18
  %v60 = vunpack.c.l.b16 %v19
  %v61 = vunpack.c.l.b16 %v20
  %v62 = vunpack.c.l.b16 %v21
  %v63 = vunpack.c.l.b16 %v22
  %v64 = vunpack.c.l.b16 %v23
  %v65 = vunpack.c.l.b16 %v24
  %v66 = vunpack.c.l.b16 %v25
  %v67 = vunpack.c.l.b16 %v26
  %v68 = vunpack.c.l.b16 %v27
  %v69 = vunpack.c.l.b16 %v28
  %v70 = vunpack.c.l.b16 %v29
  %v71 = vunpack.c.l.b16 %v30
  %v72 = vpack.c.b16 %v57, %v56
  %v73 = vpack.c.b16 %v59, %v58
  %v74 = vpack.c.b16 %v61, %v60
  %v75 = vpack.c.b16 %v63, %v62
  %v76 = vpack.c.b16 %v65, %v64
  %v77 = vpack.c.b16 %v67, %v66
  %v78 = vpack.c.b16 %v69, %v68
  %v79 = vpack.c.b16 %v71, %v70
  %v82 = vunpack.c.l.b16 %v31
  %v83 = vunpack.c.l.b16 %v32
  %v84 = vpack.c.b16 %v83, %v82
  %vm85 = vcmask 97280
  %v87 = vsel %vm85, %v72, 0
  %v90 = vsel %vm85, %v73, 0
  %v93 = vsel %vm85, %v74, 0
  %v96 = vsel %vm85, %v75, 0
  %v99 = vsel %vm85, %v76, 0
  %v102 = vsel %vm85, %v77, 0
  %v105 = vsel %vm85, %v78, 0
  %v108 = vsel %vm85, %v79, 0
  %vm110 = vcmask 1045504
  %v112 = vsel %vm110, %v84, 0
  %114 = vmatprep.subr.bf16.mxu0 0
  %115 = vmatpush1.bf16.msra.mxu0 %v112
  %116 = vmatprep.subr.bf16.mxu0 0
  %117 = vmatpush1.bf16.msra.mxu0 0
  %118 = vmatprep.subr.bf16.mxu0 0
  %119 = vmatpush1.bf16.msra.mxu0 0
  %120 = vmatprep.subr.bf16.mxu0 0
  %121 = vmatpush1.bf16.msra.mxu0 0
  %122 = vmatprep.subr.bf16.mxu0 0
  %123 = vmatpush1.bf16.msra.mxu0 0
  %124 = vmatprep.subr.bf16.mxu0 0
  %125 = vmatpush1.bf16.msra.mxu0 0
  %126 = vmatprep.subr.bf16.mxu0 0
  %127 = vmatpush1.bf16.msra.mxu0 0
  %128 = vmatprep.subr.bf16.mxu0 0
  %129 = vmatpush1.bf16.msra.mxu0 0
  %130 = vmatprep.subr.bf16.mxu0 0
  %131 = vmatpush1.bf16.msra.mxu0 0
  %132 = vmatprep.subr.bf16.mxu0 0
  %133 = vmatpush1.bf16.msra.mxu0 0
  %134 = vmatprep.subr.bf16.mxu0 0
  %135 = vmatpush1.bf16.msra.mxu0 0
  %136 = vmatprep.subr.bf16.mxu0 0
  %137 = vmatpush1.bf16.msra.mxu0 0
  %138 = vmatprep.subr.bf16.mxu0 0
  %139 = vmatpush1.bf16.msra.mxu0 0
  %140 = vmatprep.subr.bf16.mxu0 0
  %141 = vmatpush1.bf16.msra.mxu0 0
  %142 = vmatprep.subr.bf16.mxu0 0
  %143 = vmatpush1.bf16.msra.mxu0 0
  %144 = vmatprep.subr.bf16.mxu0 0
  %145 = vmatpush1.bf16.msra.mxu0 0
  %146 = vmatprep.mubr.bf16.mxu0 0
  %147 = vmatmul.mubr.bf16.gmra.mrb[0].mxu0 %v87
  %v148 = vpop.f32.mrb[0].mxu0
  %v149 = vadd.f32 %v38, %v148
  %v150 = vpop.f32.mrb[0].mxu0
  %v151 = vpop.f32.mrb[0].mxu0
  %v152 = vadd.f32 %v38, %v151
  %v153 = vpop.f32.mrb[0].mxu0
  %154 = vmatprep.mubr.bf16.mxu0 0
  %155 = vmatmul.mubr.bf16.gmra.mrb[0].mxu0 %v90
  %v156 = vpop.f32.mrb[0].mxu0
  %v157 = vadd.f32 %v38, %v156
  %v158 = vpop.f32.mrb[0].mxu0
  %v159 = vpop.f32.mrb[0].mxu0
  %v160 = vadd.f32 %v38, %v159
  %v161 = vpop.f32.mrb[0].mxu0
  %162 = vmatprep.mubr.bf16.mxu0 0
  %163 = vmatmul.mubr.bf16.gmra.mrb[0].mxu0 %v93
  %v164 = vpop.f32.mrb[0].mxu0
  %v165 = vadd.f32 %v38, %v164
  %v166 = vpop.f32.mrb[0].mxu0
  %v167 = vpop.f32.mrb[0].mxu0
  %v168 = vadd.f32 %v38, %v167
  %v169 = vpop.f32.mrb[0].mxu0
  %170 = vmatprep.mubr.bf16.mxu0 0
  %171 = vmatmul.mubr.bf16.gmra.mrb[0].mxu0 %v96
  %v172 = vpop.f32.mrb[0].mxu0
  %v173 = vadd.f32 %v38, %v172
  %v174 = vpop.f32.mrb[0].mxu0
  %v175 = vpop.f32.mrb[0].mxu0
  %v176 = vadd.f32 %v38, %v175
  %v177 = vpop.f32.mrb[0].mxu0
  %178 = vmatprep.mubr.bf16.mxu0 0
  %179 = vmatmul.mubr.bf16.gmra.mrb[0].mxu0 %v99
  %v180 = vpop.f32.mrb[0].mxu0
  %v181 = vadd.f32 %v38, %v180
  %v182 = vpop.f32.mrb[0].mxu0
  %v183 = vpop.f32.mrb[0].mxu0
  %v184 = vadd.f32 %v38, %v183
  %v185 = vpop.f32.mrb[0].mxu0
  %186 = vmatprep.mubr.bf16.mxu0 0
  %187 = vmatmul.mubr.bf16.gmra.mrb[0].mxu0 %v102
  %v188 = vpop.f32.mrb[0].mxu0
  %v189 = vadd.f32 %v38, %v188
  %v190 = vpop.f32.mrb[0].mxu0
  %v191 = vpop.f32.mrb[0].mxu0
  %v192 = vadd.f32 %v38, %v191
  %v193 = vpop.f32.mrb[0].mxu0
  %194 = vmatprep.mubr.bf16.mxu0 0
  %195 = vmatmul.mubr.bf16.gmra.mrb[0].mxu0 %v105
  %v196 = vpop.f32.mrb[0].mxu0
  %v197 = vadd.f32 %v38, %v196
  %v198 = vpop.f32.mrb[0].mxu0
  %v199 = vpop.f32.mrb[0].mxu0
  %v200 = vadd.f32 %v38, %v199
  %v201 = vpop.f32.mrb[0].mxu0
  %202 = vmatprep.mubr.bf16.mxu0 0
  %203 = vmatmul.mubr.bf16.gmra.mrb[0].mxu0 %v108
  %v204 = vpop.f32.mrb[0].mxu0
  %v205 = vadd.f32 %v38, %v204
  %v206 = vpop.f32.mrb[0].mxu0
  %v207 = vpop.f32.mrb[0].mxu0
  %v208 = vadd.f32 %v38, %v207
  %v209 = vpop.f32.mrb[0].mxu0
  %210 = vdwg.mxu0
  %v211 = vlaneseq
  %v212 = vand.u32 %v211, 127
  %v213 = vxor.u32 %v149, 2147483648
  %v214 = vxor.u32 %v152, 2147483648
  %v215 = vxor.u32 %v157, 2147483648
  %v216 = vxor.u32 %v160, 2147483648
  %v217 = vxor.u32 %v165, 2147483648
  %v218 = vxor.u32 %v168, 2147483648
  %v219 = vxor.u32 %v173, 2147483648
  %v220 = vxor.u32 %v176, 2147483648
  %v221 = vxor.u32 %v181, 2147483648
  %v222 = vxor.u32 %v184, 2147483648
  %v223 = vxor.u32 %v189, 2147483648
  %v224 = vxor.u32 %v192, 2147483648
  %v225 = vxor.u32 %v197, 2147483648
  %v226 = vxor.u32 %v200, 2147483648
  %v227 = vxor.u32 %v205, 2147483648
  %v228 = vxor.u32 %v208, 2147483648
  %v229 = vmul.f32 %v213, 1.442695
  %v230 = vpow.pop %v229
  %v231 = vmul.f32 %v214, 1.442695
  %v232 = vpow.pop %v231
  %v233 = vmul.f32 %v215, 1.442695
  %v234 = vpow.pop %v233
  %v235 = vmul.f32 %v216, 1.442695
  %v236 = vpow.pop %v235
  %v237 = vmul.f32 %v217, 1.442695
  %v238 = vpow.pop %v237
  %v239 = vmul.f32 %v218, 1.442695
  %v240 = vpow.pop %v239
  %v241 = vmul.f32 %v219, 1.442695
  %v242 = vpow.pop %v241
  %v243 = vmul.f32 %v220, 1.442695
  %v244 = vpow.pop %v243
  %v245 = vmul.f32 %v221, 1.442695
  %v246 = vpow.pop %v245
  %v247 = vmul.f32 %v222, 1.442695
  %v248 = vpow.pop %v247
  %v249 = vmul.f32 %v223, 1.442695
  %v250 = vpow.pop %v249
  %v251 = vmul.f32 %v224, 1.442695
  %v252 = vpow.pop %v251
  %v253 = vmul.f32 %v225, 1.442695
  %v254 = vpow.pop %v253
  %v255 = vmul.f32 %v226, 1.442695
  %v256 = vpow.pop %v255
  %v257 = vmul.f32 %v227, 1.442695
  %v258 = vpow.pop %v257
  %v259 = vmul.f32 %v228, 1.442695
  %v260 = vpow.pop %v259
  %v261 = vadd.f32 %v230, 1.0
  %v262 = vadd.f32 %v232, 1.0
  %v263 = vadd.f32 %v234, 1.0
  %v264 = vadd.f32 %v236, 1.0
  %v265 = vadd.f32 %v238, 1.0
  %v266 = vadd.f32 %v240, 1.0
  %v267 = vadd.f32 %v242, 1.0
  %v268 = vadd.f32 %v244, 1.0
  %v269 = vadd.f32 %v246, 1.0
  %v270 = vadd.f32 %v248, 1.0
  %v271 = vadd.f32 %v250, 1.0
  %v272 = vadd.f32 %v252, 1.0
  %v273 = vadd.f32 %v254, 1.0
  %v274 = vadd.f32 %v256, 1.0
  %v275 = vadd.f32 %v258, 1.0
  %v276 = vadd.f32 %v260, 1.0
  %v277 = vrcp.pop %v261
  %v278 = vmul.f32 1.0, %v277
  %v279 = vrcp.pop %v262
  %v280 = vmul.f32 1.0, %v279
  %v281 = vrcp.pop %v263
  %v282 = vmul.f32 1.0, %v281
  %v283 = vrcp.pop %v264
  %v284 = vmul.f32 1.0, %v283
  %v285 = vrcp.pop %v265
  %v286 = vmul.f32 1.0, %v285
  %v287 = vrcp.pop %v266
  %v288 = vmul.f32 1.0, %v287
  %v289 = vrcp.pop %v267
  %v290 = vmul.f32 1.0, %v289
  %v291 = vrcp.pop %v268
  %v292 = vmul.f32 1.0, %v291
  %v293 = vrcp.pop %v269
  %v294 = vmul.f32 1.0, %v293
  %v295 = vrcp.pop %v270
  %v296 = vmul.f32 1.0, %v295
  %v297 = vrcp.pop %v271
  %v298 = vmul.f32 1.0, %v297
  %v299 = vrcp.pop %v272
  %v300 = vmul.f32 1.0, %v299
  %v301 = vrcp.pop %v273
  %v302 = vmul.f32 1.0, %v301
  %v303 = vrcp.pop %v274
  %v304 = vmul.f32 1.0, %v303
  %v305 = vrcp.pop %v275
  %v306 = vmul.f32 1.0, %v305
  %v307 = vrcp.pop %v276
  %v308 = vmul.f32 1.0, %v307
  %v309 = vmax.f32 %v278, 0.0001
  %v310 = vmax.f32 %v280, 0.0001
  %v311 = vmax.f32 %v282, 0.0001
  %v312 = vmax.f32 %v284, 0.0001
  %v313 = vmax.f32 %v286, 0.0001
  %v314 = vmax.f32 %v288, 0.0001
  %v315 = vmax.f32 %v290, 0.0001
  %v316 = vmax.f32 %v292, 0.0001
  %v317 = vmax.f32 %v294, 0.0001
  %v318 = vmax.f32 %v296, 0.0001
  %v319 = vmax.f32 %v298, 0.0001
  %v320 = vmax.f32 %v300, 0.0001
  %v321 = vmax.f32 %v302, 0.0001
  %v322 = vmax.f32 %v304, 0.0001
  %v323 = vmax.f32 %v306, 0.0001
  %v324 = vmax.f32 %v308, 0.0001
  %v325 = vmin.f32 %v309, 0.9999
  %v326 = vmin.f32 %v310, 0.9999
  %v327 = vmin.f32 %v311, 0.9999
  %v328 = vmin.f32 %v312, 0.9999
  %v329 = vmin.f32 %v313, 0.9999
  %v330 = vmin.f32 %v314, 0.9999
  %v331 = vmin.f32 %v315, 0.9999
  %v332 = vmin.f32 %v316, 0.9999
  %v333 = vmin.f32 %v317, 0.9999
  %v334 = vmin.f32 %v318, 0.9999
  %v335 = vmin.f32 %v319, 0.9999
  %v336 = vmin.f32 %v320, 0.9999
  %v337 = vmin.f32 %v321, 0.9999
  %v338 = vmin.f32 %v322, 0.9999
  %v339 = vmin.f32 %v323, 0.9999
  %v340 = vmin.f32 %v324, 0.9999
  %vm341 = vcmp.lt.s32.totalorder %v212, 3
  %v342 = vsel %vm341, %v325, %v149
  %v343 = vsel %vm341, %v326, %v152
  %v344 = vsel %vm341, %v327, %v157
  %v345 = vsel %vm341, %v328, %v160
  %v346 = vsel %vm341, %v329, %v165
  %v347 = vsel %vm341, %v330, %v168
  %v348 = vsel %vm341, %v331, %v173
  %v349 = vsel %vm341, %v332, %v176
  %v350 = vsel %vm341, %v333, %v181
  %v351 = vsel %vm341, %v334, %v184
  %v352 = vsel %vm341, %v335, %v189
  %v353 = vsel %vm341, %v336, %v192
  %v354 = vsel %vm341, %v337, %v197
  %v355 = vsel %vm341, %v338, %v200
  %v356 = vsel %vm341, %v339, %v205
  %v357 = vsel %vm341, %v340, %v208
  %358 = vst [vmem:[%s3] sm:$0xff] %v342
  %359 = vst [vmem:[%s3 + $0x8] sm:$0xff] %v343
  %360 = vst [vmem:[%s3 + $0x10] sm:$0xff] %v344
  %361 = vst [vmem:[%s3 + $0x18] sm:$0xff] %v345
  %362 = vst [vmem:[%s3 + $0x20] sm:$0xff] %v346
  %363 = vst [vmem:[%s3 + $0x28] sm:$0xff] %v347
  %364 = vst [vmem:[%s3 + $0x30] sm:$0xff] %v348
  %365 = vst [vmem:[%s3 + $0x38] sm:$0xff] %v349
  %366 = vst [vmem:[%s3 + $0x40] sm:$0xff] %v350
  %367 = vst [vmem:[%s3 + $0x48] sm:$0xff] %v351
  %368 = vst [vmem:[%s3 + $0x50] sm:$0xff] %v352
  %369 = vst [vmem:[%s3 + $0x58] sm:$0xff] %v353
  %370 = vst [vmem:[%s3 + $0x60] sm:$0xff] %v354
  %371 = vst [vmem:[%s3 + $0x68] sm:$0xff] %v355
  %372 = vst [vmem:[%s3 + $0x70] sm:$0xff] %v356
  %373 = vst [vmem:[%s3 + $0x78] sm:$0xff] %v357
  // Predicated region
  $region14: #{mobilevit_track_forward.17} parent=0 // pred_check
    _
  $region15: #{mobilevit_track_forward.17} parent=0 // pred_check_branch
    %375 = sbr.rel (0) target = $region17
  $region16: #{mobilevit_track_forward.17} parent=0 // pred_region
    _
  $region17: #{mobilevit_track_forward.17} parent=0 // pred_fallthru
    _
  // Predicated region
  $region18: #{mobilevit_track_forward.17} parent=0 // pred_check
    _
  $region19: #{mobilevit_track_forward.17} parent=0 // pred_check_branch
    %377 = sbr.rel (0) target = $region21
  $region20: #{mobilevit_track_forward.17} parent=0 // pred_region
    _
  $region21: #{mobilevit_track_forward.17} parent=0 // pred_fallthru
    _

</llo_original>
